<compile_context>
chip_gen: v6e
topology: v6e:2x2x1
jax: 0.10.0
libtpu: 0.0.40
codegen_flags: <defaults>
</compile_context>

<pallas_src>
import functools

import numpy as np
import jax
import jax.numpy as jnp
from jax.experimental import pallas as pl
from jax.experimental.pallas import tpu as pltpu

EPS = 1e-5
NEG = -1e30          # -inf stand-in for max-pool halo positions
PAD = 128            # lane padding of the shifted-tap scratch buffers (aligned)


# ----------------------------- fused Pallas kernel -----------------------------

def _inception_kernel(H, W, c1, c2r, c3r, c4, c2, c3,
                      x_ref, masks_ref, wA_ref, wB_ref,
                      gA_ref, bA_ref, gB_ref, bB_ref,
                      o_ref,
                      xe_ref, s1_ref, ue_ref, col_ref):
    N, Cin, HW = x_ref.shape
    L = N * HW
    cu = c2r + c3r
    f32 = jnp.float32

    masks = masks_ref[...]                       # (25, L), 1.0 == inside the image

    def window(ref, s):
        # out[:, p] = src[:, p + s]; the source occupies ref[:, PAD:PAD+L].
        return ref[:, PAD + s:PAD + s + L]

    def bn_relu(raw, gamma, beta):
        # Training-mode BatchNorm over (N, H, W) == the lane axis, then ReLU.
        mean = jnp.mean(raw, axis=1, keepdims=True)
        cen = raw - mean
        var = jnp.mean(cen * cen, axis=1, keepdims=True)       # biased variance
        return jnp.maximum(cen * (gamma * jax.lax.rsqrt(var + EPS)) + beta, 0.0)

    # ---- stage 1: [1x1 | 1x1 | 1x1 | maxpool3x3 -> 1x1] as ONE K=2*Cin matmul ----
    # Whole-batch channel-major slab: images concatenated along the lane axis,
    # lane-padded in VMEM scratch so every shifted tap is a plain static load.
    xe_ref[...] = jnp.zeros(xe_ref.shape, f32)
    for n in range(N):
        xe_ref[:, PAD + n * HW:PAD + (n + 1) * HW] = x_ref[n]

    x = window(xe_ref, 0)                        # (Cin, L)
    pooled = x                                   # 3x3/s1/p1 max-pool, center tap
    for dy in (-1, 0, 1):
        for dx in (-1, 0, 1):
            if (dy, dx) == (0, 0):
                continue
            t = (dy + 2) * 5 + (dx + 2)          # mask rows are 5x5-offset indexed
            valid = masks[t:t + 1, :] > 0.5
            pooled = jnp.maximum(
                pooled, jnp.where(valid, window(xe_ref, dy * W + dx), NEG))

    s1_ref[0:Cin, :] = x                         # stacked operand [x ; maxpool(x)]
    s1_ref[Cin:2 * Cin, :] = pooled

    raw_a = jnp.dot(wA_ref[...], s1_ref[...], preferred_element_type=f32)
    act_a = bn_relu(raw_a, gA_ref[...], bA_ref[...])            # (C_A, L)

    y1 = act_a[0:c1]
    u = act_a[c1:c1 + cu]                        # [t2 ; t3] -- both reduce branches
    y4 = act_a[c1 + cu:c1 + cu + c4]

    # ---- stage 2: 3x3 + 5x5 convs as ONE fat-K (K = 25*(c2r+c3r)) im2col matmul ----
    ue_ref[...] = jnp.zeros(ue_ref.shape, f32)
    ue_ref[:, PAD:PAD + L] = u
    t = 0
    for dy in (-2, -1, 0, 1, 2):
        for dx in (-2, -1, 0, 1, 2):
            # zero-padded convolution: shifted window * 0/1 mask
            col_ref[t * cu:(t + 1) * cu, :] = (
                window(ue_ref, dy * W + dx) * masks[t:t + 1, :])
            t += 1
    raw_b = jnp.dot(wB_ref[...], col_ref[...], preferred_element_type=f32)
    act_b = bn_relu(raw_b, gB_ref[...], bB_ref[...])            # (C_B, L)
    y2 = act_b[0:c2]
    y3 = act_b[c2:c2 + c3]

    # ---- branch concat == sublane-aligned, lane-dense output stores ----
    for n in range(N):
        lo = n * HW
        o_ref[n, 0:c1, :] = y1[:, lo:lo + HW]
        o_ref[n, c1:c1 + c2, :] = y2[:, lo:lo + HW]
        o_ref[n, c1 + c2:c1 + c2 + c3, :] = y3[:, lo:lo + HW]
        o_ref[n, c1 + c2 + c3:c1 + c2 + c3 + c4, :] = y4[:, lo:lo + HW]


# ----------------------------- wrapper -----------------------------

def _build_masks(N, H, W):
    """(25, N*H*W) f32 constants: 1.0 where the 5x5-offset tap stays in-image."""
    HW = H * W
    pix = np.arange(N * HW) % HW
    hh, ww = pix // W, pix % W
    rows = []
    for dy in range(-2, 3):
        for dx in range(-2, 3):
            ok = ((hh + dy >= 0) & (hh + dy < H) &
                  (ww + dx >= 0) & (ww + dx < W))
            rows.append(ok.astype(np.float32))
    return jnp.asarray(np.stack(rows))


def inception_forward(x_nchw, p):
    N, Cin, H, W = x_nchw.shape
    HW = H * W
    f32 = jnp.float32

    c1, c2r, c3r, c4 = (p["b1_w"].shape[0], p["b2_w1"].shape[0],
                        p["b3_w1"].shape[0], p["b4_w"].shape[0])
    c2, c3 = p["b2_w2"].shape[0], p["b3_w2"].shape[0]
    C_A = c1 + c2r + c3r + c4
    C_B = c2 + c3
    C_out = c1 + c2 + c3 + c4
    cu = c2r + c3r
    L = N * HW

    # NCHW -> (N, Cin, H*W): a free view, no transpose; output side is symmetric.
    x3 = x_nchw.reshape(N, Cin, HW).astype(f32)
    masks = _build_masks(N, H, W)

    def w1(w):                       # (Cout, Cin, 1, 1) -> (Cout, Cin)
        return w.reshape(w.shape[0], w.shape[1]).astype(f32)

    z = lambda r, c: jnp.zeros((r, c), f32)

    # stage-1 packed weight: rows [y1 | t2 | t3 | y4], cols [x | maxpool(x)]
    wA = jnp.concatenate([
        jnp.concatenate([w1(p["b1_w"]), z(c1, Cin)], axis=1),
        jnp.concatenate([w1(p["b2_w1"]), z(c2r, Cin)], axis=1),
        jnp.concatenate([w1(p["b3_w1"]), z(c3r, Cin)], axis=1),
        jnp.concatenate([z(c4, Cin), w1(p["b4_w"])], axis=1),
    ], axis=0)                                                   # (C_A, 2*Cin)

    # stage-2 packed weight: (C_B, 25*(c2r+c3r)); the 3x3 weights populate only
    # the 9 inner offsets of the 5x5 window (zeros elsewhere).
    blocks = []
    for dy in range(-2, 3):
        for dx in range(-2, 3):
            if abs(dy) <= 1 and abs(dx) <= 1:
                top2 = p["b2_w2"][:, :, dy + 1, dx + 1].astype(f32)   # (c2, c2r)
            else:
                top2 = z(c2, c2r)
            bot3 = p["b3_w2"][:, :, dy + 2, dx + 2].astype(f32)       # (c3, c3r)
            blocks.append(jnp.concatenate([
                jnp.concatenate([top2, z(c2, c3r)], axis=1),
                jnp.concatenate([z(c3, c2r), bot3], axis=1)], axis=0))
    wB = jnp.concatenate(blocks, axis=1)                         # (C_B, 25*cu)

    gA = jnp.concatenate([p["b1_g"], p["b2_g1"], p["b3_g1"], p["b4_g"]]).reshape(C_A, 1)
    bA = jnp.concatenate([p["b1_be"], p["b2_be1"], p["b3_be1"], p["b4_be"]]).reshape(C_A, 1)
    gB = jnp.concatenate([p["b2_g2"], p["b3_g2"]]).reshape(C_B, 1)
    bB = jnp.concatenate([p["b2_be2"], p["b3_be2"]]).reshape(C_B, 1)

    # TODO(synk): for much larger N*H*W add a row-split "parallel" grid axis so
    # v7x's two TensorCores each take half the lanes (plus a small cross-core BN
    # stat reduction); at this size one fused single-block program is fastest on
    # every generation, and the VMEM footprint (<0.5 MiB) is far below limits.
    out3 = pl.pallas_call(
        functools.partial(_inception_kernel, H, W, c1, c2r, c3r, c4, c2, c3),
        out_shape=jax.ShapeDtypeStruct((N, C_out, HW), f32),
        scratch_shapes=[
            pltpu.VMEM((Cin, L + 2 * PAD), f32),       # lane-padded x
            pltpu.VMEM((2 * Cin, L), f32),             # [x ; maxpool(x)] operand
            pltpu.VMEM((cu, L + 2 * PAD), f32),        # lane-padded [t2 ; t3]
            pltpu.VMEM((25 * cu, L), f32),             # fat-K im2col matrix
        ],
    )(x3, masks, wA, wB, gA, bA, gB, bB)

    return out3.reshape(N, C_out, H, W)


# ----------------------------- pure-JAX reference -----------------------------

def _conv_ref(x, w, b, pad):
    out = jax.lax.conv_general_dilated(
        x, w, (1, 1), [(pad, pad), (pad, pad)],
        dimension_numbers=("NCHW", "OIHW", "NCHW"),
        precision=jax.lax.Precision.HIGHEST)
    return out + b[None, :, None, None]


def _bn_relu_ref(x, g, b, eps=EPS):
    mean = x.mean(axis=(0, 2, 3), keepdims=True)
    var = x.var(axis=(0, 2, 3), keepdims=True)
    y = (x - mean) / jnp.sqrt(var + eps) * g[None, :, None, None] + b[None, :, None, None]
    return jnp.maximum(y, 0.0)


def _maxpool_ref(x):
    return jax.lax.reduce_window(
        x, -jnp.inf, jax.lax.max, (1, 1, 3, 3), (1, 1, 1, 1),
        [(0, 0), (0, 0), (1, 1), (1, 1)])


def inception_ref(x, p):
    y1 = _bn_relu_ref(_conv_ref(x, p["b1_w"], p["b1_b"], 0), p["b1_g"], p["b1_be"])
    t2 = _bn_relu_ref(_conv_ref(x, p["b2_w1"], p["b2_b1"], 0), p["b2_g1"], p["b2_be1"])
    y2 = _bn_relu_ref(_conv_ref(t2, p["b2_w2"], p["b2_b2"], 1), p["b2_g2"], p["b2_be2"])
    t3 = _bn_relu_ref(_conv_ref(x, p["b3_w1"], p["b3_b1"], 0), p["b3_g1"], p["b3_be1"])
    y3 = _bn_relu_ref(_conv_ref(t3, p["b3_w2"], p["b3_b2"], 2), p["b3_g2"], p["b3_be2"])
    y4 = _bn_relu_ref(_conv_ref(_maxpool_ref(x), p["b4_w"], p["b4_b"], 0),
                      p["b4_g"], p["b4_be"])
    return jnp.concatenate([y1, y2, y3, y4], axis=1)


# ----------------------------- parameter init -----------------------------

def init_params(key, in_chn, b1, b2c1, b2c2, b3c1, b3c2, b4):
    ks = iter(jax.random.split(key, 24))

    def conv(cout, cin, kk):
        return 0.1 * jax.random.normal(next(ks), (cout, cin, kk, kk), jnp.float32)

    def vec(c, scale=0.1, offset=0.0):
        return offset + scale * jax.random.normal(next(ks), (c,), jnp.float32)

    p = {}
    p["b1_w"], p["b1_b"] = conv(b1, in_chn, 1), vec(b1)
    p["b1_g"], p["b1_be"] = vec(b1, 0.1, 1.0), vec(b1)

    p["b2_w1"], p["b2_b1"] = conv(b2c1, in_chn, 1), vec(b2c1)
    p["b2_g1"], p["b2_be1"] = vec(b2c1, 0.1, 1.0), vec(b2c1)
    p["b2_w2"], p["b2_b2"] = conv(b2c2, b2c1, 3), vec(b2c2)
    p["b2_g2"], p["b2_be2"] = vec(b2c2, 0.1, 1.0), vec(b2c2)

    p["b3_w1"], p["b3_b1"] = conv(b3c1, in_chn, 1), vec(b3c1)
    p["b3_g1"], p["b3_be1"] = vec(b3c1, 0.1, 1.0), vec(b3c1)
    p["b3_w2"], p["b3_b2"] = conv(b3c2, b3c1, 5), vec(b3c2)
    p["b3_g2"], p["b3_be2"] = vec(b3c2, 0.1, 1.0), vec(b3c2)

    p["b4_w"], p["b4_b"] = conv(b4, in_chn, 1), vec(b4)
    p["b4_g"], p["b4_be"] = vec(b4, 0.1, 1.0), vec(b4)
    return p


# ----------------------------- main -----------------------------

if __name__ == "__main__":
    key = jax.random.PRNGKey(0)
    k_x, k_p = jax.random.split(key)

    # inception(in_chn=4, b1=8, b2=(4,8), b3=(4,8), b4=8) -> 32 output channels
    N, Cin, H, W = 2, 4, 16, 16
    x = jax.random.normal(k_x, (N, Cin, H, W), jnp.float32)
    params = init_params(k_p, Cin, 8, 4, 8, 4, 8, 8)

    out = jax.block_until_ready(jax.jit(inception_forward)(x, params))
    ref = jax.block_until_ready(inception_ref(x, params))

    assert out.shape == (N, 32, H, W), out.shape
    err = float(jnp.abs(out - ref).max())
    # MXU f32 matmuls may run at reduced operand precision vs the HIGHEST-
    # precision XLA reference convs; 2e-2 covers that comfortably while still
    # catching any real tap-ordering / BN / layout bug (those are O(0.1-1)).
    assert jnp.allclose(out, ref, rtol=2e-2, atol=2e-2), err

    print("KERNEL_OK")
</pallas_src>

<mosaic_0001>
module attributes {stable_mosaic.version = 11 : i64} {
  func.func @_inception_kernel(%arg0: memref<2x4x256xf32, #tpu.memory_space<vmem>>, %arg1: memref<25x512xf32, #tpu.memory_space<vmem>>, %arg2: memref<24x8xf32, #tpu.memory_space<vmem>>, %arg3: memref<16x200xf32, #tpu.memory_space<vmem>>, %arg4: memref<24x1xf32, #tpu.memory_space<vmem>>, %arg5: memref<24x1xf32, #tpu.memory_space<vmem>>, %arg6: memref<16x1xf32, #tpu.memory_space<vmem>>, %arg7: memref<16x1xf32, #tpu.memory_space<vmem>>, %arg8: memref<2x32x256xf32, #tpu.memory_space<vmem>>, %arg9: memref<4x768xf32, #tpu.memory_space<vmem>>, %arg10: memref<8x512xf32, #tpu.memory_space<vmem>>, %arg11: memref<8x768xf32, #tpu.memory_space<vmem>>, %arg12: memref<200x512xf32, #tpu.memory_space<vmem>>) attributes {dimension_semantics = [], scalar_prefetch = 0 : i64, scratch_operands = 4 : i64, tpu.core_type = #tpu.core_type<tc>} {
    %c0 = arith.constant 0 : index
    %c0_0 = arith.constant 0 : index
    %0 = vector.load %arg1[%c0, %c0_0] : memref<25x512xf32, #tpu.memory_space<vmem>>, vector<25x512xf32>
    %cst = arith.constant 0.000000e+00 : f32
    %1 = vector.broadcast %cst : f32 to vector<4x768xf32>
    %c0_1 = arith.constant 0 : index
    %c0_2 = arith.constant 0 : index
    %2 = vector.load %arg9[%c0_1, %c0_2] : memref<4x768xf32, #tpu.memory_space<vmem>>, vector<4x768xf32>
    tpu.vector_store %arg9[%c0_1, %c0_2], %1 {strides = array<i32>} : memref<4x768xf32, #tpu.memory_space<vmem>>, vector<4x768xf32>,
    %c0_3 = arith.constant 0 : index
    %c0_4 = arith.constant 0 : index
    %c0_5 = arith.constant 0 : index
    %3 = vector.load %arg0[%c0_3, %c0_4, %c0_5] : memref<2x4x256xf32, #tpu.memory_space<vmem>>, vector<1x4x256xf32>
    %4 = vector.shape_cast %3 : vector<1x4x256xf32> to vector<4x256xf32>
    %c0_6 = arith.constant 0 : index
    %c128 = arith.constant 128 : index
    %5 = vector.load %arg9[%c0_6, %c128] : memref<4x768xf32, #tpu.memory_space<vmem>>, vector<4x256xf32>
    tpu.vector_store %arg9[%c0_6, %c128], %4 {strides = array<i32>} : memref<4x768xf32, #tpu.memory_space<vmem>>, vector<4x256xf32>,
    %c1 = arith.constant 1 : index
    %c0_7 = arith.constant 0 : index
    %c0_8 = arith.constant 0 : index
    %6 = vector.load %arg0[%c1, %c0_7, %c0_8] : memref<2x4x256xf32, #tpu.memory_space<vmem>>, vector<1x4x256xf32>
    %7 = vector.shape_cast %6 : vector<1x4x256xf32> to vector<4x256xf32>
    %c0_9 = arith.constant 0 : index
    %c384 = arith.constant 384 : index
    %8 = vector.load %arg9[%c0_9, %c384] : memref<4x768xf32, #tpu.memory_space<vmem>>, vector<4x256xf32>
    tpu.vector_store %arg9[%c0_9, %c384], %7 {strides = array<i32>} : memref<4x768xf32, #tpu.memory_space<vmem>>, vector<4x256xf32>,
    %c0_10 = arith.constant 0 : index
    %c128_11 = arith.constant 128 : index
    %9 = vector.load %arg9[%c0_10, %c128_11] : memref<4x768xf32, #tpu.memory_space<vmem>>, vector<4x512xf32>
    %10 = vector.extract_strided_slice %0 {offsets = [6, 0], sizes = [1, 512], strides = [1, 1]} : vector<25x512xf32> to vector<1x512xf32>
    %cst_12 = arith.constant 5.000000e-01 : f32
    %11 = vector.broadcast %cst_12 : f32 to vector<1x512xf32>
    %12 = arith.cmpf ogt, %10, %11 : vector<1x512xf32>
    %c0_13 = arith.constant 0 : index
    %c111 = arith.constant 111 : index
    %13 = vector.load %arg9[%c0_13, %c111] : memref<4x768xf32, #tpu.memory_space<vmem>>, vector<4x512xf32>
    %cst_14 = arith.constant -1.000000e+30 : f32
    %14 = vector.shape_cast %12 : vector<1x512xi1> to vector<1x512xi1>
    %15 = vector.broadcast %14 : vector<1x512xi1> to vector<4x512xi1>
    %16 = vector.broadcast %cst_14 : f32 to vector<4x512xf32>
    %17 = arith.select %15, %13, %16 : vector<4x512xi1>, vector<4x512xf32>
    %18 = arith.maximumf %9, %17 : vector<4x512xf32>
    %19 = vector.extract_strided_slice %0 {offsets = [7, 0], sizes = [1, 512], strides = [1, 1]} : vector<25x512xf32> to vector<1x512xf32>
    %cst_15 = arith.constant 5.000000e-01 : f32
    %20 = vector.broadcast %cst_15 : f32 to vector<1x512xf32>
    %21 = arith.cmpf ogt, %19, %20 : vector<1x512xf32>
    %c0_16 = arith.constant 0 : index
    %c112 = arith.constant 112 : index
    %22 = vector.load %arg9[%c0_16, %c112] : memref<4x768xf32, #tpu.memory_space<vmem>>, vector<4x512xf32>
    %cst_17 = arith.constant -1.000000e+30 : f32
    %23 = vector.shape_cast %21 : vector<1x512xi1> to vector<1x512xi1>
    %24 = vector.broadcast %23 : vector<1x512xi1> to vector<4x512xi1>
    %25 = vector.broadcast %cst_17 : f32 to vector<4x512xf32>
    %26 = arith.select %24, %22, %25 : vector<4x512xi1>, vector<4x512xf32>
    %27 = arith.maximumf %18, %26 : vector<4x512xf32>
    %28 = vector.extract_strided_slice %0 {offsets = [8, 0], sizes = [1, 512], strides = [1, 1]} : vector<25x512xf32> to vector<1x512xf32>
    %cst_18 = arith.constant 5.000000e-01 : f32
    %29 = vector.broadcast %cst_18 : f32 to vector<1x512xf32>
    %30 = arith.cmpf ogt, %28, %29 : vector<1x512xf32>
    %c0_19 = arith.constant 0 : index
    %c113 = arith.constant 113 : index
    %31 = vector.load %arg9[%c0_19, %c113] : memref<4x768xf32, #tpu.memory_space<vmem>>, vector<4x512xf32>
    %cst_20 = arith.constant -1.000000e+30 : f32
    %32 = vector.shape_cast %30 : vector<1x512xi1> to vector<1x512xi1>
    %33 = vector.broadcast %32 : vector<1x512xi1> to vector<4x512xi1>
    %34 = vector.broadcast %cst_20 : f32 to vector<4x512xf32>
    %35 = arith.select %33, %31, %34 : vector<4x512xi1>, vector<4x512xf32>
    %36 = arith.maximumf %27, %35 : vector<4x512xf32>
    %37 = vector.extract_strided_slice %0 {offsets = [11, 0], sizes = [1, 512], strides = [1, 1]} : vector<25x512xf32> to vector<1x512xf32>
    %cst_21 = arith.constant 5.000000e-01 : f32
    %38 = vector.broadcast %cst_21 : f32 to vector<1x512xf32>
    %39 = arith.cmpf ogt, %37, %38 : vector<1x512xf32>
    %c0_22 = arith.constant 0 : index
    %c127 = arith.constant 127 : index
    %40 = vector.load %arg9[%c0_22, %c127] : memref<4x768xf32, #tpu.memory_space<vmem>>, vector<4x512xf32>
    %cst_23 = arith.constant -1.000000e+30 : f32
    %41 = vector.shape_cast %39 : vector<1x512xi1> to vector<1x512xi1>
    %42 = vector.broadcast %41 : vector<1x512xi1> to vector<4x512xi1>
    %43 = vector.broadcast %cst_23 : f32 to vector<4x512xf32>
    %44 = arith.select %42, %40, %43 : vector<4x512xi1>, vector<4x512xf32>
    %45 = arith.maximumf %36, %44 : vector<4x512xf32>
    %46 = vector.extract_strided_slice %0 {offsets = [13, 0], sizes = [1, 512], strides = [1, 1]} : vector<25x512xf32> to vector<1x512xf32>
    %cst_24 = arith.constant 5.000000e-01 : f32
    %47 = vector.broadcast %cst_24 : f32 to vector<1x512xf32>
    %48 = arith.cmpf ogt, %46, %47 : vector<1x512xf32>
    %c0_25 = arith.constant 0 : index
    %c129 = arith.constant 129 : index
    %49 = vector.load %arg9[%c0_25, %c129] : memref<4x768xf32, #tpu.memory_space<vmem>>, vector<4x512xf32>
    %cst_26 = arith.constant -1.000000e+30 : f32
    %50 = vector.shape_cast %48 : vector<1x512xi1> to vector<1x512xi1>
    %51 = vector.broadcast %50 : vector<1x512xi1> to vector<4x512xi1>
    %52 = vector.broadcast %cst_26 : f32 to vector<4x512xf32>
    %53 = arith.select %51, %49, %52 : vector<4x512xi1>, vector<4x512xf32>
    %54 = arith.maximumf %45, %53 : vector<4x512xf32>
    %55 = vector.extract_strided_slice %0 {offsets = [16, 0], sizes = [1, 512], strides = [1, 1]} : vector<25x512xf32> to vector<1x512xf32>
    %cst_27 = arith.constant 5.000000e-01 : f32
    %56 = vector.broadcast %cst_27 : f32 to vector<1x512xf32>
    %57 = arith.cmpf ogt, %55, %56 : vector<1x512xf32>
    %c0_28 = arith.constant 0 : index
    %c143 = arith.constant 143 : index
    %58 = vector.load %arg9[%c0_28, %c143] : memref<4x768xf32, #tpu.memory_space<vmem>>, vector<4x512xf32>
    %cst_29 = arith.constant -1.000000e+30 : f32
    %59 = vector.shape_cast %57 : vector<1x512xi1> to vector<1x512xi1>
    %60 = vector.broadcast %59 : vector<1x512xi1> to vector<4x512xi1>
    %61 = vector.broadcast %cst_29 : f32 to vector<4x512xf32>
    %62 = arith.select %60, %58, %61 : vector<4x512xi1>, vector<4x512xf32>
    %63 = arith.maximumf %54, %62 : vector<4x512xf32>
    %64 = vector.extract_strided_slice %0 {offsets = [17, 0], sizes = [1, 512], strides = [1, 1]} : vector<25x512xf32> to vector<1x512xf32>
    %cst_30 = arith.constant 5.000000e-01 : f32
    %65 = vector.broadcast %cst_30 : f32 to vector<1x512xf32>
    %66 = arith.cmpf ogt, %64, %65 : vector<1x512xf32>
    %c0_31 = arith.constant 0 : index
    %c144 = arith.constant 144 : index
    %67 = vector.load %arg9[%c0_31, %c144] : memref<4x768xf32, #tpu.memory_space<vmem>>, vector<4x512xf32>
    %cst_32 = arith.constant -1.000000e+30 : f32
    %68 = vector.shape_cast %66 : vector<1x512xi1> to vector<1x512xi1>
    %69 = vector.broadcast %68 : vector<1x512xi1> to vector<4x512xi1>
    %70 = vector.broadcast %cst_32 : f32 to vector<4x512xf32>
    %71 = arith.select %69, %67, %70 : vector<4x512xi1>, vector<4x512xf32>
    %72 = arith.maximumf %63, %71 : vector<4x512xf32>
    %73 = vector.extract_strided_slice %0 {offsets = [18, 0], sizes = [1, 512], strides = [1, 1]} : vector<25x512xf32> to vector<1x512xf32>
    %cst_33 = arith.constant 5.000000e-01 : f32
    %74 = vector.broadcast %cst_33 : f32 to vector<1x512xf32>
    %75 = arith.cmpf ogt, %73, %74 : vector<1x512xf32>
    %c0_34 = arith.constant 0 : index
    %c145 = arith.constant 145 : index
    %76 = vector.load %arg9[%c0_34, %c145] : memref<4x768xf32, #tpu.memory_space<vmem>>, vector<4x512xf32>
    %cst_35 = arith.constant -1.000000e+30 : f32
    %77 = vector.shape_cast %75 : vector<1x512xi1> to vector<1x512xi1>
    %78 = vector.broadcast %77 : vector<1x512xi1> to vector<4x512xi1>
    %79 = vector.broadcast %cst_35 : f32 to vector<4x512xf32>
    %80 = arith.select %78, %76, %79 : vector<4x512xi1>, vector<4x512xf32>
    %81 = arith.maximumf %72, %80 : vector<4x512xf32>
    %c0_36 = arith.constant 0 : index
    %c0_37 = arith.constant 0 : index
    %82 = vector.load %arg10[%c0_36, %c0_37] : memref<8x512xf32, #tpu.memory_space<vmem>>, vector<4x512xf32>
    tpu.vector_store %arg10[%c0_36, %c0_37], %9 {strides = array<i32>} : memref<8x512xf32, #tpu.memory_space<vmem>>, vector<4x512xf32>,
    %c4 = arith.constant 4 : index
    %c0_38 = arith.constant 0 : index
    %83 = vector.load %arg10[%c4, %c0_38] : memref<8x512xf32, #tpu.memory_space<vmem>>, vector<4x512xf32>
    tpu.vector_store %arg10[%c4, %c0_38], %81 {strides = array<i32>} : memref<8x512xf32, #tpu.memory_space<vmem>>, vector<4x512xf32>,
    %c0_39 = arith.constant 0 : index
    %c0_40 = arith.constant 0 : index
    %84 = vector.load %arg2[%c0_39, %c0_40] : memref<24x8xf32, #tpu.memory_space<vmem>>, vector<24x8xf32>
    %c0_41 = arith.constant 0 : index
    %c0_42 = arith.constant 0 : index
    %85 = vector.load %arg10[%c0_41, %c0_42] : memref<8x512xf32, #tpu.memory_space<vmem>>, vector<8x512xf32>
    %cst_43 = arith.constant dense<0.000000e+00> : vector<24x512xf32>
    %86 = tpu.matmul %84, %85, %cst_43 {dimension_numbers = #tpu.dot_dimension_numbers<[1], [0], [0], [1], [0, 0, 1, 1], [], []>} : vector<24x8xf32>, vector<8x512xf32>, vector<24x512xf32> -> vector<24x512xf32>
    %c0_44 = arith.constant 0 : index
    %c0_45 = arith.constant 0 : index
    %87 = vector.load %arg4[%c0_44, %c0_45] : memref<24x1xf32, #tpu.memory_space<vmem>>, vector<24x1xf32>
    %c0_46 = arith.constant 0 : index
    %c0_47 = arith.constant 0 : index
    %88 = vector.load %arg5[%c0_46, %c0_47] : memref<24x1xf32, #tpu.memory_space<vmem>>, vector<24x1xf32>
    %cst_48 = arith.constant dense<0.000000e+00> : vector<24xf32>
    %89 = vector.multi_reduction <add>, %86, %cst_48 [1] : vector<24x512xf32> to vector<24xf32>
    %90 = vector.shape_cast %89 : vector<24xf32> to vector<24x1xf32>
    %cst_49 = arith.constant 5.120000e+02 : f32
    %91 = vector.broadcast %cst_49 : f32 to vector<24x1xf32>
    %92 = arith.divf %90, %91 : vector<24x1xf32>
    %93 = vector.broadcast %92 : vector<24x1xf32> to vector<24x512xf32>
    %94 = arith.subf %86, %93 : vector<24x512xf32>
    %95 = arith.mulf %94, %94 : vector<24x512xf32>
    %cst_50 = arith.constant dense<0.000000e+00> : vector<24xf32>
    %96 = vector.multi_reduction <add>, %95, %cst_50 [1] : vector<24x512xf32> to vector<24xf32>
    %97 = vector.shape_cast %96 : vector<24xf32> to vector<24x1xf32>
    %cst_51 = arith.constant 5.120000e+02 : f32
    %98 = vector.broadcast %cst_51 : f32 to vector<24x1xf32>
    %99 = arith.divf %97, %98 : vector<24x1xf32>
    %cst_52 = arith.constant 9.99999974E-6 : f32
    %100 = vector.broadcast %cst_52 : f32 to vector<24x1xf32>
    %101 = arith.addf %99, %100 : vector<24x1xf32>
    %102 = math.rsqrt %101 : vector<24x1xf32>
    %103 = arith.mulf %87, %102 : vector<24x1xf32>
    %104 = vector.broadcast %103 : vector<24x1xf32> to vector<24x512xf32>
    %105 = arith.mulf %94, %104 : vector<24x512xf32>
    %106 = vector.broadcast %88 : vector<24x1xf32> to vector<24x512xf32>
    %107 = arith.addf %105, %106 : vector<24x512xf32>
    %cst_53 = arith.constant 0.000000e+00 : f32
    %108 = vector.broadcast %cst_53 : f32 to vector<24x512xf32>
    %109 = arith.maximumf %107, %108 : vector<24x512xf32>
    %110 = vector.extract_strided_slice %109 {offsets = [0, 0], sizes = [8, 512], strides = [1, 1]} : vector<24x512xf32> to vector<8x512xf32>
    %111 = vector.extract_strided_slice %109 {offsets = [8, 0], sizes = [8, 512], strides = [1, 1]} : vector<24x512xf32> to vector<8x512xf32>
    %112 = vector.extract_strided_slice %109 {offsets = [16, 0], sizes = [8, 512], strides = [1, 1]} : vector<24x512xf32> to vector<8x512xf32>
    %cst_54 = arith.constant 0.000000e+00 : f32
    %113 = vector.broadcast %cst_54 : f32 to vector<8x768xf32>
    %c0_55 = arith.constant 0 : index
    %c0_56 = arith.constant 0 : index
    %114 = vector.load %arg11[%c0_55, %c0_56] : memref<8x768xf32, #tpu.memory_space<vmem>>, vector<8x768xf32>
    tpu.vector_store %arg11[%c0_55, %c0_56], %113 {strides = array<i32>} : memref<8x768xf32, #tpu.memory_space<vmem>>, vector<8x768xf32>,
    %c0_57 = arith.constant 0 : index
    %c128_58 = arith.constant 128 : index
    %115 = vector.load %arg11[%c0_57, %c128_58] : memref<8x768xf32, #tpu.memory_space<vmem>>, vector<8x512xf32>
    tpu.vector_store %arg11[%c0_57, %c128_58], %111 {strides = array<i32>} : memref<8x768xf32, #tpu.memory_space<vmem>>, vector<8x512xf32>,
    %c0_59 = arith.constant 0 : index
    %c94 = arith.constant 94 : index
    %116 = vector.load %arg11[%c0_59, %c94] : memref<8x768xf32, #tpu.memory_space<vmem>>, vector<8x512xf32>
    %117 = vector.extract_strided_slice %0 {offsets = [0, 0], sizes = [1, 512], strides = [1, 1]} : vector<25x512xf32> to vector<1x512xf32>
    %118 = vector.broadcast %117 : vector<1x512xf32> to vector<8x512xf32>
    %119 = arith.mulf %116, %118 : vector<8x512xf32>
    %c0_60 = arith.constant 0 : index
    %c0_61 = arith.constant 0 : index
    %120 = vector.load %arg12[%c0_60, %c0_61] : memref<200x512xf32, #tpu.memory_space<vmem>>, vector<8x512xf32>
    tpu.vector_store %arg12[%c0_60, %c0_61], %119 {strides = array<i32>} : memref<200x512xf32, #tpu.memory_space<vmem>>, vector<8x512xf32>,
    %c0_62 = arith.constant 0 : index
    %c95 = arith.constant 95 : index
    %121 = vector.load %arg11[%c0_62, %c95] : memref<8x768xf32, #tpu.memory_space<vmem>>, vector<8x512xf32>
    %122 = vector.extract_strided_slice %0 {offsets = [1, 0], sizes = [1, 512], strides = [1, 1]} : vector<25x512xf32> to vector<1x512xf32>
    %123 = vector.broadcast %122 : vector<1x512xf32> to vector<8x512xf32>
    %124 = arith.mulf %121, %123 : vector<8x512xf32>
    %c8 = arith.constant 8 : index
    %c0_63 = arith.constant 0 : index
    %125 = vector.load %arg12[%c8, %c0_63] : memref<200x512xf32, #tpu.memory_space<vmem>>, vector<8x512xf32>
    tpu.vector_store %arg12[%c8, %c0_63], %124 {strides = array<i32>} : memref<200x512xf32, #tpu.memory_space<vmem>>, vector<8x512xf32>,
    %c0_64 = arith.constant 0 : index
    %c96 = arith.constant 96 : index
    %126 = vector.load %arg11[%c0_64, %c96] : memref<8x768xf32, #tpu.memory_space<vmem>>, vector<8x512xf32>
    %127 = vector.extract_strided_slice %0 {offsets = [2, 0], sizes = [1, 512], strides = [1, 1]} : vector<25x512xf32> to vector<1x512xf32>
    %128 = vector.broadcast %127 : vector<1x512xf32> to vector<8x512xf32>
    %129 = arith.mulf %126, %128 : vector<8x512xf32>
    %c16 = arith.constant 16 : index
    %c0_65 = arith.constant 0 : index
    %130 = vector.load %arg12[%c16, %c0_65] : memref<200x512xf32, #tpu.memory_space<vmem>>, vector<8x512xf32>
    tpu.vector_store %arg12[%c16, %c0_65], %129 {strides = array<i32>} : memref<200x512xf32, #tpu.memory_space<vmem>>, vector<8x512xf32>,
    %c0_66 = arith.constant 0 : index
    %c97 = arith.constant 97 : index
    %131 = vector.load %arg11[%c0_66, %c97] : memref<8x768xf32, #tpu.memory_space<vmem>>, vector<8x512xf32>
    %132 = vector.extract_strided_slice %0 {offsets = [3, 0], sizes = [1, 512], strides = [1, 1]} : vector<25x512xf32> to vector<1x512xf32>
    %133 = vector.broadcast %132 : vector<1x512xf32> to vector<8x512xf32>
    %134 = arith.mulf %131, %133 : vector<8x512xf32>
    %c24 = arith.constant 24 : index
    %c0_67 = arith.constant 0 : index
    %135 = vector.load %arg12[%c24, %c0_67] : memref<200x512xf32, #tpu.memory_space<vmem>>, vector<8x512xf32>
    tpu.vector_store %arg12[%c24, %c0_67], %134 {strides = array<i32>} : memref<200x512xf32, #tpu.memory_space<vmem>>, vector<8x512xf32>,
    %c0_68 = arith.constant 0 : index
    %c98 = arith.constant 98 : index
    %136 = vector.load %arg11[%c0_68, %c98] : memref<8x768xf32, #tpu.memory_space<vmem>>, vector<8x512xf32>
    %137 = vector.extract_strided_slice %0 {offsets = [4, 0], sizes = [1, 512], strides = [1, 1]} : vector<25x512xf32> to vector<1x512xf32>
    %138 = vector.broadcast %137 : vector<1x512xf32> to vector<8x512xf32>
    %139 = arith.mulf %136, %138 : vector<8x512xf32>
    %c32 = arith.constant 32 : index
    %c0_69 = arith.constant 0 : index
    %140 = vector.load %arg12[%c32, %c0_69] : memref<200x512xf32, #tpu.memory_space<vmem>>, vector<8x512xf32>
    tpu.vector_store %arg12[%c32, %c0_69], %139 {strides = array<i32>} : memref<200x512xf32, #tpu.memory_space<vmem>>, vector<8x512xf32>,
    %c0_70 = arith.constant 0 : index
    %c110 = arith.constant 110 : index
    %141 = vector.load %arg11[%c0_70, %c110] : memref<8x768xf32, #tpu.memory_space<vmem>>, vector<8x512xf32>
    %142 = vector.extract_strided_slice %0 {offsets = [5, 0], sizes = [1, 512], strides = [1, 1]} : vector<25x512xf32> to vector<1x512xf32>
    %143 = vector.broadcast %142 : vector<1x512xf32> to vector<8x512xf32>
    %144 = arith.mulf %141, %143 : vector<8x512xf32>
    %c40 = arith.constant 40 : index
    %c0_71 = arith.constant 0 : index
    %145 = vector.load %arg12[%c40, %c0_71] : memref<200x512xf32, #tpu.memory_space<vmem>>, vector<8x512xf32>
    tpu.vector_store %arg12[%c40, %c0_71], %144 {strides = array<i32>} : memref<200x512xf32, #tpu.memory_space<vmem>>, vector<8x512xf32>,
    %c0_72 = arith.constant 0 : index
    %c111_73 = arith.constant 111 : index
    %146 = vector.load %arg11[%c0_72, %c111_73] : memref<8x768xf32, #tpu.memory_space<vmem>>, vector<8x512xf32>
    %147 = vector.extract_strided_slice %0 {offsets = [6, 0], sizes = [1, 512], strides = [1, 1]} : vector<25x512xf32> to vector<1x512xf32>
    %148 = vector.broadcast %147 : vector<1x512xf32> to vector<8x512xf32>
    %149 = arith.mulf %146, %148 : vector<8x512xf32>
    %c48 = arith.constant 48 : index
    %c0_74 = arith.constant 0 : index
    %150 = vector.load %arg12[%c48, %c0_74] : memref<200x512xf32, #tpu.memory_space<vmem>>, vector<8x512xf32>
    tpu.vector_store %arg12[%c48, %c0_74], %149 {strides = array<i32>} : memref<200x512xf32, #tpu.memory_space<vmem>>, vector<8x512xf32>,
    %c0_75 = arith.constant 0 : index
    %c112_76 = arith.constant 112 : index
    %151 = vector.load %arg11[%c0_75, %c112_76] : memref<8x768xf32, #tpu.memory_space<vmem>>, vector<8x512xf32>
    %152 = vector.extract_strided_slice %0 {offsets = [7, 0], sizes = [1, 512], strides = [1, 1]} : vector<25x512xf32> to vector<1x512xf32>
    %153 = vector.broadcast %152 : vector<1x512xf32> to vector<8x512xf32>
    %154 = arith.mulf %151, %153 : vector<8x512xf32>
    %c56 = arith.constant 56 : index
    %c0_77 = arith.constant 0 : index
    %155 = vector.load %arg12[%c56, %c0_77] : memref<200x512xf32, #tpu.memory_space<vmem>>, vector<8x512xf32>
    tpu.vector_store %arg12[%c56, %c0_77], %154 {strides = array<i32>} : memref<200x512xf32, #tpu.memory_space<vmem>>, vector<8x512xf32>,
    %c0_78 = arith.constant 0 : index
    %c113_79 = arith.constant 113 : index
    %156 = vector.load %arg11[%c0_78, %c113_79] : memref<8x768xf32, #tpu.memory_space<vmem>>, vector<8x512xf32>
    %157 = vector.extract_strided_slice %0 {offsets = [8, 0], sizes = [1, 512], strides = [1, 1]} : vector<25x512xf32> to vector<1x512xf32>
    %158 = vector.broadcast %157 : vector<1x512xf32> to vector<8x512xf32>
    %159 = arith.mulf %156, %158 : vector<8x512xf32>
    %c64 = arith.constant 64 : index
    %c0_80 = arith.constant 0 : index
    %160 = vector.load %arg12[%c64, %c0_80] : memref<200x512xf32, #tpu.memory_space<vmem>>, vector<8x512xf32>
    tpu.vector_store %arg12[%c64, %c0_80], %159 {strides = array<i32>} : memref<200x512xf32, #tpu.memory_space<vmem>>, vector<8x512xf32>,
    %c0_81 = arith.constant 0 : index
    %c114 = arith.constant 114 : index
    %161 = vector.load %arg11[%c0_81, %c114] : memref<8x768xf32, #tpu.memory_space<vmem>>, vector<8x512xf32>
    %162 = vector.extract_strided_slice %0 {offsets = [9, 0], sizes = [1, 512], strides = [1, 1]} : vector<25x512xf32> to vector<1x512xf32>
    %163 = vector.broadcast %162 : vector<1x512xf32> to vector<8x512xf32>
    %164 = arith.mulf %161, %163 : vector<8x512xf32>
    %c72 = arith.constant 72 : index
    %c0_82 = arith.constant 0 : index
    %165 = vector.load %arg12[%c72, %c0_82] : memref<200x512xf32, #tpu.memory_space<vmem>>, vector<8x512xf32>
    tpu.vector_store %arg12[%c72, %c0_82], %164 {strides = array<i32>} : memref<200x512xf32, #tpu.memory_space<vmem>>, vector<8x512xf32>,
    %c0_83 = arith.constant 0 : index
    %c126 = arith.constant 126 : index
    %166 = vector.load %arg11[%c0_83, %c126] : memref<8x768xf32, #tpu.memory_space<vmem>>, vector<8x512xf32>
    %167 = vector.extract_strided_slice %0 {offsets = [10, 0], sizes = [1, 512], strides = [1, 1]} : vector<25x512xf32> to vector<1x512xf32>
    %168 = vector.broadcast %167 : vector<1x512xf32> to vector<8x512xf32>
    %169 = arith.mulf %166, %168 : vector<8x512xf32>
    %c80 = arith.constant 80 : index
    %c0_84 = arith.constant 0 : index
    %170 = vector.load %arg12[%c80, %c0_84] : memref<200x512xf32, #tpu.memory_space<vmem>>, vector<8x512xf32>
    tpu.vector_store %arg12[%c80, %c0_84], %169 {strides = array<i32>} : memref<200x512xf32, #tpu.memory_space<vmem>>, vector<8x512xf32>,
    %c0_85 = arith.constant 0 : index
    %c127_86 = arith.constant 127 : index
    %171 = vector.load %arg11[%c0_85, %c127_86] : memref<8x768xf32, #tpu.memory_space<vmem>>, vector<8x512xf32>
    %172 = vector.extract_strided_slice %0 {offsets = [11, 0], sizes = [1, 512], strides = [1, 1]} : vector<25x512xf32> to vector<1x512xf32>
    %173 = vector.broadcast %172 : vector<1x512xf32> to vector<8x512xf32>
    %174 = arith.mulf %171, %173 : vector<8x512xf32>
    %c88 = arith.constant 88 : index
    %c0_87 = arith.constant 0 : index
    %175 = vector.load %arg12[%c88, %c0_87] : memref<200x512xf32, #tpu.memory_space<vmem>>, vector<8x512xf32>
    tpu.vector_store %arg12[%c88, %c0_87], %174 {strides = array<i32>} : memref<200x512xf32, #tpu.memory_space<vmem>>, vector<8x512xf32>,
    %c0_88 = arith.constant 0 : index
    %c128_89 = arith.constant 128 : index
    %176 = vector.load %arg11[%c0_88, %c128_89] : memref<8x768xf32, #tpu.memory_space<vmem>>, vector<8x512xf32>
    %177 = vector.extract_strided_slice %0 {offsets = [12, 0], sizes = [1, 512], strides = [1, 1]} : vector<25x512xf32> to vector<1x512xf32>
    %178 = vector.broadcast %177 : vector<1x512xf32> to vector<8x512xf32>
    %179 = arith.mulf %176, %178 : vector<8x512xf32>
    %c96_90 = arith.constant 96 : index
    %c0_91 = arith.constant 0 : index
    %180 = vector.load %arg12[%c96_90, %c0_91] : memref<200x512xf32, #tpu.memory_space<vmem>>, vector<8x512xf32>
    tpu.vector_store %arg12[%c96_90, %c0_91], %179 {strides = array<i32>} : memref<200x512xf32, #tpu.memory_space<vmem>>, vector<8x512xf32>,
    %c0_92 = arith.constant 0 : index
    %c129_93 = arith.constant 129 : index
    %181 = vector.load %arg11[%c0_92, %c129_93] : memref<8x768xf32, #tpu.memory_space<vmem>>, vector<8x512xf32>
    %182 = vector.extract_strided_slice %0 {offsets = [13, 0], sizes = [1, 512], strides = [1, 1]} : vector<25x512xf32> to vector<1x512xf32>
    %183 = vector.broadcast %182 : vector<1x512xf32> to vector<8x512xf32>
    %184 = arith.mulf %181, %183 : vector<8x512xf32>
    %c104 = arith.constant 104 : index
    %c0_94 = arith.constant 0 : index
    %185 = vector.load %arg12[%c104, %c0_94] : memref<200x512xf32, #tpu.memory_space<vmem>>, vector<8x512xf32>
    tpu.vector_store %arg12[%c104, %c0_94], %184 {strides = array<i32>} : memref<200x512xf32, #tpu.memory_space<vmem>>, vector<8x512xf32>,
    %c0_95 = arith.constant 0 : index
    %c130 = arith.constant 130 : index
    %186 = vector.load %arg11[%c0_95, %c130] : memref<8x768xf32, #tpu.memory_space<vmem>>, vector<8x512xf32>
    %187 = vector.extract_strided_slice %0 {offsets = [14, 0], sizes = [1, 512], strides = [1, 1]} : vector<25x512xf32> to vector<1x512xf32>
    %188 = vector.broadcast %187 : vector<1x512xf32> to vector<8x512xf32>
    %189 = arith.mulf %186, %188 : vector<8x512xf32>
    %c112_96 = arith.constant 112 : index
    %c0_97 = arith.constant 0 : index
    %190 = vector.load %arg12[%c112_96, %c0_97] : memref<200x512xf32, #tpu.memory_space<vmem>>, vector<8x512xf32>
    tpu.vector_store %arg12[%c112_96, %c0_97], %189 {strides = array<i32>} : memref<200x512xf32, #tpu.memory_space<vmem>>, vector<8x512xf32>,
    %c0_98 = arith.constant 0 : index
    %c142 = arith.constant 142 : index
    %191 = vector.load %arg11[%c0_98, %c142] : memref<8x768xf32, #tpu.memory_space<vmem>>, vector<8x512xf32>
    %192 = vector.extract_strided_slice %0 {offsets = [15, 0], sizes = [1, 512], strides = [1, 1]} : vector<25x512xf32> to vector<1x512xf32>
    %193 = vector.broadcast %192 : vector<1x512xf32> to vector<8x512xf32>
    %194 = arith.mulf %191, %193 : vector<8x512xf32>
    %c120 = arith.constant 120 : index
    %c0_99 = arith.constant 0 : index
    %195 = vector.load %arg12[%c120, %c0_99] : memref<200x512xf32, #tpu.memory_space<vmem>>, vector<8x512xf32>
    tpu.vector_store %arg12[%c120, %c0_99], %194 {strides = array<i32>} : memref<200x512xf32, #tpu.memory_space<vmem>>, vector<8x512xf32>,
    %c0_100 = arith.constant 0 : index
    %c143_101 = arith.constant 143 : index
    %196 = vector.load %arg11[%c0_100, %c143_101] : memref<8x768xf32, #tpu.memory_space<vmem>>, vector<8x512xf32>
    %197 = vector.extract_strided_slice %0 {offsets = [16, 0], sizes = [1, 512], strides = [1, 1]} : vector<25x512xf32> to vector<1x512xf32>
    %198 = vector.broadcast %197 : vector<1x512xf32> to vector<8x512xf32>
    %199 = arith.mulf %196, %198 : vector<8x512xf32>
    %c128_102 = arith.constant 128 : index
    %c0_103 = arith.constant 0 : index
    %200 = vector.load %arg12[%c128_102, %c0_103] : memref<200x512xf32, #tpu.memory_space<vmem>>, vector<8x512xf32>
    tpu.vector_store %arg12[%c128_102, %c0_103], %199 {strides = array<i32>} : memref<200x512xf32, #tpu.memory_space<vmem>>, vector<8x512xf32>,
    %c0_104 = arith.constant 0 : index
    %c144_105 = arith.constant 144 : index
    %201 = vector.load %arg11[%c0_104, %c144_105] : memref<8x768xf32, #tpu.memory_space<vmem>>, vector<8x512xf32>
    %202 = vector.extract_strided_slice %0 {offsets = [17, 0], sizes = [1, 512], strides = [1, 1]} : vector<25x512xf32> to vector<1x512xf32>
    %203 = vector.broadcast %202 : vector<1x512xf32> to vector<8x512xf32>
    %204 = arith.mulf %201, %203 : vector<8x512xf32>
    %c136 = arith.constant 136 : index
    %c0_106 = arith.constant 0 : index
    %205 = vector.load %arg12[%c136, %c0_106] : memref<200x512xf32, #tpu.memory_space<vmem>>, vector<8x512xf32>
    tpu.vector_store %arg12[%c136, %c0_106], %204 {strides = array<i32>} : memref<200x512xf32, #tpu.memory_space<vmem>>, vector<8x512xf32>,
    %c0_107 = arith.constant 0 : index
    %c145_108 = arith.constant 145 : index
    %206 = vector.load %arg11[%c0_107, %c145_108] : memref<8x768xf32, #tpu.memory_space<vmem>>, vector<8x512xf32>
    %207 = vector.extract_strided_slice %0 {offsets = [18, 0], sizes = [1, 512], strides = [1, 1]} : vector<25x512xf32> to vector<1x512xf32>
    %208 = vector.broadcast %207 : vector<1x512xf32> to vector<8x512xf32>
    %209 = arith.mulf %206, %208 : vector<8x512xf32>
    %c144_109 = arith.constant 144 : index
    %c0_110 = arith.constant 0 : index
    %210 = vector.load %arg12[%c144_109, %c0_110] : memref<200x512xf32, #tpu.memory_space<vmem>>, vector<8x512xf32>
    tpu.vector_store %arg12[%c144_109, %c0_110], %209 {strides = array<i32>} : memref<200x512xf32, #tpu.memory_space<vmem>>, vector<8x512xf32>,
    %c0_111 = arith.constant 0 : index
    %c146 = arith.constant 146 : index
    %211 = vector.load %arg11[%c0_111, %c146] : memref<8x768xf32, #tpu.memory_space<vmem>>, vector<8x512xf32>
    %212 = vector.extract_strided_slice %0 {offsets = [19, 0], sizes = [1, 512], strides = [1, 1]} : vector<25x512xf32> to vector<1x512xf32>
    %213 = vector.broadcast %212 : vector<1x512xf32> to vector<8x512xf32>
    %214 = arith.mulf %211, %213 : vector<8x512xf32>
    %c152 = arith.constant 152 : index
    %c0_112 = arith.constant 0 : index
    %215 = vector.load %arg12[%c152, %c0_112] : memref<200x512xf32, #tpu.memory_space<vmem>>, vector<8x512xf32>
    tpu.vector_store %arg12[%c152, %c0_112], %214 {strides = array<i32>} : memref<200x512xf32, #tpu.memory_space<vmem>>, vector<8x512xf32>,
    %c0_113 = arith.constant 0 : index
    %c158 = arith.constant 158 : index
    %216 = vector.load %arg11[%c0_113, %c158] : memref<8x768xf32, #tpu.memory_space<vmem>>, vector<8x512xf32>
    %217 = vector.extract_strided_slice %0 {offsets = [20, 0], sizes = [1, 512], strides = [1, 1]} : vector<25x512xf32> to vector<1x512xf32>
    %218 = vector.broadcast %217 : vector<1x512xf32> to vector<8x512xf32>
    %219 = arith.mulf %216, %218 : vector<8x512xf32>
    %c160 = arith.constant 160 : index
    %c0_114 = arith.constant 0 : index
    %220 = vector.load %arg12[%c160, %c0_114] : memref<200x512xf32, #tpu.memory_space<vmem>>, vector<8x512xf32>
    tpu.vector_store %arg12[%c160, %c0_114], %219 {strides = array<i32>} : memref<200x512xf32, #tpu.memory_space<vmem>>, vector<8x512xf32>,
    %c0_115 = arith.constant 0 : index
    %c159 = arith.constant 159 : index
    %221 = vector.load %arg11[%c0_115, %c159] : memref<8x768xf32, #tpu.memory_space<vmem>>, vector<8x512xf32>
    %222 = vector.extract_strided_slice %0 {offsets = [21, 0], sizes = [1, 512], strides = [1, 1]} : vector<25x512xf32> to vector<1x512xf32>
    %223 = vector.broadcast %222 : vector<1x512xf32> to vector<8x512xf32>
    %224 = arith.mulf %221, %223 : vector<8x512xf32>
    %c168 = arith.constant 168 : index
    %c0_116 = arith.constant 0 : index
    %225 = vector.load %arg12[%c168, %c0_116] : memref<200x512xf32, #tpu.memory_space<vmem>>, vector<8x512xf32>
    tpu.vector_store %arg12[%c168, %c0_116], %224 {strides = array<i32>} : memref<200x512xf32, #tpu.memory_space<vmem>>, vector<8x512xf32>,
    %c0_117 = arith.constant 0 : index
    %c160_118 = arith.constant 160 : index
    %226 = vector.load %arg11[%c0_117, %c160_118] : memref<8x768xf32, #tpu.memory_space<vmem>>, vector<8x512xf32>
    %227 = vector.extract_strided_slice %0 {offsets = [22, 0], sizes = [1, 512], strides = [1, 1]} : vector<25x512xf32> to vector<1x512xf32>
    %228 = vector.broadcast %227 : vector<1x512xf32> to vector<8x512xf32>
    %229 = arith.mulf %226, %228 : vector<8x512xf32>
    %c176 = arith.constant 176 : index
    %c0_119 = arith.constant 0 : index
    %230 = vector.load %arg12[%c176, %c0_119] : memref<200x512xf32, #tpu.memory_space<vmem>>, vector<8x512xf32>
    tpu.vector_store %arg12[%c176, %c0_119], %229 {strides = array<i32>} : memref<200x512xf32, #tpu.memory_space<vmem>>, vector<8x512xf32>,
    %c0_120 = arith.constant 0 : index
    %c161 = arith.constant 161 : index
    %231 = vector.load %arg11[%c0_120, %c161] : memref<8x768xf32, #tpu.memory_space<vmem>>, vector<8x512xf32>
    %232 = vector.extract_strided_slice %0 {offsets = [23, 0], sizes = [1, 512], strides = [1, 1]} : vector<25x512xf32> to vector<1x512xf32>
    %233 = vector.broadcast %232 : vector<1x512xf32> to vector<8x512xf32>
    %234 = arith.mulf %231, %233 : vector<8x512xf32>
    %c184 = arith.constant 184 : index
    %c0_121 = arith.constant 0 : index
    %235 = vector.load %arg12[%c184, %c0_121] : memref<200x512xf32, #tpu.memory_space<vmem>>, vector<8x512xf32>
    tpu.vector_store %arg12[%c184, %c0_121], %234 {strides = array<i32>} : memref<200x512xf32, #tpu.memory_space<vmem>>, vector<8x512xf32>,
    %c0_122 = arith.constant 0 : index
    %c162 = arith.constant 162 : index
    %236 = vector.load %arg11[%c0_122, %c162] : memref<8x768xf32, #tpu.memory_space<vmem>>, vector<8x512xf32>
    %237 = vector.extract_strided_slice %0 {offsets = [24, 0], sizes = [1, 512], strides = [1, 1]} : vector<25x512xf32> to vector<1x512xf32>
    %238 = vector.broadcast %237 : vector<1x512xf32> to vector<8x512xf32>
    %239 = arith.mulf %236, %238 : vector<8x512xf32>
    %c192 = arith.constant 192 : index
    %c0_123 = arith.constant 0 : index
    %240 = vector.load %arg12[%c192, %c0_123] : memref<200x512xf32, #tpu.memory_space<vmem>>, vector<8x512xf32>
    tpu.vector_store %arg12[%c192, %c0_123], %239 {strides = array<i32>} : memref<200x512xf32, #tpu.memory_space<vmem>>, vector<8x512xf32>,
    %c0_124 = arith.constant 0 : index
    %c0_125 = arith.constant 0 : index
    %241 = vector.load %arg3[%c0_124, %c0_125] : memref<16x200xf32, #tpu.memory_space<vmem>>, vector<16x200xf32>
    %c0_126 = arith.constant 0 : index
    %c0_127 = arith.constant 0 : index
    %242 = vector.load %arg12[%c0_126, %c0_127] : memref<200x512xf32, #tpu.memory_space<vmem>>, vector<200x512xf32>
    %cst_128 = arith.constant dense<0.000000e+00> : vector<16x512xf32>
    %243 = tpu.matmul %241, %242, %cst_128 {dimension_numbers = #tpu.dot_dimension_numbers<[1], [0], [0], [1], [0, 0, 1, 1], [], []>} : vector<16x200xf32>, vector<200x512xf32>, vector<16x512xf32> -> vector<16x512xf32>
    %c0_129 = arith.constant 0 : index
    %c0_130 = arith.constant 0 : index
    %244 = vector.load %arg6[%c0_129, %c0_130] : memref<16x1xf32, #tpu.memory_space<vmem>>, vector<16x1xf32>
    %c0_131 = arith.constant 0 : index
    %c0_132 = arith.constant 0 : index
    %245 = vector.load %arg7[%c0_131, %c0_132] : memref<16x1xf32, #tpu.memory_space<vmem>>, vector<16x1xf32>
    %cst_133 = arith.constant dense<0.000000e+00> : vector<16xf32>
    %246 = vector.multi_reduction <add>, %243, %cst_133 [1] : vector<16x512xf32> to vector<16xf32>
    %247 = vector.shape_cast %246 : vector<16xf32> to vector<16x1xf32>
    %cst_134 = arith.constant 5.120000e+02 : f32
    %248 = vector.broadcast %cst_134 : f32 to vector<16x1xf32>
    %249 = arith.divf %247, %248 : vector<16x1xf32>
    %250 = vector.broadcast %249 : vector<16x1xf32> to vector<16x512xf32>
    %251 = arith.subf %243, %250 : vector<16x512xf32>
    %252 = arith.mulf %251, %251 : vector<16x512xf32>
    %cst_135 = arith.constant dense<0.000000e+00> : vector<16xf32>
    %253 = vector.multi_reduction <add>, %252, %cst_135 [1] : vector<16x512xf32> to vector<16xf32>
    %254 = vector.shape_cast %253 : vector<16xf32> to vector<16x1xf32>
    %cst_136 = arith.constant 5.120000e+02 : f32
    %255 = vector.broadcast %cst_136 : f32 to vector<16x1xf32>
    %256 = arith.divf %254, %255 : vector<16x1xf32>
    %cst_137 = arith.constant 9.99999974E-6 : f32
    %257 = vector.broadcast %cst_137 : f32 to vector<16x1xf32>
    %258 = arith.addf %256, %257 : vector<16x1xf32>
    %259 = math.rsqrt %258 : vector<16x1xf32>
    %260 = arith.mulf %244, %259 : vector<16x1xf32>
    %261 = vector.broadcast %260 : vector<16x1xf32> to vector<16x512xf32>
    %262 = arith.mulf %251, %261 : vector<16x512xf32>
    %263 = vector.broadcast %245 : vector<16x1xf32> to vector<16x512xf32>
    %264 = arith.addf %262, %263 : vector<16x512xf32>
    %cst_138 = arith.constant 0.000000e+00 : f32
    %265 = vector.broadcast %cst_138 : f32 to vector<16x512xf32>
    %266 = arith.maximumf %264, %265 : vector<16x512xf32>
    %267 = vector.extract_strided_slice %266 {offsets = [0, 0], sizes = [8, 512], strides = [1, 1]} : vector<16x512xf32> to vector<8x512xf32>
    %268 = vector.extract_strided_slice %266 {offsets = [8, 0], sizes = [8, 512], strides = [1, 1]} : vector<16x512xf32> to vector<8x512xf32>
    %269 = vector.extract_strided_slice %110 {offsets = [0, 0], sizes = [8, 256], strides = [1, 1]} : vector<8x512xf32> to vector<8x256xf32>
    %c0_139 = arith.constant 0 : index
    %c0_140 = arith.constant 0 : index
    %c0_141 = arith.constant 0 : index
    %270 = vector.load %arg8[%c0_139, %c0_140, %c0_141] : memref<2x32x256xf32, #tpu.memory_space<vmem>>, vector<1x8x256xf32>
    %271 = vector.shape_cast %270 : vector<1x8x256xf32> to vector<8x256xf32>
    %272 = vector.shape_cast %269 : vector<8x256xf32> to vector<1x8x256xf32>
    tpu.vector_store %arg8[%c0_139, %c0_140, %c0_141], %272 {strides = array<i32>} : memref<2x32x256xf32, #tpu.memory_space<vmem>>, vector<1x8x256xf32>,
    %273 = vector.extract_strided_slice %267 {offsets = [0, 0], sizes = [8, 256], strides = [1, 1]} : vector<8x512xf32> to vector<8x256xf32>
    %c0_142 = arith.constant 0 : index
    %c8_143 = arith.constant 8 : index
    %c0_144 = arith.constant 0 : index
    %274 = vector.load %arg8[%c0_142, %c8_143, %c0_144] : memref<2x32x256xf32, #tpu.memory_space<vmem>>, vector<1x8x256xf32>
    %275 = vector.shape_cast %274 : vector<1x8x256xf32> to vector<8x256xf32>
    %276 = vector.shape_cast %273 : vector<8x256xf32> to vector<1x8x256xf32>
    tpu.vector_store %arg8[%c0_142, %c8_143, %c0_144], %276 {strides = array<i32>} : memref<2x32x256xf32, #tpu.memory_space<vmem>>, vector<1x8x256xf32>,
    %277 = vector.extract_strided_slice %268 {offsets = [0, 0], sizes = [8, 256], strides = [1, 1]} : vector<8x512xf32> to vector<8x256xf32>
    %c0_145 = arith.constant 0 : index
    %c16_146 = arith.constant 16 : index
    %c0_147 = arith.constant 0 : index
    %278 = vector.load %arg8[%c0_145, %c16_146, %c0_147] : memref<2x32x256xf32, #tpu.memory_space<vmem>>, vector<1x8x256xf32>
    %279 = vector.shape_cast %278 : vector<1x8x256xf32> to vector<8x256xf32>
    %280 = vector.shape_cast %277 : vector<8x256xf32> to vector<1x8x256xf32>
    tpu.vector_store %arg8[%c0_145, %c16_146, %c0_147], %280 {strides = array<i32>} : memref<2x32x256xf32, #tpu.memory_space<vmem>>, vector<1x8x256xf32>,
    %281 = vector.extract_strided_slice %112 {offsets = [0, 0], sizes = [8, 256], strides = [1, 1]} : vector<8x512xf32> to vector<8x256xf32>
    %c0_148 = arith.constant 0 : index
    %c24_149 = arith.constant 24 : index
    %c0_150 = arith.constant 0 : index
    %282 = vector.load %arg8[%c0_148, %c24_149, %c0_150] : memref<2x32x256xf32, #tpu.memory_space<vmem>>, vector<1x8x256xf32>
    %283 = vector.shape_cast %282 : vector<1x8x256xf32> to vector<8x256xf32>
    %284 = vector.shape_cast %281 : vector<8x256xf32> to vector<1x8x256xf32>
    tpu.vector_store %arg8[%c0_148, %c24_149, %c0_150], %284 {strides = array<i32>} : memref<2x32x256xf32, #tpu.memory_space<vmem>>, vector<1x8x256xf32>,
    %285 = vector.extract_strided_slice %110 {offsets = [0, 256], sizes = [8, 256], strides = [1, 1]} : vector<8x512xf32> to vector<8x256xf32>
    %c1_151 = arith.constant 1 : index
    %c0_152 = arith.constant 0 : index
    %c0_153 = arith.constant 0 : index
    %286 = vector.load %arg8[%c1_151, %c0_152, %c0_153] : memref<2x32x256xf32, #tpu.memory_space<vmem>>, vector<1x8x256xf32>
    %287 = vector.shape_cast %286 : vector<1x8x256xf32> to vector<8x256xf32>
    %288 = vector.shape_cast %285 : vector<8x256xf32> to vector<1x8x256xf32>
    tpu.vector_store %arg8[%c1_151, %c0_152, %c0_153], %288 {strides = array<i32>} : memref<2x32x256xf32, #tpu.memory_space<vmem>>, vector<1x8x256xf32>,
    %289 = vector.extract_strided_slice %267 {offsets = [0, 256], sizes = [8, 256], strides = [1, 1]} : vector<8x512xf32> to vector<8x256xf32>
    %c1_154 = arith.constant 1 : index
    %c8_155 = arith.constant 8 : index
    %c0_156 = arith.constant 0 : index
    %290 = vector.load %arg8[%c1_154, %c8_155, %c0_156] : memref<2x32x256xf32, #tpu.memory_space<vmem>>, vector<1x8x256xf32>
    %291 = vector.shape_cast %290 : vector<1x8x256xf32> to vector<8x256xf32>
    %292 = vector.shape_cast %289 : vector<8x256xf32> to vector<1x8x256xf32>
    tpu.vector_store %arg8[%c1_154, %c8_155, %c0_156], %292 {strides = array<i32>} : memref<2x32x256xf32, #tpu.memory_space<vmem>>, vector<1x8x256xf32>,
    %293 = vector.extract_strided_slice %268 {offsets = [0, 256], sizes = [8, 256], strides = [1, 1]} : vector<8x512xf32> to vector<8x256xf32>
    %c1_157 = arith.constant 1 : index
    %c16_158 = arith.constant 16 : index
    %c0_159 = arith.constant 0 : index
    %294 = vector.load %arg8[%c1_157, %c16_158, %c0_159] : memref<2x32x256xf32, #tpu.memory_space<vmem>>, vector<1x8x256xf32>
    %295 = vector.shape_cast %294 : vector<1x8x256xf32> to vector<8x256xf32>
    %296 = vector.shape_cast %293 : vector<8x256xf32> to vector<1x8x256xf32>
    tpu.vector_store %arg8[%c1_157, %c16_158, %c0_159], %296 {strides = array<i32>} : memref<2x32x256xf32, #tpu.memory_space<vmem>>, vector<1x8x256xf32>,
    %297 = vector.extract_strided_slice %112 {offsets = [0, 256], sizes = [8, 256], strides = [1, 1]} : vector<8x512xf32> to vector<8x256xf32>
    %c1_160 = arith.constant 1 : index
    %c24_161 = arith.constant 24 : index
    %c0_162 = arith.constant 0 : index
    %298 = vector.load %arg8[%c1_160, %c24_161, %c0_162] : memref<2x32x256xf32, #tpu.memory_space<vmem>>, vector<1x8x256xf32>
    %299 = vector.shape_cast %298 : vector<1x8x256xf32> to vector<8x256xf32>
    %300 = vector.shape_cast %297 : vector<8x256xf32> to vector<1x8x256xf32>
    tpu.vector_store %arg8[%c1_160, %c24_161, %c0_162], %300 {strides = array<i32>} : memref<2x32x256xf32, #tpu.memory_space<vmem>>, vector<1x8x256xf32>,
    return
  }
}

</mosaic_0001>

<llo_original>
// kernel: inception_forward.1
$region0: #{inception_forward.1}
  #allocation0 [shape = 'u32[]', space=smem, size = 0x4, offset = 0x4, fixed_abs, tag = 'smem constant byte address 0x4 - core index']
  #allocation1 [shape = 'u32[144,128]{1,0:T(1,128)}', space=vmem, size = 0x12000, scoped, tag = 'internal scratch']
  #allocation2 [shape = 'f32[4,768]{1,0:T(4,128)}', space=vmem, size = 0x3000, scoped, tag = 'scratch operand']
  #allocation3 [shape = 'f32[8,512]{1,0:T(8,128)}', space=vmem, size = 0x4000, scoped, tag = 'scratch operand']
  #allocation4 [shape = 'f32[8,768]{1,0:T(8,128)}', space=vmem, size = 0x6000, scoped, tag = 'scratch operand']
  #allocation5 [shape = 'f32[200,512]{1,0:T(8,128)}', space=vmem, size = 0x64000, scoped, tag = 'scratch operand']
  %s0 = inlined_call_operand.vmem [shape: f32[2,4,256], index: 0, kind: input, shape index: {}]
  %s1 = inlined_call_operand.vmem [shape: f32[25,512], index: 1, kind: input, shape index: {}]
  %s2 = inlined_call_operand.vmem [shape: f32[24,8], index: 2, kind: input, shape index: {}]
  %s3 = inlined_call_operand.vmem [shape: f32[16,200], index: 3, kind: input, shape index: {}]
  %s4 = inlined_call_operand.vmem [shape: f32[24,1], index: 4, kind: input, shape index: {}]
  %s5 = inlined_call_operand.vmem [shape: f32[24,1], index: 5, kind: input, shape index: {}]
  %s6 = inlined_call_operand.vmem [shape: f32[16,1], index: 6, kind: input, shape index: {}]
  %s7 = inlined_call_operand.vmem [shape: f32[16,1], index: 7, kind: input, shape index: {}]
  %s8 = inlined_call_operand.vmem [shape: f32[2,32,256], index: 8, kind: output, shape index: {}]
  %s9 = sld [smem:[#allocation0]]
  $region42: #{inception_forward.1} parent=0
    _
  %s11 = ssub.s32 1, %s9
  %s12 = scalar_select 0, %s11, %s9
  // Predicated region
  $region2: #{inception_forward.1} parent=0 // pred_check
    _
  $region3: #{inception_forward.1} parent=0 // pred_check_branch
    %14 = sbr.rel (0) target = $region5
  $region4: #{inception_forward.1} parent=0 // pred_region
    _
  $region5: #{inception_forward.1} parent=0 // pred_fallthru
    _
  // Predicated region
  $region6: #{inception_forward.1} parent=0 // pred_check
    _
  $region7: #{inception_forward.1} parent=0 // pred_check_branch
    %16 = sbr.rel (0) target = $region9
  $region8: #{inception_forward.1} parent=0 // pred_region
    _
  $region9: #{inception_forward.1} parent=0 // pred_fallthru
    _
  // Predicated region
  $region10: #{inception_forward.1} parent=0 // pred_check
    _
  $region11: #{inception_forward.1} parent=0 // pred_check_branch
    %18 = sbr.rel (0) target = $region13
  $region12: #{inception_forward.1} parent=0 // pred_region
    _
  $region13: #{inception_forward.1} parent=0 // pred_fallthru
    _
  // Predicated region
  $region14: #{inception_forward.1} parent=0 // pred_check
    _
  $region15: #{inception_forward.1} parent=0 // pred_check_branch
    %20 = sbr.rel (0) target = $region17
  $region16: #{inception_forward.1} parent=0 // pred_region
    _
  $region17: #{inception_forward.1} parent=0 // pred_fallthru
    _
  // Predicated region
  $region18: #{inception_forward.1} parent=0 // pred_check
    _
  $region19: #{inception_forward.1} parent=0 // pred_check_branch
    %22 = sbr.rel (0) target = $region21
  $region20: #{inception_forward.1} parent=0 // pred_region
    _
  $region21: #{inception_forward.1} parent=0 // pred_fallthru
    _
  // Predicated region
  $region22: #{inception_forward.1} parent=0 // pred_check
    _
  $region23: #{inception_forward.1} parent=0 // pred_check_branch
    %24 = sbr.rel (0) target = $region25
  $region24: #{inception_forward.1} parent=0 // pred_region
    _
  $region25: #{inception_forward.1} parent=0 // pred_fallthru
    _
  // Predicated region
  $region26: #{inception_forward.1} parent=0 // pred_check
    _
  $region27: #{inception_forward.1} parent=0 // pred_check_branch
    %26 = sbr.rel (0) target = $region29
  $region28: #{inception_forward.1} parent=0 // pred_region
    _
  $region29: #{inception_forward.1} parent=0 // pred_fallthru
    _
  // Predicated region
  $region30: #{inception_forward.1} parent=0 // pred_check
    _
  $region31: #{inception_forward.1} parent=0 // pred_check_branch
    %28 = sbr.rel (0) target = $region33
  $region32: #{inception_forward.1} parent=0 // pred_region
    _
  $region33: #{inception_forward.1} parent=0 // pred_fallthru
    _
  %v29 = vld [vmem:[%s1] sm:$0xff]
  %v30 = vld [vmem:[%s1 + $0x8] sm:$0xff]
  %v31 = vld [vmem:[%s1 + $0x10] sm:$0xff]
  %v32 = vld [vmem:[%s1 + $0x18] sm:$0xff]
  %v33 = vld [vmem:[%s1 + $0x20] sm:$0xff]
  %v34 = vld [vmem:[%s1 + $0x28] sm:$0xff]
  %v35 = vld [vmem:[%s1 + $0x30] sm:$0xff]
  %v36 = vld [vmem:[%s1 + $0x38] sm:$0xff]
  %v37 = vld [vmem:[%s1 + $0x40] sm:$0xff]
  %v38 = vld [vmem:[%s1 + $0x48] sm:$0xff]
  %v39 = vld [vmem:[%s1 + $0x50] sm:$0xff]
  %v40 = vld [vmem:[%s1 + $0x58] sm:$0xff]
  %v41 = vld [vmem:[%s1 + $0x60] sm:$0x1]
  %v42 = vld [vmem:[%s1 + $0x68] sm:$0x1]
  %v43 = vld [vmem:[%s1 + $0x70] sm:$0x1]
  %v44 = vld [vmem:[%s1 + $0x78] sm:$0x1]
  %45 = vst [vmem:[#allocation2] sm:$0xff] 0.0
  %46 = vst [vmem:[#allocation2 + $0x8] sm:$0xff] 0.0
  %47 = vst [vmem:[#allocation2 + $0x10] sm:$0xff] 0.0
  %v48 = vld [vmem:[%s0] sm:$0xff]
  %49 = vst [vmem:[#allocation2 + $0x4] sm:$0xff] %v48
  %s50 = scalar_lea.vmem %s0, 8
  %v51 = vld [vmem:[%s50] sm:$0xff]
  %52 = vst [vmem:[#allocation2 + $0xc] sm:$0xff] %v51
  %v53 = vld [vmem:[#allocation2 + $0x4] sm:$0xff]
  %v54 = vld [vmem:[#allocation2 + $0xc] sm:$0xff]
  %vm55 = vcmp.gt.f32.partialorder %v29, 0.5
  %vm56 = vcmp.gt.f32.partialorder %v30, 0.5
  %vm57 = vcmp.gt.f32.partialorder %v31, 0.5
  %vm58 = vcmp.gt.f32.partialorder %v32, 0.5
  %v59 = vld [vmem:[#allocation2] sm:$0xff]
  %v60 = vld [vmem:[#allocation2 + $0x8] sm:$0xff]
  %v61 = vld [vmem:[#allocation2 + $0x10] sm:$0xf]
  %v62 = vsel %vm55, 1, 0
  %v63 = vsel %vm56, 1, 0
  %v64 = vsel %vm57, 1, 0
  %v65 = vsel %vm58, 1, 0
  %v66 = vlaneseq
  %v67 = vshrl.u32 %v66, 7
  %v68 = vsub.s32 6, %v67
  %v69 = vrot.slane %v62, %v68
  %v70 = vlaneseq
  %v71 = vshrl.u32 %v70, 7
  %v72 = vsub.s32 6, %v71
  %v73 = vrot.slane %v63, %v72
  %v74 = vlaneseq
  %v75 = vshrl.u32 %v74, 7
  %v76 = vsub.s32 6, %v75
  %v77 = vrot.slane %v64, %v76
  %v78 = vlaneseq
  %v79 = vshrl.u32 %v78, 7
  %v80 = vsub.s32 6, %v79
  %v81 = vrot.slane %v65, %v80
  %vm82 = vcmp.eq.s32.totalorder %v69, 1
  %vm83 = vcmp.eq.s32.totalorder %v73, 1
  %vm84 = vcmp.eq.s32.totalorder %v77, 1
  %vm85 = vcmp.eq.s32.totalorder %v81, 1
  %v89 = vcombine.high %v59, %v59
  %v90 = vcombine.high %v60, %v60
  %91 = vrot.lane.b32.xlu0 %v59, 17
  %v92 = vpop.permute.xlu0 %91
  %93 = vrot.lane.b32.xlu0 %v89, 17
  %v94 = vpop.permute.xlu0 %93
  %95 = vrot.lane.b32.xlu0 %v60, 17
  %v96 = vpop.permute.xlu0 %95
  %97 = vrot.lane.b32.xlu0 %v90, 17
  %v98 = vpop.permute.xlu0 %97
  %99 = vrot.lane.b32.xlu0 %v61, 17
  %v100 = vpop.permute.xlu0 %99
  %vm101 = vcmask 138240
  %v102 = vsel %vm101, %v92, %v94
  %v103 = vsel %vm101, %v94, %v96
  %v104 = vsel %vm101, %v96, %v98
  %v105 = vsel %vm101, %v98, %v100
  %v110 = vsel %vm82, %v102, -1e+30
  %v111 = vsel %vm83, %v103, -1e+30
  %v112 = vsel %vm84, %v104, -1e+30
  %v113 = vsel %vm85, %v105, -1e+30
  %v118 = vcombine.low %v110, %v111
  %v119 = vcombine.low %v112, %v113
  %v122 = vmax.f32 %v53, %v118
  %v123 = vmax.f32 %v54, %v119
  %v124 = vlaneseq
  %v125 = vshrl.u32 %v124, 7
  %v126 = vsub.s32 7, %v125
  %v127 = vrot.slane %v62, %v126
  %v128 = vlaneseq
  %v129 = vshrl.u32 %v128, 7
  %v130 = vsub.s32 7, %v129
  %v131 = vrot.slane %v63, %v130
  %v132 = vlaneseq
  %v133 = vshrl.u32 %v132, 7
  %v134 = vsub.s32 7, %v133
  %v135 = vrot.slane %v64, %v134
  %v136 = vlaneseq
  %v137 = vshrl.u32 %v136, 7
  %v138 = vsub.s32 7, %v137
  %v139 = vrot.slane %v65, %v138
  %vm140 = vcmp.eq.s32.totalorder %v127, 1
  %vm141 = vcmp.eq.s32.totalorder %v131, 1
  %vm142 = vcmp.eq.s32.totalorder %v135, 1
  %vm143 = vcmp.eq.s32.totalorder %v139, 1
  %144 = vrot.lane.b32.xlu0 %v59, 16
  %v145 = vpop.permute.xlu0 %144
  %146 = vrot.lane.b32.xlu0 %v89, 16
  %v147 = vpop.permute.xlu0 %146
  %148 = vrot.lane.b32.xlu0 %v60, 16
  %v149 = vpop.permute.xlu0 %148
  %150 = vrot.lane.b32.xlu0 %v90, 16
  %v151 = vpop.permute.xlu0 %150
  %152 = vrot.lane.b32.xlu0 %v61, 16
  %v153 = vpop.permute.xlu0 %152
  %vm154 = vcmask 130048
  %v155 = vsel %vm154, %v145, %v147
  %v156 = vsel %vm154, %v147, %v149
  %v157 = vsel %vm154, %v149, %v151
  %v158 = vsel %vm154, %v151, %v153
  %v163 = vsel %vm140, %v155, -1e+30
  %v164 = vsel %vm141, %v156, -1e+30
  %v165 = vsel %vm142, %v157, -1e+30
  %v166 = vsel %vm143, %v158, -1e+30
  %v171 = vcombine.low %v163, %v164
  %v172 = vcombine.low %v165, %v166
  %v175 = vmax.f32 %v122, %v171
  %v176 = vmax.f32 %v123, %v172
  %vm177 = vcmp.gt.f32.partialorder %v33, 0.5
  %vm178 = vcmp.gt.f32.partialorder %v34, 0.5
  %vm179 = vcmp.gt.f32.partialorder %v35, 0.5
  %vm180 = vcmp.gt.f32.partialorder %v36, 0.5
  %v181 = vsel %vm177, 1, 0
  %v182 = vsel %vm178, 1, 0
  %v183 = vsel %vm179, 1, 0
  %v184 = vsel %vm180, 1, 0
  %v185 = vlaneseq
  %v186 = vshrl.u32 %v185, 7
  %v187 = vsub.s32 0, %v186
  %v188 = vrot.slane %v181, %v187
  %v189 = vlaneseq
  %v190 = vshrl.u32 %v189, 7
  %v191 = vsub.s32 0, %v190
  %v192 = vrot.slane %v182, %v191
  %v193 = vlaneseq
  %v194 = vshrl.u32 %v193, 7
  %v195 = vsub.s32 0, %v194
  %v196 = vrot.slane %v183, %v195
  %v197 = vlaneseq
  %v198 = vshrl.u32 %v197, 7
  %v199 = vsub.s32 0, %v198
  %v200 = vrot.slane %v184, %v199
  %vm201 = vcmp.eq.s32.totalorder %v188, 1
  %vm202 = vcmp.eq.s32.totalorder %v192, 1
  %vm203 = vcmp.eq.s32.totalorder %v196, 1
  %vm204 = vcmp.eq.s32.totalorder %v200, 1
  %205 = vrot.lane.b32.xlu0 %v59, 15
  %v206 = vpop.permute.xlu0 %205
  %207 = vrot.lane.b32.xlu0 %v89, 15
  %v208 = vpop.permute.xlu0 %207
  %209 = vrot.lane.b32.xlu0 %v60, 15
  %v210 = vpop.permute.xlu0 %209
  %211 = vrot.lane.b32.xlu0 %v90, 15
  %v212 = vpop.permute.xlu0 %211
  %213 = vrot.lane.b32.xlu0 %v61, 15
  %v214 = vpop.permute.xlu0 %213
  %vm215 = vcmask 121856
  %v216 = vsel %vm215, %v206, %v208
  %v217 = vsel %vm215, %v208, %v210
  %v218 = vsel %vm215, %v210, %v212
  %v219 = vsel %vm215, %v212, %v214
  %v224 = vsel %vm201, %v216, -1e+30
  %v225 = vsel %vm202, %v217, -1e+30
  %v226 = vsel %vm203, %v218, -1e+30
  %v227 = vsel %vm204, %v219, -1e+30
  %v232 = vcombine.low %v224, %v225
  %v233 = vcombine.low %v226, %v227
  %v236 = vmax.f32 %v175, %v232
  %v237 = vmax.f32 %v176, %v233
  %v238 = vlaneseq
  %v239 = vshrl.u32 %v238, 7
  %v240 = vsub.s32 3, %v239
  %v241 = vrot.slane %v181, %v240
  %v242 = vlaneseq
  %v243 = vshrl.u32 %v242, 7
  %v244 = vsub.s32 3, %v243
  %v245 = vrot.slane %v182, %v244
  %v246 = vlaneseq
  %v247 = vshrl.u32 %v246, 7
  %v248 = vsub.s32 3, %v247
  %v249 = vrot.slane %v183, %v248
  %v250 = vlaneseq
  %v251 = vshrl.u32 %v250, 7
  %v252 = vsub.s32 3, %v251
  %v253 = vrot.slane %v184, %v252
  %vm254 = vcmp.eq.s32.totalorder %v241, 1
  %vm255 = vcmp.eq.s32.totalorder %v245, 1
  %vm256 = vcmp.eq.s32.totalorder %v249, 1
  %vm257 = vcmp.eq.s32.totalorder %v253, 1
  %258 = vrot.lane.b32.xlu0 %v59, 1
  %v259 = vpop.permute.xlu0 %258
  %260 = vrot.lane.b32.xlu0 %v89, 1
  %v261 = vpop.permute.xlu0 %260
  %262 = vrot.lane.b32.xlu0 %v60, 1
  %v263 = vpop.permute.xlu0 %262
  %264 = vrot.lane.b32.xlu0 %v90, 1
  %v265 = vpop.permute.xlu0 %264
  %266 = vrot.lane.b32.xlu0 %v61, 1
  %v267 = vpop.permute.xlu0 %266
  %vm268 = vcmask 7168
  %v269 = vsel %vm268, %v259, %v261
  %v270 = vsel %vm268, %v261, %v263
  %v271 = vsel %vm268, %v263, %v265
  %v272 = vsel %vm268, %v265, %v267
  %v277 = vsel %vm254, %v269, -1e+30
  %v278 = vsel %vm255, %v270, -1e+30
  %v279 = vsel %vm256, %v271, -1e+30
  %v280 = vsel %vm257, %v272, -1e+30
  %v285 = vcombine.low %v277, %v278
  %v286 = vcombine.low %v279, %v280
  %v289 = vmax.f32 %v236, %v285
  %v290 = vmax.f32 %v237, %v286
  %v291 = vld [vmem:[#allocation2 + $0x4] sm:$0xff]
  %v292 = vld [vmem:[#allocation2 + $0xc] sm:$0xff]
  %v293 = vld [vmem:[#allocation2 + $0x14] sm:$0xf]
  %v294 = vlaneseq
  %v295 = vshrl.u32 %v294, 7
  %v296 = vsub.s32 5, %v295
  %v297 = vrot.slane %v181, %v296
  %v298 = vlaneseq
  %v299 = vshrl.u32 %v298, 7
  %v300 = vsub.s32 5, %v299
  %v301 = vrot.slane %v182, %v300
  %v302 = vlaneseq
  %v303 = vshrl.u32 %v302, 7
  %v304 = vsub.s32 5, %v303
  %v305 = vrot.slane %v183, %v304
  %v306 = vlaneseq
  %v307 = vshrl.u32 %v306, 7
  %v308 = vsub.s32 5, %v307
  %v309 = vrot.slane %v184, %v308
  %vm310 = vcmp.eq.s32.totalorder %v297, 1
  %vm311 = vcmp.eq.s32.totalorder %v301, 1
  %vm312 = vcmp.eq.s32.totalorder %v305, 1
  %vm313 = vcmp.eq.s32.totalorder %v309, 1
  %v317 = vcombine.high %v291, %v291
  %v318 = vcombine.high %v292, %v292
  %319 = vrot.lane.b32.xlu0 %v291, 127
  %v320 = vpop.permute.xlu0 %319
  %321 = vrot.lane.b32.xlu0 %v317, 127
  %v322 = vpop.permute.xlu0 %321
  %323 = vrot.lane.b32.xlu0 %v292, 127
  %v324 = vpop.permute.xlu0 %323
  %325 = vrot.lane.b32.xlu0 %v318, 127
  %v326 = vpop.permute.xlu0 %325
  %327 = vrot.lane.b32.xlu0 %v293, 127
  %v328 = vpop.permute.xlu0 %327
  %vm329 = vcmask 1039360
  %v330 = vsel %vm329, %v320, %v322
  %v331 = vsel %vm329, %v322, %v324
  %v332 = vsel %vm329, %v324, %v326
  %v333 = vsel %vm329, %v326, %v328
  %v338 = vsel %vm310, %v330, -1e+30
  %v339 = vsel %vm311, %v331, -1e+30
  %v340 = vsel %vm312, %v332, -1e+30
  %v341 = vsel %vm313, %v333, -1e+30
  %v346 = vcombine.low %v338, %v339
  %v347 = vcombine.low %v340, %v341
  %v350 = vmax.f32 %v289, %v346
  %v351 = vmax.f32 %v290, %v347
  %vm352 = vcmp.gt.f32.partialorder %v37, 0.5
  %vm353 = vcmp.gt.f32.partialorder %v38, 0.5
  %vm354 = vcmp.gt.f32.partialorder %v39, 0.5
  %vm355 = vcmp.gt.f32.partialorder %v40, 0.5
  %v356 = vsel %vm352, 1, 0
  %v357 = vsel %vm353, 1, 0
  %v358 = vsel %vm354, 1, 0
  %v359 = vsel %vm355, 1, 0
  %v360 = vlaneseq
  %v361 = vshrl.u32 %v360, 7
  %v362 = vsub.s32 0, %v361
  %v363 = vrot.slane %v356, %v362
  %v364 = vlaneseq
  %v365 = vshrl.u32 %v364, 7
  %v366 = vsub.s32 0, %v365
  %v367 = vrot.slane %v357, %v366
  %v368 = vlaneseq
  %v369 = vshrl.u32 %v368, 7
  %v370 = vsub.s32 0, %v369
  %v371 = vrot.slane %v358, %v370
  %v372 = vlaneseq
  %v373 = vshrl.u32 %v372, 7
  %v374 = vsub.s32 0, %v373
  %v375 = vrot.slane %v359, %v374
  %vm376 = vcmp.eq.s32.totalorder %v363, 1
  %vm377 = vcmp.eq.s32.totalorder %v367, 1
  %vm378 = vcmp.eq.s32.totalorder %v371, 1
  %vm379 = vcmp.eq.s32.totalorder %v375, 1
  %380 = vrot.lane.b32.xlu0 %v291, 113
  %v381 = vpop.permute.xlu0 %380
  %382 = vrot.lane.b32.xlu0 %v317, 113
  %v383 = vpop.permute.xlu0 %382
  %384 = vrot.lane.b32.xlu0 %v292, 113
  %v385 = vpop.permute.xlu0 %384
  %386 = vrot.lane.b32.xlu0 %v318, 113
  %v387 = vpop.permute.xlu0 %386
  %388 = vrot.lane.b32.xlu0 %v293, 113
  %v389 = vpop.permute.xlu0 %388
  %vm390 = vcmask 924672
  %v391 = vsel %vm390, %v381, %v383
  %v392 = vsel %vm390, %v383, %v385
  %v393 = vsel %vm390, %v385, %v387
  %v394 = vsel %vm390, %v387, %v389
  %v399 = vsel %vm376, %v391, -1e+30
  %v400 = vsel %vm377, %v392, -1e+30
  %v401 = vsel %vm378, %v393, -1e+30
  %v402 = vsel %vm379, %v394, -1e+30
  %v407 = vcombine.low %v399, %v400
  %v408 = vcombine.low %v401, %v402
  %v411 = vmax.f32 %v350, %v407
  %v412 = vmax.f32 %v351, %v408
  %v413 = vlaneseq
  %v414 = vshrl.u32 %v413, 7
  %v415 = vsub.s32 1, %v414
  %v416 = vrot.slane %v356, %v415
  %v417 = vlaneseq
  %v418 = vshrl.u32 %v417, 7
  %v419 = vsub.s32 1, %v418
  %v420 = vrot.slane %v357, %v419
  %v421 = vlaneseq
  %v422 = vshrl.u32 %v421, 7
  %v423 = vsub.s32 1, %v422
  %v424 = vrot.slane %v358, %v423
  %v425 = vlaneseq
  %v426 = vshrl.u32 %v425, 7
  %v427 = vsub.s32 1, %v426
  %v428 = vrot.slane %v359, %v427
  %vm429 = vcmp.eq.s32.totalorder %v416, 1
  %vm430 = vcmp.eq.s32.totalorder %v420, 1
  %vm431 = vcmp.eq.s32.totalorder %v424, 1
  %vm432 = vcmp.eq.s32.totalorder %v428, 1
  %433 = vrot.lane.b32.xlu0 %v291, 112
  %v434 = vpop.permute.xlu0 %433
  %435 = vrot.lane.b32.xlu0 %v317, 112
  %v436 = vpop.permute.xlu0 %435
  %437 = vrot.lane.b32.xlu0 %v292, 112
  %v438 = vpop.permute.xlu0 %437
  %439 = vrot.lane.b32.xlu0 %v318, 112
  %v440 = vpop.permute.xlu0 %439
  %441 = vrot.lane.b32.xlu0 %v293, 112
  %v442 = vpop.permute.xlu0 %441
  %vm443 = vcmask 916480
  %v444 = vsel %vm443, %v434, %v436
  %v445 = vsel %vm443, %v436, %v438
  %v446 = vsel %vm443, %v438, %v440
  %v447 = vsel %vm443, %v440, %v442
  %v452 = vsel %vm429, %v444, -1e+30
  %v453 = vsel %vm430, %v445, -1e+30
  %v454 = vsel %vm431, %v446, -1e+30
  %v455 = vsel %vm432, %v447, -1e+30
  %v460 = vcombine.low %v452, %v453
  %v461 = vcombine.low %v454, %v455
  %v464 = vmax.f32 %v411, %v460
  %v465 = vmax.f32 %v412, %v461
  %v466 = vlaneseq
  %v467 = vshrl.u32 %v466, 7
  %v468 = vsub.s32 2, %v467
  %v469 = vrot.slane %v356, %v468
  %v470 = vlaneseq
  %v471 = vshrl.u32 %v470, 7
  %v472 = vsub.s32 2, %v471
  %v473 = vrot.slane %v357, %v472
  %v474 = vlaneseq
  %v475 = vshrl.u32 %v474, 7
  %v476 = vsub.s32 2, %v475
  %v477 = vrot.slane %v358, %v476
  %v478 = vlaneseq
  %v479 = vshrl.u32 %v478, 7
  %v480 = vsub.s32 2, %v479
  %v481 = vrot.slane %v359, %v480
  %vm482 = vcmp.eq.s32.totalorder %v469, 1
  %vm483 = vcmp.eq.s32.totalorder %v473, 1
  %vm484 = vcmp.eq.s32.totalorder %v477, 1
  %vm485 = vcmp.eq.s32.totalorder %v481, 1
  %486 = vrot.lane.b32.xlu0 %v291, 111
  %v487 = vpop.permute.xlu0 %486
  %488 = vrot.lane.b32.xlu0 %v317, 111
  %v489 = vpop.permute.xlu0 %488
  %490 = vrot.lane.b32.xlu0 %v292, 111
  %v491 = vpop.permute.xlu0 %490
  %492 = vrot.lane.b32.xlu0 %v318, 111
  %v493 = vpop.permute.xlu0 %492
  %494 = vrot.lane.b32.xlu0 %v293, 111
  %v495 = vpop.permute.xlu0 %494
  %vm496 = vcmask 908288
  %v497 = vsel %vm496, %v487, %v489
  %v498 = vsel %vm496, %v489, %v491
  %v499 = vsel %vm496, %v491, %v493
  %v500 = vsel %vm496, %v493, %v495
  %v505 = vsel %vm482, %v497, -1e+30
  %v506 = vsel %vm483, %v498, -1e+30
  %v507 = vsel %vm484, %v499, -1e+30
  %v508 = vsel %vm485, %v500, -1e+30
  %v513 = vcombine.low %v505, %v506
  %v514 = vcombine.low %v507, %v508
  %v517 = vmax.f32 %v464, %v513
  %v518 = vmax.f32 %v465, %v514
  %v521 = vcombine.high %v53, %v53
  %v522 = vcombine.high %v54, %v54
  %525 = vst [vmem:[#allocation3] sm:$0xf] %v53
  %526 = vst [vmem:[#allocation3 + $0x8] sm:$0xf] %v521
  %527 = vst [vmem:[#allocation3 + $0x10] sm:$0xf] %v54
  %528 = vst [vmem:[#allocation3 + $0x18] sm:$0xf] %v522
  %v531 = vcombine.low %v517, %v517
  %v532 = vcombine.low %v518, %v518
  %535 = vst [vmem:[#allocation3] sm:$0xf0] %v531
  %536 = vst [vmem:[#allocation3 + $0x8] sm:$0xf0] %v517
  %537 = vst [vmem:[#allocation3 + $0x10] sm:$0xf0] %v532
  %538 = vst [vmem:[#allocation3 + $0x18] sm:$0xf0] %v518
  %v539 = vld [vmem:[%s2] sm:$0xff]
  %v540 = vld [vmem:[%s2 + $0x8] sm:$0xff]
  %v541 = vld [vmem:[%s2 + $0x10] sm:$0xff]
  %v542 = vld [vmem:[#allocation3] sm:$0xff]
  %v543 = vld [vmem:[#allocation3 + $0x8] sm:$0xff]
  %v544 = vld [vmem:[#allocation3 + $0x10] sm:$0xff]
  %v545 = vld [vmem:[#allocation3 + $0x18] sm:$0xff]
  %vm546 = vcmask 64512
  %v548 = vsel %vm546, %v539, 0
  %v551 = vsel %vm546, %v540, 0
  %v554 = vsel %vm546, %v541, 0
  %556 = vmatprep.subr.mxu0 0.0
  %557 = vmatpush1.msra.mxu0 0.0
  %558 = vmatprep.subr.mxu0 0.0
  %559 = vmatpush1.msra.mxu0 0.0
  %560 = vmatprep.subr.mxu0 0.0
  %561 = vmatpush1.msra.mxu0 0.0
  %562 = vmatprep.subr.mxu0 0.0
  %563 = vmatpush1.msra.mxu0 0.0
  %564 = vmatprep.subr.mxu0 0.0
  %565 = vmatpush1.msra.mxu0 0.0
  %566 = vmatprep.subr.mxu0 0.0
  %567 = vmatpush1.msra.mxu0 0.0
  %568 = vmatprep.subr.mxu0 0.0
  %569 = vmatpush1.msra.mxu0 0.0
  %570 = vmatprep.subr.mxu0 0.0
  %571 = vmatpush1.msra.mxu0 0.0
  %572 = vmatprep.subr.mxu0 0.0
  %573 = vmatpush1.msra.mxu0 0.0
  %574 = vmatprep.subr.mxu0 0.0
  %575 = vmatpush1.msra.mxu0 0.0
  %576 = vmatprep.subr.mxu0 0.0
  %577 = vmatpush1.msra.mxu0 0.0
  %578 = vmatprep.subr.mxu0 0.0
  %579 = vmatpush1.msra.mxu0 0.0
  %580 = vmatprep.subr.mxu0 0.0
  %581 = vmatpush1.msra.mxu0 0.0
  %582 = vmatprep.subr.mxu0 0.0
  %583 = vmatpush1.msra.mxu0 0.0
  %584 = vmatprep.subr.mxu0 0.0
  %585 = vmatpush1.msra.mxu0 0.0
  %586 = vmatprep.subr.mxu0 %v543
  %587 = vmatpush1.msra.mxu0 %v542
  %588 = vmatprep.subr.mxu0 0.0
  %589 = vmatpush2.msra.mxu0 0.0
  %590 = vmatprep.subr.mxu0 0.0
  %591 = vmatpush2.msra.mxu0 0.0
  %592 = vmatprep.subr.mxu0 0.0
  %593 = vmatpush2.msra.mxu0 0.0
  %594 = vmatprep.subr.mxu0 0.0
  %595 = vmatpush2.msra.mxu0 0.0
  %596 = vmatprep.subr.mxu0 0.0
  %597 = vmatpush2.msra.mxu0 0.0
  %598 = vmatprep.subr.mxu0 0.0
  %599 = vmatpush2.msra.mxu0 0.0
  %600 = vmatprep.subr.mxu0 0.0
  %601 = vmatpush2.msra.mxu0 0.0
  %602 = vmatprep.subr.mxu0 0.0
  %603 = vmatpush2.msra.mxu0 0.0
  %604 = vmatprep.subr.mxu0 0.0
  %605 = vmatpush2.msra.mxu0 0.0
  %606 = vmatprep.subr.mxu0 0.0
  %607 = vmatpush2.msra.mxu0 0.0
  %608 = vmatprep.subr.mxu0 0.0
  %609 = vmatpush2.msra.mxu0 0.0
  %610 = vmatprep.subr.mxu0 0.0
  %611 = vmatpush2.msra.mxu0 0.0
  %612 = vmatprep.subr.mxu0 0.0
  %613 = vmatpush2.msra.mxu0 0.0
  %614 = vmatprep.subr.mxu0 0.0
  %615 = vmatpush2.msra.mxu0 0.0
  %616 = vmatprep.subr.mxu0 0.0
  %617 = vmatpush2.msra.mxu0 0.0
  %618 = vmatprep.subr.mxu0 0.0
  %619 = vmatpush2.msra.mxu0 0.0
  %620 = vmatprep.mubr.f32.mxu0 0.0
  %621 = vmatmul.mubr.f32.gmra.mxu0 %v548
  %v622 = vpop.f32.mrf.mxu0
  %v623 = vadd.f32 0.0, %v622
  %v624 = vpop.f32.mrf.mxu0
  %v625 = vadd.f32 0.0, %v624
  %626 = vmatprep.mubr.f32.mxu0 0.0
  %627 = vmatmul.mubr.f32.gmra.mxu0 %v551
  %v628 = vpop.f32.mrf.mxu0
  %v629 = vadd.f32 0.0, %v628
  %v630 = vpop.f32.mrf.mxu0
  %v631 = vadd.f32 0.0, %v630
  %632 = vmatprep.mubr.f32.mxu0 0.0
  %633 = vmatmul.mubr.f32.gmra.mxu0 %v554
  %v634 = vpop.f32.mrf.mxu0
  %v635 = vadd.f32 0.0, %v634
  %v636 = vpop.f32.mrf.mxu0
  %v637 = vadd.f32 0.0, %v636
  %638 = vdwg.mxu0
  %639 = vmatprep.subr.mxu0 0.0
  %640 = vmatpush1.msra.mxu0 0.0
  %641 = vmatprep.subr.mxu0 0.0
  %642 = vmatpush1.msra.mxu0 0.0
  %643 = vmatprep.subr.mxu0 0.0
  %644 = vmatpush1.msra.mxu0 0.0
  %645 = vmatprep.subr.mxu0 0.0
  %646 = vmatpush1.msra.mxu0 0.0
  %647 = vmatprep.subr.mxu0 0.0
  %648 = vmatpush1.msra.mxu0 0.0
  %649 = vmatprep.subr.mxu0 0.0
  %650 = vmatpush1.msra.mxu0 0.0
  %651 = vmatprep.subr.mxu0 0.0
  %652 = vmatpush1.msra.mxu0 0.0
  %653 = vmatprep.subr.mxu0 0.0
  %654 = vmatpush1.msra.mxu0 0.0
  %655 = vmatprep.subr.mxu0 0.0
  %656 = vmatpush1.msra.mxu0 0.0
  %657 = vmatprep.subr.mxu0 0.0
  %658 = vmatpush1.msra.mxu0 0.0
  %659 = vmatprep.subr.mxu0 0.0
  %660 = vmatpush1.msra.mxu0 0.0
  %661 = vmatprep.subr.mxu0 0.0
  %662 = vmatpush1.msra.mxu0 0.0
  %663 = vmatprep.subr.mxu0 0.0
  %664 = vmatpush1.msra.mxu0 0.0
  %665 = vmatprep.subr.mxu0 0.0
  %666 = vmatpush1.msra.mxu0 0.0
  %667 = vmatprep.subr.mxu0 0.0
  %668 = vmatpush1.msra.mxu0 0.0
  %669 = vmatprep.subr.mxu0 %v545
  %670 = vmatpush1.msra.mxu0 %v544
  %671 = vmatprep.subr.mxu0 0.0
  %672 = vmatpush2.msra.mxu0 0.0
  %673 = vmatprep.subr.mxu0 0.0
  %674 = vmatpush2.msra.mxu0 0.0
  %675 = vmatprep.subr.mxu0 0.0
  %676 = vmatpush2.msra.mxu0 0.0
  %677 = vmatprep.subr.mxu0 0.0
  %678 = vmatpush2.msra.mxu0 0.0
  %679 = vmatprep.subr.mxu0 0.0
  %680 = vmatpush2.msra.mxu0 0.0
  %681 = vmatprep.subr.mxu0 0.0
  %682 = vmatpush2.msra.mxu0 0.0
  %683 = vmatprep.subr.mxu0 0.0
  %684 = vmatpush2.msra.mxu0 0.0
  %685 = vmatprep.subr.mxu0 0.0
  %686 = vmatpush2.msra.mxu0 0.0
  %687 = vmatprep.subr.mxu0 0.0
  %688 = vmatpush2.msra.mxu0 0.0
  %689 = vmatprep.subr.mxu0 0.0
  %690 = vmatpush2.msra.mxu0 0.0
  %691 = vmatprep.subr.mxu0 0.0
  %692 = vmatpush2.msra.mxu0 0.0
  %693 = vmatprep.subr.mxu0 0.0
  %694 = vmatpush2.msra.mxu0 0.0
  %695 = vmatprep.subr.mxu0 0.0
  %696 = vmatpush2.msra.mxu0 0.0
  %697 = vmatprep.subr.mxu0 0.0
  %698 = vmatpush2.msra.mxu0 0.0
  %699 = vmatprep.subr.mxu0 0.0
  %700 = vmatpush2.msra.mxu0 0.0
  %701 = vmatprep.subr.mxu0 0.0
  %702 = vmatpush2.msra.mxu0 0.0
  %703 = vmatprep.mubr.f32.mxu0 0.0
  %704 = vmatmul.mubr.f32.gmra.mxu0 %v548
  %v705 = vpop.f32.mrf.mxu0
  %v706 = vadd.f32 0.0, %v705
  %v707 = vpop.f32.mrf.mxu0
  %v708 = vadd.f32 0.0, %v707
  %709 = vmatprep.mubr.f32.mxu0 0.0
  %710 = vmatmul.mubr.f32.gmra.mxu0 %v551
  %v711 = vpop.f32.mrf.mxu0
  %v712 = vadd.f32 0.0, %v711
  %v713 = vpop.f32.mrf.mxu0
  %v714 = vadd.f32 0.0, %v713
  %715 = vmatprep.mubr.f32.mxu0 0.0
  %716 = vmatmul.mubr.f32.gmra.mxu0 %v554
  %v717 = vpop.f32.mrf.mxu0
  %v718 = vadd.f32 0.0, %v717
  %v719 = vpop.f32.mrf.mxu0
  %v720 = vadd.f32 0.0, %v719
  %721 = vdwg.mxu0
  %v722 = vld [vmem:[%s4] sm:$0xff]
  %v723 = vld [vmem:[%s4 + $0x8] sm:$0xff]
  %v724 = vld [vmem:[%s4 + $0x10] sm:$0xff]
  %v725 = vld [vmem:[%s5] sm:$0xff]
  %v726 = vld [vmem:[%s5 + $0x8] sm:$0xff]
  %v727 = vld [vmem:[%s5 + $0x10] sm:$0xff]
  %v728 = vadd.f32 %v623, %v625
  %v729 = vadd.f32 %v728, %v706
  %v730 = vadd.f32 %v729, %v708
  %731 = vadd.xlane.f32.xlu0 %v730
  %v732 = vpop.xlane.xlu0 %731
  %v733 = vadd.f32 %v629, %v631
  %v734 = vadd.f32 %v733, %v712
  %v735 = vadd.f32 %v734, %v714
  %736 = vadd.xlane.f32.xlu0 %v735
  %v737 = vpop.xlane.xlu0 %736
  %v738 = vadd.f32 %v635, %v637
  %v739 = vadd.f32 %v738, %v718
  %v740 = vadd.f32 %v739, %v720
  %741 = vadd.xlane.f32.xlu0 %v740
  %v742 = vpop.xlane.xlu0 %741
  %v743 = vrcp.pop 512.0
  %v744 = vmul.f32 %v732, %v743
  %v745 = vmul.f32 %v737, %v743
  %v746 = vmul.f32 %v742, %v743
  %v747 = vsub.f32 %v623, %v744
  %v748 = vsub.f32 %v625, %v744
  %v749 = vsub.f32 %v706, %v744
  %v750 = vsub.f32 %v708, %v744
  %v751 = vsub.f32 %v629, %v745
  %v752 = vsub.f32 %v631, %v745
  %v753 = vsub.f32 %v712, %v745
  %v754 = vsub.f32 %v714, %v745
  %v755 = vsub.f32 %v635, %v746
  %v756 = vsub.f32 %v637, %v746
  %v757 = vsub.f32 %v718, %v746
  %v758 = vsub.f32 %v720, %v746
  %v759 = vmul.f32 %v747, %v747
  %v760 = vmul.f32 %v748, %v748
  %v761 = vmul.f32 %v749, %v749
  %v762 = vmul.f32 %v750, %v750
  %v763 = vmul.f32 %v751, %v751
  %v764 = vmul.f32 %v752, %v752
  %v765 = vmul.f32 %v753, %v753
  %v766 = vmul.f32 %v754, %v754
  %v767 = vmul.f32 %v755, %v755
  %v768 = vmul.f32 %v756, %v756
  %v769 = vmul.f32 %v757, %v757
  %v770 = vmul.f32 %v758, %v758
  %v771 = vadd.f32 %v759, %v760
  %v772 = vadd.f32 %v771, %v761
  %v773 = vadd.f32 %v772, %v762
  %774 = vadd.xlane.f32.xlu0 %v773
  %v775 = vpop.xlane.xlu0 %774
  %v776 = vadd.f32 %v763, %v764
  %v777 = vadd.f32 %v776, %v765
  %v778 = vadd.f32 %v777, %v766
  %779 = vadd.xlane.f32.xlu0 %v778
  %v780 = vpop.xlane.xlu0 %779
  %v781 = vadd.f32 %v767, %v768
  %v782 = vadd.f32 %v781, %v769
  %v783 = vadd.f32 %v782, %v770
  %784 = vadd.xlane.f32.xlu0 %v783
  %v785 = vpop.xlane.xlu0 %784
  %v786 = vmul.f32 %v775, %v743
  %v787 = vmul.f32 %v780, %v743
  %v788 = vmul.f32 %v785, %v743
  %v789 = vadd.f32 %v786, 1e-05
  %v790 = vadd.f32 %v787, 1e-05
  %v791 = vadd.f32 %v788, 1e-05
  %v792 = vrsqrt.pop %v789
  %v793 = vrsqrt.pop %v790
  %v794 = vrsqrt.pop %v791
  %v795 = vmul.f32 %v722, %v792
  %v796 = vmul.f32 %v723, %v793
  %v797 = vmul.f32 %v724, %v794
  %799 = vset.pattern.permute.xlu0 0
  %800 = vperm.xlu0 %799, %v795
  %v801 = vpop.permute.xlu0 %800
  %804 = vset.pattern.permute.xlu0 0
  %805 = vperm.xlu0 %804, %v796
  %v806 = vpop.permute.xlu0 %805
  %809 = vset.pattern.permute.xlu0 0
  %810 = vperm.xlu0 %809, %v797
  %v811 = vpop.permute.xlu0 %810
  %v813 = vmul.f32 %v747, %v801
  %v814 = vmul.f32 %v748, %v801
  %v815 = vmul.f32 %v749, %v801
  %v816 = vmul.f32 %v750, %v801
  %v817 = vmul.f32 %v751, %v806
  %v818 = vmul.f32 %v752, %v806
  %v819 = vmul.f32 %v753, %v806
  %v820 = vmul.f32 %v754, %v806
  %v821 = vmul.f32 %v755, %v811
  %v822 = vmul.f32 %v756, %v811
  %v823 = vmul.f32 %v757, %v811
  %v824 = vmul.f32 %v758, %v811
  %826 = vset.pattern.permute.xlu0 0
  %827 = vperm.xlu0 %826, %v725
  %v828 = vpop.permute.xlu0 %827
  %831 = vset.pattern.permute.xlu0 0
  %832 = vperm.xlu0 %831, %v726
  %v833 = vpop.permute.xlu0 %832
  %836 = vset.pattern.permute.xlu0 0
  %837 = vperm.xlu0 %836, %v727
  %v838 = vpop.permute.xlu0 %837
  %v840 = vadd.f32 %v813, %v828
  %v841 = vadd.f32 %v814, %v828
  %v842 = vadd.f32 %v815, %v828
  %v843 = vadd.f32 %v816, %v828
  %v844 = vadd.f32 %v817, %v833
  %v845 = vadd.f32 %v818, %v833
  %v846 = vadd.f32 %v819, %v833
  %v847 = vadd.f32 %v820, %v833
  %v848 = vadd.f32 %v821, %v838
  %v849 = vadd.f32 %v822, %v838
  %v850 = vadd.f32 %v823, %v838
  %v851 = vadd.f32 %v824, %v838
  %v852 = vmax.f32 %v840, 0.0
  %v853 = vmax.f32 %v841, 0.0
  %v854 = vmax.f32 %v842, 0.0
  %v855 = vmax.f32 %v843, 0.0
  %v856 = vmax.f32 %v844, 0.0
  %v857 = vmax.f32 %v845, 0.0
  %v858 = vmax.f32 %v846, 0.0
  %v859 = vmax.f32 %v847, 0.0
  %v860 = vmax.f32 %v848, 0.0
  %v861 = vmax.f32 %v849, 0.0
  %v862 = vmax.f32 %v850, 0.0
  %v863 = vmax.f32 %v851, 0.0
  %864 = vst [vmem:[#allocation4] sm:$0xff] 0.0
  %865 = vst [vmem:[#allocation4 + $0x8] sm:$0xff] 0.0
  %866 = vst [vmem:[#allocation4 + $0x10] sm:$0xff] 0.0
  %867 = vst [vmem:[#allocation4 + $0x18] sm:$0xff] 0.0
  %868 = vst [vmem:[#allocation4 + $0x20] sm:$0xff] 0.0
  %869 = vst [vmem:[#allocation4 + $0x28] sm:$0xff] 0.0
  %870 = vst [vmem:[#allocation4 + $0x8] sm:$0xff] %v856
  %871 = vst [vmem:[#allocation4 + $0x10] sm:$0xff] %v857
  %872 = vst [vmem:[#allocation4 + $0x18] sm:$0xff] %v858
  %873 = vst [vmem:[#allocation4 + $0x20] sm:$0xff] %v859
  %v874 = vld [vmem:[#allocation4] sm:$0xff]
  %v875 = vld [vmem:[#allocation4 + $0x8] sm:$0xff]
  %v876 = vld [vmem:[#allocation4 + $0x10] sm:$0xff]
  %v877 = vld [vmem:[#allocation4 + $0x18] sm:$0xff]
  %v878 = vld [vmem:[#allocation4 + $0x20] sm:$0xff]
  %v879 = vlaneseq
  %v880 = vshrl.u32 %v879, 7
  %v881 = vsub.s32 0, %v880
  %v882 = vrot.slane %v29, %v881
  %v883 = vlaneseq
  %v884 = vshrl.u32 %v883, 7
  %v885 = vsub.s32 0, %v884
  %v886 = vrot.slane %v30, %v885
  %v887 = vlaneseq
  %v888 = vshrl.u32 %v887, 7
  %v889 = vsub.s32 0, %v888
  %v890 = vrot.slane %v31, %v889
  %v891 = vlaneseq
  %v892 = vshrl.u32 %v891, 7
  %v893 = vsub.s32 0, %v892
  %v894 = vrot.slane %v32, %v893
  %899 = vrot.lane.b32.xlu0 %v882, 94
  %v900 = vpop.permute.xlu0 %899
  %901 = vrot.lane.b32.xlu0 %v886, 94
  %v902 = vpop.permute.xlu0 %901
  %903 = vrot.lane.b32.xlu0 %v890, 94
  %v904 = vpop.permute.xlu0 %903
  %905 = vrot.lane.b32.xlu0 %v894, 94
  %v906 = vpop.permute.xlu0 %905
  %vm907 = vcmask 769024
  %v908 = vsel %vm907, %v900, %v902
  %v909 = vsel %vm907, %v902, %v904
  %v910 = vsel %vm907, %v904, %v906
  %v916 = vmul.f32 %v874, %v900
  %v917 = vmul.f32 %v875, %v908
  %v918 = vmul.f32 %v876, %v909
  %v919 = vmul.f32 %v877, %v910
  %v920 = vmul.f32 %v878, %v906
  %926 = vrot.lane.b32.xlu0 %v916, 34
  %v927 = vpop.permute.xlu0 %926
  %928 = vrot.lane.b32.xlu0 %v917, 34
  %v929 = vpop.permute.xlu0 %928
  %930 = vrot.lane.b32.xlu0 %v918, 34
  %v931 = vpop.permute.xlu0 %930
  %932 = vrot.lane.b32.xlu0 %v919, 34
  %v933 = vpop.permute.xlu0 %932
  %934 = vrot.lane.b32.xlu0 %v920, 34
  %v935 = vpop.permute.xlu0 %934
  %vm936 = vcmask 277504
  %v937 = vsel %vm936, %v927, %v929
  %v938 = vsel %vm936, %v929, %v931
  %v939 = vsel %vm936, %v931, %v933
  %v940 = vsel %vm936, %v933, %v935
  %945 = vst [vmem:[#allocation5] sm:$0xff] %v937
  %946 = vst [vmem:[#allocation5 + $0x8] sm:$0xff] %v938
  %947 = vst [vmem:[#allocation5 + $0x10] sm:$0xff] %v939
  %948 = vst [vmem:[#allocation5 + $0x18] sm:$0xff] %v940
  %v949 = vld [vmem:[#allocation4] sm:$0xff]
  %v950 = vld [vmem:[#allocation4 + $0x8] sm:$0xff]
  %v951 = vld [vmem:[#allocation4 + $0x10] sm:$0xff]
  %v952 = vld [vmem:[#allocation4 + $0x18] sm:$0xff]
  %v953 = vld [vmem:[#allocation4 + $0x20] sm:$0xff]
  %v954 = vlaneseq
  %v955 = vshrl.u32 %v954, 7
  %v956 = vsub.s32 1, %v955
  %v957 = vrot.slane %v29, %v956
  %v958 = vlaneseq
  %v959 = vshrl.u32 %v958, 7
  %v960 = vsub.s32 1, %v959
  %v961 = vrot.slane %v30, %v960
  %v962 = vlaneseq
  %v963 = vshrl.u32 %v962, 7
  %v964 = vsub.s32 1, %v963
  %v965 = vrot.slane %v31, %v964
  %v966 = vlaneseq
  %v967 = vshrl.u32 %v966, 7
  %v968 = vsub.s32 1, %v967
  %v969 = vrot.slane %v32, %v968
  %974 = vrot.lane.b32.xlu0 %v957, 95
  %v975 = vpop.permute.xlu0 %974
  %976 = vrot.lane.b32.xlu0 %v961, 95
  %v977 = vpop.permute.xlu0 %976
  %978 = vrot.lane.b32.xlu0 %v965, 95
  %v979 = vpop.permute.xlu0 %978
  %980 = vrot.lane.b32.xlu0 %v969, 95
  %v981 = vpop.permute.xlu0 %980
  %vm982 = vcmask 777216
  %v983 = vsel %vm982, %v975, %v977
  %v984 = vsel %vm982, %v977, %v979
  %v985 = vsel %vm982, %v979, %v981
  %v991 = vmul.f32 %v949, %v975
  %v992 = vmul.f32 %v950, %v983
  %v993 = vmul.f32 %v951, %v984
  %v994 = vmul.f32 %v952, %v985
  %v995 = vmul.f32 %v953, %v981
  %1001 = vrot.lane.b32.xlu0 %v991, 33
  %v1002 = vpop.permute.xlu0 %1001
  %1003 = vrot.lane.b32.xlu0 %v992, 33
  %v1004 = vpop.permute.xlu0 %1003
  %1005 = vrot.lane.b32.xlu0 %v993, 33
  %v1006 = vpop.permute.xlu0 %1005
  %1007 = vrot.lane.b32.xlu0 %v994, 33
  %v1008 = vpop.permute.xlu0 %1007
  %1009 = vrot.lane.b32.xlu0 %v995, 33
  %v1010 = vpop.permute.xlu0 %1009
  %vm1011 = vcmask 269312
  %v1012 = vsel %vm1011, %v1002, %v1004
  %v1013 = vsel %vm1011, %v1004, %v1006
  %v1014 = vsel %vm1011, %v1006, %v1008
  %v1015 = vsel %vm1011, %v1008, %v1010
  %1020 = vst [vmem:[#allocation5 + $0x20] sm:$0xff] %v1012
  %1021 = vst [vmem:[#allocation5 + $0x28] sm:$0xff] %v1013
  %1022 = vst [vmem:[#allocation5 + $0x30] sm:$0xff] %v1014
  %1023 = vst [vmem:[#allocation5 + $0x38] sm:$0xff] %v1015
  %v1024 = vld [vmem:[#allocation4] sm:$0xff]
  %v1025 = vld [vmem:[#allocation4 + $0x8] sm:$0xff]
  %v1026 = vld [vmem:[#allocation4 + $0x10] sm:$0xff]
  %v1027 = vld [vmem:[#allocation4 + $0x18] sm:$0xff]
  %v1028 = vld [vmem:[#allocation4 + $0x20] sm:$0xff]
  %v1029 = vlaneseq
  %v1030 = vshrl.u32 %v1029, 7
  %v1031 = vsub.s32 2, %v1030
  %v1032 = vrot.slane %v29, %v1031
  %v1033 = vlaneseq
  %v1034 = vshrl.u32 %v1033, 7
  %v1035 = vsub.s32 2, %v1034
  %v1036 = vrot.slane %v30, %v1035
  %v1037 = vlaneseq
  %v1038 = vshrl.u32 %v1037, 7
  %v1039 = vsub.s32 2, %v1038
  %v1040 = vrot.slane %v31, %v1039
  %v1041 = vlaneseq
  %v1042 = vshrl.u32 %v1041, 7
  %v1043 = vsub.s32 2, %v1042
  %v1044 = vrot.slane %v32, %v1043
  %1049 = vrot.lane.b32.xlu0 %v1032, 96
  %v1050 = vpop.permute.xlu0 %1049
  %1051 = vrot.lane.b32.xlu0 %v1036, 96
  %v1052 = vpop.permute.xlu0 %1051
  %1053 = vrot.lane.b32.xlu0 %v1040, 96
  %v1054 = vpop.permute.xlu0 %1053
  %1055 = vrot.lane.b32.xlu0 %v1044, 96
  %v1056 = vpop.permute.xlu0 %1055
  %vm1057 = vcmask 785408
  %v1058 = vsel %vm1057, %v1050, %v1052
  %v1059 = vsel %vm1057, %v1052, %v1054
  %v1060 = vsel %vm1057, %v1054, %v1056
  %v1066 = vmul.f32 %v1024, %v1050
  %v1067 = vmul.f32 %v1025, %v1058
  %v1068 = vmul.f32 %v1026, %v1059
  %v1069 = vmul.f32 %v1027, %v1060
  %v1070 = vmul.f32 %v1028, %v1056
  %1076 = vrot.lane.b32.xlu0 %v1066, 32
  %v1077 = vpop.permute.xlu0 %1076
  %1078 = vrot.lane.b32.xlu0 %v1067, 32
  %v1079 = vpop.permute.xlu0 %1078
  %1080 = vrot.lane.b32.xlu0 %v1068, 32
  %v1081 = vpop.permute.xlu0 %1080
  %1082 = vrot.lane.b32.xlu0 %v1069, 32
  %v1083 = vpop.permute.xlu0 %1082
  %1084 = vrot.lane.b32.xlu0 %v1070, 32
  %v1085 = vpop.permute.xlu0 %1084
  %vm1086 = vcmask 261120
  %v1087 = vsel %vm1086, %v1077, %v1079
  %v1088 = vsel %vm1086, %v1079, %v1081
  %v1089 = vsel %vm1086, %v1081, %v1083
  %v1090 = vsel %vm1086, %v1083, %v1085
  %1095 = vst [vmem:[#allocation5 + $0x40] sm:$0xff] %v1087
  %1096 = vst [vmem:[#allocation5 + $0x48] sm:$0xff] %v1088
  %1097 = vst [vmem:[#allocation5 + $0x50] sm:$0xff] %v1089
  %1098 = vst [vmem:[#allocation5 + $0x58] sm:$0xff] %v1090
  %v1099 = vld [vmem:[#allocation4] sm:$0xff]
  %v1100 = vld [vmem:[#allocation4 + $0x8] sm:$0xff]
  %v1101 = vld [vmem:[#allocation4 + $0x10] sm:$0xff]
  %v1102 = vld [vmem:[#allocation4 + $0x18] sm:$0xff]
  %v1103 = vld [vmem:[#allocation4 + $0x20] sm:$0xff]
  %v1104 = vlaneseq
  %v1105 = vshrl.u32 %v1104, 7
  %v1106 = vsub.s32 3, %v1105
  %v1107 = vrot.slane %v29, %v1106
  %v1108 = vlaneseq
  %v1109 = vshrl.u32 %v1108, 7
  %v1110 = vsub.s32 3, %v1109
  %v1111 = vrot.slane %v30, %v1110
  %v1112 = vlaneseq
  %v1113 = vshrl.u32 %v1112, 7
  %v1114 = vsub.s32 3, %v1113
  %v1115 = vrot.slane %v31, %v1114
  %v1116 = vlaneseq
  %v1117 = vshrl.u32 %v1116, 7
  %v1118 = vsub.s32 3, %v1117
  %v1119 = vrot.slane %v32, %v1118
  %1124 = vrot.lane.b32.xlu0 %v1107, 97
  %v1125 = vpop.permute.xlu0 %1124
  %1126 = vrot.lane.b32.xlu0 %v1111, 97
  %v1127 = vpop.permute.xlu0 %1126
  %1128 = vrot.lane.b32.xlu0 %v1115, 97
  %v1129 = vpop.permute.xlu0 %1128
  %1130 = vrot.lane.b32.xlu0 %v1119, 97
  %v1131 = vpop.permute.xlu0 %1130
  %vm1132 = vcmask 793600
  %v1133 = vsel %vm1132, %v1125, %v1127
  %v1134 = vsel %vm1132, %v1127, %v1129
  %v1135 = vsel %vm1132, %v1129, %v1131
  %v1141 = vmul.f32 %v1099, %v1125
  %v1142 = vmul.f32 %v1100, %v1133
  %v1143 = vmul.f32 %v1101, %v1134
  %v1144 = vmul.f32 %v1102, %v1135
  %v1145 = vmul.f32 %v1103, %v1131
  %1151 = vrot.lane.b32.xlu0 %v1141, 31
  %v1152 = vpop.permute.xlu0 %1151
  %1153 = vrot.lane.b32.xlu0 %v1142, 31
  %v1154 = vpop.permute.xlu0 %1153
  %1155 = vrot.lane.b32.xlu0 %v1143, 31
  %v1156 = vpop.permute.xlu0 %1155
  %1157 = vrot.lane.b32.xlu0 %v1144, 31
  %v1158 = vpop.permute.xlu0 %1157
  %1159 = vrot.lane.b32.xlu0 %v1145, 31
  %v1160 = vpop.permute.xlu0 %1159
  %vm1161 = vcmask 252928
  %v1162 = vsel %vm1161, %v1152, %v1154
  %v1163 = vsel %vm1161, %v1154, %v1156
  %v1164 = vsel %vm1161, %v1156, %v1158
  %v1165 = vsel %vm1161, %v1158, %v1160
  %1170 = vst [vmem:[#allocation5 + $0x60] sm:$0xff] %v1162
  %1171 = vst [vmem:[#allocation5 + $0x68] sm:$0xff] %v1163
  %1172 = vst [vmem:[#allocation5 + $0x70] sm:$0xff] %v1164
  %1173 = vst [vmem:[#allocation5 + $0x78] sm:$0xff] %v1165
  %v1174 = vld [vmem:[#allocation4] sm:$0xff]
  %v1175 = vld [vmem:[#allocation4 + $0x8] sm:$0xff]
  %v1176 = vld [vmem:[#allocation4 + $0x10] sm:$0xff]
  %v1177 = vld [vmem:[#allocation4 + $0x18] sm:$0xff]
  %v1178 = vld [vmem:[#allocation4 + $0x20] sm:$0xff]
  %v1179 = vlaneseq
  %v1180 = vshrl.u32 %v1179, 7
  %v1181 = vsub.s32 4, %v1180
  %v1182 = vrot.slane %v29, %v1181
  %v1183 = vlaneseq
  %v1184 = vshrl.u32 %v1183, 7
  %v1185 = vsub.s32 4, %v1184
  %v1186 = vrot.slane %v30, %v1185
  %v1187 = vlaneseq
  %v1188 = vshrl.u32 %v1187, 7
  %v1189 = vsub.s32 4, %v1188
  %v1190 = vrot.slane %v31, %v1189
  %v1191 = vlaneseq
  %v1192 = vshrl.u32 %v1191, 7
  %v1193 = vsub.s32 4, %v1192
  %v1194 = vrot.slane %v32, %v1193
  %1199 = vrot.lane.b32.xlu0 %v1182, 98
  %v1200 = vpop.permute.xlu0 %1199
  %1201 = vrot.lane.b32.xlu0 %v1186, 98
  %v1202 = vpop.permute.xlu0 %1201
  %1203 = vrot.lane.b32.xlu0 %v1190, 98
  %v1204 = vpop.permute.xlu0 %1203
  %1205 = vrot.lane.b32.xlu0 %v1194, 98
  %v1206 = vpop.permute.xlu0 %1205
  %vm1207 = vcmask 801792
  %v1208 = vsel %vm1207, %v1200, %v1202
  %v1209 = vsel %vm1207, %v1202, %v1204
  %v1210 = vsel %vm1207, %v1204, %v1206
  %v1216 = vmul.f32 %v1174, %v1200
  %v1217 = vmul.f32 %v1175, %v1208
  %v1218 = vmul.f32 %v1176, %v1209
  %v1219 = vmul.f32 %v1177, %v1210
  %v1220 = vmul.f32 %v1178, %v1206
  %1226 = vrot.lane.b32.xlu0 %v1216, 30
  %v1227 = vpop.permute.xlu0 %1226
  %1228 = vrot.lane.b32.xlu0 %v1217, 30
  %v1229 = vpop.permute.xlu0 %1228
  %1230 = vrot.lane.b32.xlu0 %v1218, 30
  %v1231 = vpop.permute.xlu0 %1230
  %1232 = vrot.lane.b32.xlu0 %v1219, 30
  %v1233 = vpop.permute.xlu0 %1232
  %1234 = vrot.lane.b32.xlu0 %v1220, 30
  %v1235 = vpop.permute.xlu0 %1234
  %vm1236 = vcmask 244736
  %v1237 = vsel %vm1236, %v1227, %v1229
  %v1238 = vsel %vm1236, %v1229, %v1231
  %v1239 = vsel %vm1236, %v1231, %v1233
  %v1240 = vsel %vm1236, %v1233, %v1235
  %1245 = vst [vmem:[#allocation5 + $0x80] sm:$0xff] %v1237
  %1246 = vst [vmem:[#allocation5 + $0x88] sm:$0xff] %v1238
  %1247 = vst [vmem:[#allocation5 + $0x90] sm:$0xff] %v1239
  %1248 = vst [vmem:[#allocation5 + $0x98] sm:$0xff] %v1240
  %v1249 = vld [vmem:[#allocation4] sm:$0xff]
  %v1250 = vld [vmem:[#allocation4 + $0x8] sm:$0xff]
  %v1251 = vld [vmem:[#allocation4 + $0x10] sm:$0xff]
  %v1252 = vld [vmem:[#allocation4 + $0x18] sm:$0xff]
  %v1253 = vld [vmem:[#allocation4 + $0x20] sm:$0xff]
  %v1254 = vlaneseq
  %v1255 = vshrl.u32 %v1254, 7
  %v1256 = vsub.s32 5, %v1255
  %v1257 = vrot.slane %v29, %v1256
  %v1258 = vlaneseq
  %v1259 = vshrl.u32 %v1258, 7
  %v1260 = vsub.s32 5, %v1259
  %v1261 = vrot.slane %v30, %v1260
  %v1262 = vlaneseq
  %v1263 = vshrl.u32 %v1262, 7
  %v1264 = vsub.s32 5, %v1263
  %v1265 = vrot.slane %v31, %v1264
  %v1266 = vlaneseq
  %v1267 = vshrl.u32 %v1266, 7
  %v1268 = vsub.s32 5, %v1267
  %v1269 = vrot.slane %v32, %v1268
  %1274 = vrot.lane.b32.xlu0 %v1257, 110
  %v1275 = vpop.permute.xlu0 %1274
  %1276 = vrot.lane.b32.xlu0 %v1261, 110
  %v1277 = vpop.permute.xlu0 %1276
  %1278 = vrot.lane.b32.xlu0 %v1265, 110
  %v1279 = vpop.permute.xlu0 %1278
  %1280 = vrot.lane.b32.xlu0 %v1269, 110
  %v1281 = vpop.permute.xlu0 %1280
  %vm1282 = vcmask 900096
  %v1283 = vsel %vm1282, %v1275, %v1277
  %v1284 = vsel %vm1282, %v1277, %v1279
  %v1285 = vsel %vm1282, %v1279, %v1281
  %v1291 = vmul.f32 %v1249, %v1275
  %v1292 = vmul.f32 %v1250, %v1283
  %v1293 = vmul.f32 %v1251, %v1284
  %v1294 = vmul.f32 %v1252, %v1285
  %v1295 = vmul.f32 %v1253, %v1281
  %1301 = vrot.lane.b32.xlu0 %v1291, 18
  %v1302 = vpop.permute.xlu0 %1301
  %1303 = vrot.lane.b32.xlu0 %v1292, 18
  %v1304 = vpop.permute.xlu0 %1303
  %1305 = vrot.lane.b32.xlu0 %v1293, 18
  %v1306 = vpop.permute.xlu0 %1305
  %1307 = vrot.lane.b32.xlu0 %v1294, 18
  %v1308 = vpop.permute.xlu0 %1307
  %1309 = vrot.lane.b32.xlu0 %v1295, 18
  %v1310 = vpop.permute.xlu0 %1309
  %vm1311 = vcmask 146432
  %v1312 = vsel %vm1311, %v1302, %v1304
  %v1313 = vsel %vm1311, %v1304, %v1306
  %v1314 = vsel %vm1311, %v1306, %v1308
  %v1315 = vsel %vm1311, %v1308, %v1310
  %1320 = vst [vmem:[#allocation5 + $0xa0] sm:$0xff] %v1312
  %1321 = vst [vmem:[#allocation5 + $0xa8] sm:$0xff] %v1313
  %1322 = vst [vmem:[#allocation5 + $0xb0] sm:$0xff] %v1314
  %1323 = vst [vmem:[#allocation5 + $0xb8] sm:$0xff] %v1315
  %v1324 = vld [vmem:[#allocation4] sm:$0xff]
  %v1325 = vld [vmem:[#allocation4 + $0x8] sm:$0xff]
  %v1326 = vld [vmem:[#allocation4 + $0x10] sm:$0xff]
  %v1327 = vld [vmem:[#allocation4 + $0x18] sm:$0xff]
  %v1328 = vld [vmem:[#allocation4 + $0x20] sm:$0xff]
  %v1329 = vlaneseq
  %v1330 = vshrl.u32 %v1329, 7
  %v1331 = vsub.s32 6, %v1330
  %v1332 = vrot.slane %v29, %v1331
  %v1333 = vlaneseq
  %v1334 = vshrl.u32 %v1333, 7
  %v1335 = vsub.s32 6, %v1334
  %v1336 = vrot.slane %v30, %v1335
  %v1337 = vlaneseq
  %v1338 = vshrl.u32 %v1337, 7
  %v1339 = vsub.s32 6, %v1338
  %v1340 = vrot.slane %v31, %v1339
  %v1341 = vlaneseq
  %v1342 = vshrl.u32 %v1341, 7
  %v1343 = vsub.s32 6, %v1342
  %v1344 = vrot.slane %v32, %v1343
  %1349 = vrot.lane.b32.xlu0 %v1332, 111
  %v1350 = vpop.permute.xlu0 %1349
  %1351 = vrot.lane.b32.xlu0 %v1336, 111
  %v1352 = vpop.permute.xlu0 %1351
  %1353 = vrot.lane.b32.xlu0 %v1340, 111
  %v1354 = vpop.permute.xlu0 %1353
  %1355 = vrot.lane.b32.xlu0 %v1344, 111
  %v1356 = vpop.permute.xlu0 %1355
  %v1357 = vsel %vm496, %v1350, %v1352
  %v1358 = vsel %vm496, %v1352, %v1354
  %v1359 = vsel %vm496, %v1354, %v1356
  %v1365 = vmul.f32 %v1324, %v1350
  %v1366 = vmul.f32 %v1325, %v1357
  %v1367 = vmul.f32 %v1326, %v1358
  %v1368 = vmul.f32 %v1327, %v1359
  %v1369 = vmul.f32 %v1328, %v1356
  %1375 = vrot.lane.b32.xlu0 %v1365, 17
  %v1376 = vpop.permute.xlu0 %1375
  %1377 = vrot.lane.b32.xlu0 %v1366, 17
  %v1378 = vpop.permute.xlu0 %1377
  %1379 = vrot.lane.b32.xlu0 %v1367, 17
  %v1380 = vpop.permute.xlu0 %1379
  %1381 = vrot.lane.b32.xlu0 %v1368, 17
  %v1382 = vpop.permute.xlu0 %1381
  %1383 = vrot.lane.b32.xlu0 %v1369, 17
  %v1384 = vpop.permute.xlu0 %1383
  %v1385 = vsel %vm101, %v1376, %v1378
  %v1386 = vsel %vm101, %v1378, %v1380
  %v1387 = vsel %vm101, %v1380, %v1382
  %v1388 = vsel %vm101, %v1382, %v1384
  %1393 = vst [vmem:[#allocation5 + $0xc0] sm:$0xff] %v1385
  %1394 = vst [vmem:[#allocation5 + $0xc8] sm:$0xff] %v1386
  %1395 = vst [vmem:[#allocation5 + $0xd0] sm:$0xff] %v1387
  %1396 = vst [vmem:[#allocation5 + $0xd8] sm:$0xff] %v1388
  %v1397 = vld [vmem:[#allocation4] sm:$0xff]
  %v1398 = vld [vmem:[#allocation4 + $0x8] sm:$0xff]
  %v1399 = vld [vmem:[#allocation4 + $0x10] sm:$0xff]
  %v1400 = vld [vmem:[#allocation4 + $0x18] sm:$0xff]
  %v1401 = vld [vmem:[#allocation4 + $0x20] sm:$0xff]
  %v1402 = vlaneseq
  %v1403 = vshrl.u32 %v1402, 7
  %v1404 = vsub.s32 7, %v1403
  %v1405 = vrot.slane %v29, %v1404
  %v1406 = vlaneseq
  %v1407 = vshrl.u32 %v1406, 7
  %v1408 = vsub.s32 7, %v1407
  %v1409 = vrot.slane %v30, %v1408
  %v1410 = vlaneseq
  %v1411 = vshrl.u32 %v1410, 7
  %v1412 = vsub.s32 7, %v1411
  %v1413 = vrot.slane %v31, %v1412
  %v1414 = vlaneseq
  %v1415 = vshrl.u32 %v1414, 7
  %v1416 = vsub.s32 7, %v1415
  %v1417 = vrot.slane %v32, %v1416
  %1422 = vrot.lane.b32.xlu0 %v1405, 112
  %v1423 = vpop.permute.xlu0 %1422
  %1424 = vrot.lane.b32.xlu0 %v1409, 112
  %v1425 = vpop.permute.xlu0 %1424
  %1426 = vrot.lane.b32.xlu0 %v1413, 112
  %v1427 = vpop.permute.xlu0 %1426
  %1428 = vrot.lane.b32.xlu0 %v1417, 112
  %v1429 = vpop.permute.xlu0 %1428
  %v1430 = vsel %vm443, %v1423, %v1425
  %v1431 = vsel %vm443, %v1425, %v1427
  %v1432 = vsel %vm443, %v1427, %v1429
  %v1438 = vmul.f32 %v1397, %v1423
  %v1439 = vmul.f32 %v1398, %v1430
  %v1440 = vmul.f32 %v1399, %v1431
  %v1441 = vmul.f32 %v1400, %v1432
  %v1442 = vmul.f32 %v1401, %v1429
  %1448 = vrot.lane.b32.xlu0 %v1438, 16
  %v1449 = vpop.permute.xlu0 %1448
  %1450 = vrot.lane.b32.xlu0 %v1439, 16
  %v1451 = vpop.permute.xlu0 %1450
  %1452 = vrot.lane.b32.xlu0 %v1440, 16
  %v1453 = vpop.permute.xlu0 %1452
  %1454 = vrot.lane.b32.xlu0 %v1441, 16
  %v1455 = vpop.permute.xlu0 %1454
  %1456 = vrot.lane.b32.xlu0 %v1442, 16
  %v1457 = vpop.permute.xlu0 %1456
  %v1458 = vsel %vm154, %v1449, %v1451
  %v1459 = vsel %vm154, %v1451, %v1453
  %v1460 = vsel %vm154, %v1453, %v1455
  %v1461 = vsel %vm154, %v1455, %v1457
  %1466 = vst [vmem:[#allocation5 + $0xe0] sm:$0xff] %v1458
  %1467 = vst [vmem:[#allocation5 + $0xe8] sm:$0xff] %v1459
  %1468 = vst [vmem:[#allocation5 + $0xf0] sm:$0xff] %v1460
  %1469 = vst [vmem:[#allocation5 + $0xf8] sm:$0xff] %v1461
  %v1470 = vld [vmem:[#allocation4] sm:$0xff]
  %v1471 = vld [vmem:[#allocation4 + $0x8] sm:$0xff]
  %v1472 = vld [vmem:[#allocation4 + $0x10] sm:$0xff]
  %v1473 = vld [vmem:[#allocation4 + $0x18] sm:$0xff]
  %v1474 = vld [vmem:[#allocation4 + $0x20] sm:$0xff]
  %v1475 = vlaneseq
  %v1476 = vshrl.u32 %v1475, 7
  %v1477 = vsub.s32 0, %v1476
  %v1478 = vrot.slane %v33, %v1477
  %v1479 = vlaneseq
  %v1480 = vshrl.u32 %v1479, 7
  %v1481 = vsub.s32 0, %v1480
  %v1482 = vrot.slane %v34, %v1481
  %v1483 = vlaneseq
  %v1484 = vshrl.u32 %v1483, 7
  %v1485 = vsub.s32 0, %v1484
  %v1486 = vrot.slane %v35, %v1485
  %v1487 = vlaneseq
  %v1488 = vshrl.u32 %v1487, 7
  %v1489 = vsub.s32 0, %v1488
  %v1490 = vrot.slane %v36, %v1489
  %1495 = vrot.lane.b32.xlu0 %v1478, 113
  %v1496 = vpop.permute.xlu0 %1495
  %1497 = vrot.lane.b32.xlu0 %v1482, 113
  %v1498 = vpop.permute.xlu0 %1497
  %1499 = vrot.lane.b32.xlu0 %v1486, 113
  %v1500 = vpop.permute.xlu0 %1499
  %1501 = vrot.lane.b32.xlu0 %v1490, 113
  %v1502 = vpop.permute.xlu0 %1501
  %v1503 = vsel %vm390, %v1496, %v1498
  %v1504 = vsel %vm390, %v1498, %v1500
  %v1505 = vsel %vm390, %v1500, %v1502
  %v1511 = vmul.f32 %v1470, %v1496
  %v1512 = vmul.f32 %v1471, %v1503
  %v1513 = vmul.f32 %v1472, %v1504
  %v1514 = vmul.f32 %v1473, %v1505
  %v1515 = vmul.f32 %v1474, %v1502
  %1521 = vrot.lane.b32.xlu0 %v1511, 15
  %v1522 = vpop.permute.xlu0 %1521
  %1523 = vrot.lane.b32.xlu0 %v1512, 15
  %v1524 = vpop.permute.xlu0 %1523
  %1525 = vrot.lane.b32.xlu0 %v1513, 15
  %v1526 = vpop.permute.xlu0 %1525
  %1527 = vrot.lane.b32.xlu0 %v1514, 15
  %v1528 = vpop.permute.xlu0 %1527
  %1529 = vrot.lane.b32.xlu0 %v1515, 15
  %v1530 = vpop.permute.xlu0 %1529
  %v1531 = vsel %vm215, %v1522, %v1524
  %v1532 = vsel %vm215, %v1524, %v1526
  %v1533 = vsel %vm215, %v1526, %v1528
  %v1534 = vsel %vm215, %v1528, %v1530
  %1539 = vst [vmem:[#allocation5 + $0x100] sm:$0xff] %v1531
  %1540 = vst [vmem:[#allocation5 + $0x108] sm:$0xff] %v1532
  %1541 = vst [vmem:[#allocation5 + $0x110] sm:$0xff] %v1533
  %1542 = vst [vmem:[#allocation5 + $0x118] sm:$0xff] %v1534
  %v1543 = vld [vmem:[#allocation4] sm:$0xff]
  %v1544 = vld [vmem:[#allocation4 + $0x8] sm:$0xff]
  %v1545 = vld [vmem:[#allocation4 + $0x10] sm:$0xff]
  %v1546 = vld [vmem:[#allocation4 + $0x18] sm:$0xff]
  %v1547 = vld [vmem:[#allocation4 + $0x20] sm:$0xff]
  %v1548 = vlaneseq
  %v1549 = vshrl.u32 %v1548, 7
  %v1550 = vsub.s32 1, %v1549
  %v1551 = vrot.slane %v33, %v1550
  %v1552 = vlaneseq
  %v1553 = vshrl.u32 %v1552, 7
  %v1554 = vsub.s32 1, %v1553
  %v1555 = vrot.slane %v34, %v1554
  %v1556 = vlaneseq
  %v1557 = vshrl.u32 %v1556, 7
  %v1558 = vsub.s32 1, %v1557
  %v1559 = vrot.slane %v35, %v1558
  %v1560 = vlaneseq
  %v1561 = vshrl.u32 %v1560, 7
  %v1562 = vsub.s32 1, %v1561
  %v1563 = vrot.slane %v36, %v1562
  %1568 = vrot.lane.b32.xlu0 %v1551, 114
  %v1569 = vpop.permute.xlu0 %1568
  %1570 = vrot.lane.b32.xlu0 %v1555, 114
  %v1571 = vpop.permute.xlu0 %1570
  %1572 = vrot.lane.b32.xlu0 %v1559, 114
  %v1573 = vpop.permute.xlu0 %1572
  %1574 = vrot.lane.b32.xlu0 %v1563, 114
  %v1575 = vpop.permute.xlu0 %1574
  %vm1576 = vcmask 932864
  %v1577 = vsel %vm1576, %v1569, %v1571
  %v1578 = vsel %vm1576, %v1571, %v1573
  %v1579 = vsel %vm1576, %v1573, %v1575
  %v1585 = vmul.f32 %v1543, %v1569
  %v1586 = vmul.f32 %v1544, %v1577
  %v1587 = vmul.f32 %v1545, %v1578
  %v1588 = vmul.f32 %v1546, %v1579
  %v1589 = vmul.f32 %v1547, %v1575
  %1595 = vrot.lane.b32.xlu0 %v1585, 14
  %v1596 = vpop.permute.xlu0 %1595
  %1597 = vrot.lane.b32.xlu0 %v1586, 14
  %v1598 = vpop.permute.xlu0 %1597
  %1599 = vrot.lane.b32.xlu0 %v1587, 14
  %v1600 = vpop.permute.xlu0 %1599
  %1601 = vrot.lane.b32.xlu0 %v1588, 14
  %v1602 = vpop.permute.xlu0 %1601
  %1603 = vrot.lane.b32.xlu0 %v1589, 14
  %v1604 = vpop.permute.xlu0 %1603
  %vm1605 = vcmask 113664
  %v1606 = vsel %vm1605, %v1596, %v1598
  %v1607 = vsel %vm1605, %v1598, %v1600
  %v1608 = vsel %vm1605, %v1600, %v1602
  %v1609 = vsel %vm1605, %v1602, %v1604
  %1614 = vst [vmem:[#allocation5 + $0x120] sm:$0xff] %v1606
  %1615 = vst [vmem:[#allocation5 + $0x128] sm:$0xff] %v1607
  %1616 = vst [vmem:[#allocation5 + $0x130] sm:$0xff] %v1608
  %1617 = vst [vmem:[#allocation5 + $0x138] sm:$0xff] %v1609
  %v1618 = vld [vmem:[#allocation4] sm:$0xff]
  %v1619 = vld [vmem:[#allocation4 + $0x8] sm:$0xff]
  %v1620 = vld [vmem:[#allocation4 + $0x10] sm:$0xff]
  %v1621 = vld [vmem:[#allocation4 + $0x18] sm:$0xff]
  %v1622 = vld [vmem:[#allocation4 + $0x20] sm:$0xff]
  %v1623 = vlaneseq
  %v1624 = vshrl.u32 %v1623, 7
  %v1625 = vsub.s32 2, %v1624
  %v1626 = vrot.slane %v33, %v1625
  %v1627 = vlaneseq
  %v1628 = vshrl.u32 %v1627, 7
  %v1629 = vsub.s32 2, %v1628
  %v1630 = vrot.slane %v34, %v1629
  %v1631 = vlaneseq
  %v1632 = vshrl.u32 %v1631, 7
  %v1633 = vsub.s32 2, %v1632
  %v1634 = vrot.slane %v35, %v1633
  %v1635 = vlaneseq
  %v1636 = vshrl.u32 %v1635, 7
  %v1637 = vsub.s32 2, %v1636
  %v1638 = vrot.slane %v36, %v1637
  %1643 = vrot.lane.b32.xlu0 %v1626, 126
  %v1644 = vpop.permute.xlu0 %1643
  %1645 = vrot.lane.b32.xlu0 %v1630, 126
  %v1646 = vpop.permute.xlu0 %1645
  %1647 = vrot.lane.b32.xlu0 %v1634, 126
  %v1648 = vpop.permute.xlu0 %1647
  %1649 = vrot.lane.b32.xlu0 %v1638, 126
  %v1650 = vpop.permute.xlu0 %1649
  %vm1651 = vcmask 1031168
  %v1652 = vsel %vm1651, %v1644, %v1646
  %v1653 = vsel %vm1651, %v1646, %v1648
  %v1654 = vsel %vm1651, %v1648, %v1650
  %v1660 = vmul.f32 %v1618, %v1644
  %v1661 = vmul.f32 %v1619, %v1652
  %v1662 = vmul.f32 %v1620, %v1653
  %v1663 = vmul.f32 %v1621, %v1654
  %v1664 = vmul.f32 %v1622, %v1650
  %1670 = vrot.lane.b32.xlu0 %v1660, 2
  %v1671 = vpop.permute.xlu0 %1670
  %1672 = vrot.lane.b32.xlu0 %v1661, 2
  %v1673 = vpop.permute.xlu0 %1672
  %1674 = vrot.lane.b32.xlu0 %v1662, 2
  %v1675 = vpop.permute.xlu0 %1674
  %1676 = vrot.lane.b32.xlu0 %v1663, 2
  %v1677 = vpop.permute.xlu0 %1676
  %1678 = vrot.lane.b32.xlu0 %v1664, 2
  %v1679 = vpop.permute.xlu0 %1678
  %vm1680 = vcmask 15360
  %v1681 = vsel %vm1680, %v1671, %v1673
  %v1682 = vsel %vm1680, %v1673, %v1675
  %v1683 = vsel %vm1680, %v1675, %v1677
  %v1684 = vsel %vm1680, %v1677, %v1679
  %1689 = vst [vmem:[#allocation5 + $0x140] sm:$0xff] %v1681
  %1690 = vst [vmem:[#allocation5 + $0x148] sm:$0xff] %v1682
  %1691 = vst [vmem:[#allocation5 + $0x150] sm:$0xff] %v1683
  %1692 = vst [vmem:[#allocation5 + $0x158] sm:$0xff] %v1684
  %v1693 = vld [vmem:[#allocation4] sm:$0xff]
  %v1694 = vld [vmem:[#allocation4 + $0x8] sm:$0xff]
  %v1695 = vld [vmem:[#allocation4 + $0x10] sm:$0xff]
  %v1696 = vld [vmem:[#allocation4 + $0x18] sm:$0xff]
  %v1697 = vld [vmem:[#allocation4 + $0x20] sm:$0xff]
  %v1698 = vlaneseq
  %v1699 = vshrl.u32 %v1698, 7
  %v1700 = vsub.s32 3, %v1699
  %v1701 = vrot.slane %v33, %v1700
  %v1702 = vlaneseq
  %v1703 = vshrl.u32 %v1702, 7
  %v1704 = vsub.s32 3, %v1703
  %v1705 = vrot.slane %v34, %v1704
  %v1706 = vlaneseq
  %v1707 = vshrl.u32 %v1706, 7
  %v1708 = vsub.s32 3, %v1707
  %v1709 = vrot.slane %v35, %v1708
  %v1710 = vlaneseq
  %v1711 = vshrl.u32 %v1710, 7
  %v1712 = vsub.s32 3, %v1711
  %v1713 = vrot.slane %v36, %v1712
  %1718 = vrot.lane.b32.xlu0 %v1701, 127
  %v1719 = vpop.permute.xlu0 %1718
  %1720 = vrot.lane.b32.xlu0 %v1705, 127
  %v1721 = vpop.permute.xlu0 %1720
  %1722 = vrot.lane.b32.xlu0 %v1709, 127
  %v1723 = vpop.permute.xlu0 %1722
  %1724 = vrot.lane.b32.xlu0 %v1713, 127
  %v1725 = vpop.permute.xlu0 %1724
  %v1726 = vsel %vm329, %v1719, %v1721
  %v1727 = vsel %vm329, %v1721, %v1723
  %v1728 = vsel %vm329, %v1723, %v1725
  %v1734 = vmul.f32 %v1693, %v1719
  %v1735 = vmul.f32 %v1694, %v1726
  %v1736 = vmul.f32 %v1695, %v1727
  %v1737 = vmul.f32 %v1696, %v1728
  %v1738 = vmul.f32 %v1697, %v1725
  %1744 = vrot.lane.b32.xlu0 %v1734, 1
  %v1745 = vpop.permute.xlu0 %1744
  %1746 = vrot.lane.b32.xlu0 %v1735, 1
  %v1747 = vpop.permute.xlu0 %1746
  %1748 = vrot.lane.b32.xlu0 %v1736, 1
  %v1749 = vpop.permute.xlu0 %1748
  %1750 = vrot.lane.b32.xlu0 %v1737, 1
  %v1751 = vpop.permute.xlu0 %1750
  %1752 = vrot.lane.b32.xlu0 %v1738, 1
  %v1753 = vpop.permute.xlu0 %1752
  %v1754 = vsel %vm268, %v1745, %v1747
  %v1755 = vsel %vm268, %v1747, %v1749
  %v1756 = vsel %vm268, %v1749, %v1751
  %v1757 = vsel %vm268, %v1751, %v1753
  %1762 = vst [vmem:[#allocation5 + $0x160] sm:$0xff] %v1754
  %1763 = vst [vmem:[#allocation5 + $0x168] sm:$0xff] %v1755
  %1764 = vst [vmem:[#allocation5 + $0x170] sm:$0xff] %v1756
  %1765 = vst [vmem:[#allocation5 + $0x178] sm:$0xff] %v1757
  %v1766 = vld [vmem:[#allocation4 + $0x8] sm:$0xff]
  %v1767 = vld [vmem:[#allocation4 + $0x10] sm:$0xff]
  %v1768 = vld [vmem:[#allocation4 + $0x18] sm:$0xff]
  %v1769 = vld [vmem:[#allocation4 + $0x20] sm:$0xff]
  %v1770 = vlaneseq
  %v1771 = vshrl.u32 %v1770, 7
  %v1772 = vsub.s32 4, %v1771
  %v1773 = vrot.slane %v33, %v1772
  %v1774 = vlaneseq
  %v1775 = vshrl.u32 %v1774, 7
  %v1776 = vsub.s32 4, %v1775
  %v1777 = vrot.slane %v34, %v1776
  %v1778 = vlaneseq
  %v1779 = vshrl.u32 %v1778, 7
  %v1780 = vsub.s32 4, %v1779
  %v1781 = vrot.slane %v35, %v1780
  %v1782 = vlaneseq
  %v1783 = vshrl.u32 %v1782, 7
  %v1784 = vsub.s32 4, %v1783
  %v1785 = vrot.slane %v36, %v1784
  %v1786 = vmul.f32 %v1766, %v1773
  %v1787 = vmul.f32 %v1767, %v1777
  %v1788 = vmul.f32 %v1768, %v1781
  %v1789 = vmul.f32 %v1769, %v1785
  %1790 = vst [vmem:[#allocation5 + $0x180] sm:$0xff] %v1786
  %1791 = vst [vmem:[#allocation5 + $0x188] sm:$0xff] %v1787
  %1792 = vst [vmem:[#allocation5 + $0x190] sm:$0xff] %v1788
  %1793 = vst [vmem:[#allocation5 + $0x198] sm:$0xff] %v1789
  %v1794 = vld [vmem:[#allocation4 + $0x8] sm:$0xff]
  %v1795 = vld [vmem:[#allocation4 + $0x10] sm:$0xff]
  %v1796 = vld [vmem:[#allocation4 + $0x18] sm:$0xff]
  %v1797 = vld [vmem:[#allocation4 + $0x20] sm:$0xff]
  %v1798 = vld [vmem:[#allocation4 + $0x28] sm:$0xff]
  %v1799 = vlaneseq
  %v1800 = vshrl.u32 %v1799, 7
  %v1801 = vsub.s32 5, %v1800
  %v1802 = vrot.slane %v33, %v1801
  %v1803 = vlaneseq
  %v1804 = vshrl.u32 %v1803, 7
  %v1805 = vsub.s32 5, %v1804
  %v1806 = vrot.slane %v34, %v1805
  %v1807 = vlaneseq
  %v1808 = vshrl.u32 %v1807, 7
  %v1809 = vsub.s32 5, %v1808
  %v1810 = vrot.slane %v35, %v1809
  %v1811 = vlaneseq
  %v1812 = vshrl.u32 %v1811, 7
  %v1813 = vsub.s32 5, %v1812
  %v1814 = vrot.slane %v36, %v1813
  %1819 = vrot.lane.b32.xlu0 %v1802, 1
  %v1820 = vpop.permute.xlu0 %1819
  %1821 = vrot.lane.b32.xlu0 %v1806, 1
  %v1822 = vpop.permute.xlu0 %1821
  %1823 = vrot.lane.b32.xlu0 %v1810, 1
  %v1824 = vpop.permute.xlu0 %1823
  %1825 = vrot.lane.b32.xlu0 %v1814, 1
  %v1826 = vpop.permute.xlu0 %1825
  %v1827 = vsel %vm268, %v1820, %v1822
  %v1828 = vsel %vm268, %v1822, %v1824
  %v1829 = vsel %vm268, %v1824, %v1826
  %v1835 = vmul.f32 %v1794, %v1820
  %v1836 = vmul.f32 %v1795, %v1827
  %v1837 = vmul.f32 %v1796, %v1828
  %v1838 = vmul.f32 %v1797, %v1829
  %v1839 = vmul.f32 %v1798, %v1826
  %1845 = vrot.lane.b32.xlu0 %v1835, 127
  %v1846 = vpop.permute.xlu0 %1845
  %1847 = vrot.lane.b32.xlu0 %v1836, 127
  %v1848 = vpop.permute.xlu0 %1847
  %1849 = vrot.lane.b32.xlu0 %v1837, 127
  %v1850 = vpop.permute.xlu0 %1849
  %1851 = vrot.lane.b32.xlu0 %v1838, 127
  %v1852 = vpop.permute.xlu0 %1851
  %1853 = vrot.lane.b32.xlu0 %v1839, 127
  %v1854 = vpop.permute.xlu0 %1853
  %v1855 = vsel %vm329, %v1846, %v1848
  %v1856 = vsel %vm329, %v1848, %v1850
  %v1857 = vsel %vm329, %v1850, %v1852
  %v1858 = vsel %vm329, %v1852, %v1854
  %1863 = vst [vmem:[#allocation5 + $0x1a0] sm:$0xff] %v1855
  %1864 = vst [vmem:[#allocation5 + $0x1a8] sm:$0xff] %v1856
  %1865 = vst [vmem:[#allocation5 + $0x1b0] sm:$0xff] %v1857
  %1866 = vst [vmem:[#allocation5 + $0x1b8] sm:$0xff] %v1858
  %v1867 = vld [vmem:[#allocation4 + $0x8] sm:$0xff]
  %v1868 = vld [vmem:[#allocation4 + $0x10] sm:$0xff]
  %v1869 = vld [vmem:[#allocation4 + $0x18] sm:$0xff]
  %v1870 = vld [vmem:[#allocation4 + $0x20] sm:$0xff]
  %v1871 = vld [vmem:[#allocation4 + $0x28] sm:$0xff]
  %v1872 = vlaneseq
  %v1873 = vshrl.u32 %v1872, 7
  %v1874 = vsub.s32 6, %v1873
  %v1875 = vrot.slane %v33, %v1874
  %v1876 = vlaneseq
  %v1877 = vshrl.u32 %v1876, 7
  %v1878 = vsub.s32 6, %v1877
  %v1879 = vrot.slane %v34, %v1878
  %v1880 = vlaneseq
  %v1881 = vshrl.u32 %v1880, 7
  %v1882 = vsub.s32 6, %v1881
  %v1883 = vrot.slane %v35, %v1882
  %v1884 = vlaneseq
  %v1885 = vshrl.u32 %v1884, 7
  %v1886 = vsub.s32 6, %v1885
  %v1887 = vrot.slane %v36, %v1886
  %1892 = vrot.lane.b32.xlu0 %v1875, 2
  %v1893 = vpop.permute.xlu0 %1892
  %1894 = vrot.lane.b32.xlu0 %v1879, 2
  %v1895 = vpop.permute.xlu0 %1894
  %1896 = vrot.lane.b32.xlu0 %v1883, 2
  %v1897 = vpop.permute.xlu0 %1896
  %1898 = vrot.lane.b32.xlu0 %v1887, 2
  %v1899 = vpop.permute.xlu0 %1898
  %v1900 = vsel %vm1680, %v1893, %v1895
  %v1901 = vsel %vm1680, %v1895, %v1897
  %v1902 = vsel %vm1680, %v1897, %v1899
  %v1908 = vmul.f32 %v1867, %v1893
  %v1909 = vmul.f32 %v1868, %v1900
  %v1910 = vmul.f32 %v1869, %v1901
  %v1911 = vmul.f32 %v1870, %v1902
  %v1912 = vmul.f32 %v1871, %v1899
  %1918 = vrot.lane.b32.xlu0 %v1908, 126
  %v1919 = vpop.permute.xlu0 %1918
  %1920 = vrot.lane.b32.xlu0 %v1909, 126
  %v1921 = vpop.permute.xlu0 %1920
  %1922 = vrot.lane.b32.xlu0 %v1910, 126
  %v1923 = vpop.permute.xlu0 %1922
  %1924 = vrot.lane.b32.xlu0 %v1911, 126
  %v1925 = vpop.permute.xlu0 %1924
  %1926 = vrot.lane.b32.xlu0 %v1912, 126
  %v1927 = vpop.permute.xlu0 %1926
  %v1928 = vsel %vm1651, %v1919, %v1921
  %v1929 = vsel %vm1651, %v1921, %v1923
  %v1930 = vsel %vm1651, %v1923, %v1925
  %v1931 = vsel %vm1651, %v1925, %v1927
  %1936 = vst [vmem:[#allocation5 + $0x1c0] sm:$0xff] %v1928
  %1937 = vst [vmem:[#allocation5 + $0x1c8] sm:$0xff] %v1929
  %1938 = vst [vmem:[#allocation5 + $0x1d0] sm:$0xff] %v1930
  %1939 = vst [vmem:[#allocation5 + $0x1d8] sm:$0xff] %v1931
  %v1940 = vld [vmem:[#allocation4 + $0x8] sm:$0xff]
  %v1941 = vld [vmem:[#allocation4 + $0x10] sm:$0xff]
  %v1942 = vld [vmem:[#allocation4 + $0x18] sm:$0xff]
  %v1943 = vld [vmem:[#allocation4 + $0x20] sm:$0xff]
  %v1944 = vld [vmem:[#allocation4 + $0x28] sm:$0xff]
  %v1945 = vlaneseq
  %v1946 = vshrl.u32 %v1945, 7
  %v1947 = vsub.s32 7, %v1946
  %v1948 = vrot.slane %v33, %v1947
  %v1949 = vlaneseq
  %v1950 = vshrl.u32 %v1949, 7
  %v1951 = vsub.s32 7, %v1950
  %v1952 = vrot.slane %v34, %v1951
  %v1953 = vlaneseq
  %v1954 = vshrl.u32 %v1953, 7
  %v1955 = vsub.s32 7, %v1954
  %v1956 = vrot.slane %v35, %v1955
  %v1957 = vlaneseq
  %v1958 = vshrl.u32 %v1957, 7
  %v1959 = vsub.s32 7, %v1958
  %v1960 = vrot.slane %v36, %v1959
  %1965 = vrot.lane.b32.xlu0 %v1948, 14
  %v1966 = vpop.permute.xlu0 %1965
  %1967 = vrot.lane.b32.xlu0 %v1952, 14
  %v1968 = vpop.permute.xlu0 %1967
  %1969 = vrot.lane.b32.xlu0 %v1956, 14
  %v1970 = vpop.permute.xlu0 %1969
  %1971 = vrot.lane.b32.xlu0 %v1960, 14
  %v1972 = vpop.permute.xlu0 %1971
  %v1973 = vsel %vm1605, %v1966, %v1968
  %v1974 = vsel %vm1605, %v1968, %v1970
  %v1975 = vsel %vm1605, %v1970, %v1972
  %v1981 = vmul.f32 %v1940, %v1966
  %v1982 = vmul.f32 %v1941, %v1973
  %v1983 = vmul.f32 %v1942, %v1974
  %v1984 = vmul.f32 %v1943, %v1975
  %v1985 = vmul.f32 %v1944, %v1972
  %1991 = vrot.lane.b32.xlu0 %v1981, 114
  %v1992 = vpop.permute.xlu0 %1991
  %1993 = vrot.lane.b32.xlu0 %v1982, 114
  %v1994 = vpop.permute.xlu0 %1993
  %1995 = vrot.lane.b32.xlu0 %v1983, 114
  %v1996 = vpop.permute.xlu0 %1995
  %1997 = vrot.lane.b32.xlu0 %v1984, 114
  %v1998 = vpop.permute.xlu0 %1997
  %1999 = vrot.lane.b32.xlu0 %v1985, 114
  %v2000 = vpop.permute.xlu0 %1999
  %v2001 = vsel %vm1576, %v1992, %v1994
  %v2002 = vsel %vm1576, %v1994, %v1996
  %v2003 = vsel %vm1576, %v1996, %v1998
  %v2004 = vsel %vm1576, %v1998, %v2000
  %2009 = vst [vmem:[#allocation5 + $0x1e0] sm:$0xff] %v2001
  %2010 = vst [vmem:[#allocation5 + $0x1e8] sm:$0xff] %v2002
  %2011 = vst [vmem:[#allocation5 + $0x1f0] sm:$0xff] %v2003
  %2012 = vst [vmem:[#allocation5 + $0x1f8] sm:$0xff] %v2004
  %v2013 = vld [vmem:[#allocation4 + $0x8] sm:$0xff]
  %v2014 = vld [vmem:[#allocation4 + $0x10] sm:$0xff]
  %v2015 = vld [vmem:[#allocation4 + $0x18] sm:$0xff]
  %v2016 = vld [vmem:[#allocation4 + $0x20] sm:$0xff]
  %v2017 = vld [vmem:[#allocation4 + $0x28] sm:$0xff]
  %v2018 = vlaneseq
  %v2019 = vshrl.u32 %v2018, 7
  %v2020 = vsub.s32 0, %v2019
  %v2021 = vrot.slane %v37, %v2020
  %v2022 = vlaneseq
  %v2023 = vshrl.u32 %v2022, 7
  %v2024 = vsub.s32 0, %v2023
  %v2025 = vrot.slane %v38, %v2024
  %v2026 = vlaneseq
  %v2027 = vshrl.u32 %v2026, 7
  %v2028 = vsub.s32 0, %v2027
  %v2029 = vrot.slane %v39, %v2028
  %v2030 = vlaneseq
  %v2031 = vshrl.u32 %v2030, 7
  %v2032 = vsub.s32 0, %v2031
  %v2033 = vrot.slane %v40, %v2032
  %2038 = vrot.lane.b32.xlu0 %v2021, 15
  %v2039 = vpop.permute.xlu0 %2038
  %2040 = vrot.lane.b32.xlu0 %v2025, 15
  %v2041 = vpop.permute.xlu0 %2040
  %2042 = vrot.lane.b32.xlu0 %v2029, 15
  %v2043 = vpop.permute.xlu0 %2042
  %2044 = vrot.lane.b32.xlu0 %v2033, 15
  %v2045 = vpop.permute.xlu0 %2044
  %v2046 = vsel %vm215, %v2039, %v2041
  %v2047 = vsel %vm215, %v2041, %v2043
  %v2048 = vsel %vm215, %v2043, %v2045
  %v2054 = vmul.f32 %v2013, %v2039
  %v2055 = vmul.f32 %v2014, %v2046
  %v2056 = vmul.f32 %v2015, %v2047
  %v2057 = vmul.f32 %v2016, %v2048
  %v2058 = vmul.f32 %v2017, %v2045
  %2064 = vrot.lane.b32.xlu0 %v2054, 113
  %v2065 = vpop.permute.xlu0 %2064
  %2066 = vrot.lane.b32.xlu0 %v2055, 113
  %v2067 = vpop.permute.xlu0 %2066
  %2068 = vrot.lane.b32.xlu0 %v2056, 113
  %v2069 = vpop.permute.xlu0 %2068
  %2070 = vrot.lane.b32.xlu0 %v2057, 113
  %v2071 = vpop.permute.xlu0 %2070
  %2072 = vrot.lane.b32.xlu0 %v2058, 113
  %v2073 = vpop.permute.xlu0 %2072
  %v2074 = vsel %vm390, %v2065, %v2067
  %v2075 = vsel %vm390, %v2067, %v2069
  %v2076 = vsel %vm390, %v2069, %v2071
  %v2077 = vsel %vm390, %v2071, %v2073
  %2082 = vst [vmem:[#allocation5 + $0x200] sm:$0xff] %v2074
  %2083 = vst [vmem:[#allocation5 + $0x208] sm:$0xff] %v2075
  %2084 = vst [vmem:[#allocation5 + $0x210] sm:$0xff] %v2076
  %2085 = vst [vmem:[#allocation5 + $0x218] sm:$0xff] %v2077
  %v2086 = vld [vmem:[#allocation4 + $0x8] sm:$0xff]
  %v2087 = vld [vmem:[#allocation4 + $0x10] sm:$0xff]
  %v2088 = vld [vmem:[#allocation4 + $0x18] sm:$0xff]
  %v2089 = vld [vmem:[#allocation4 + $0x20] sm:$0xff]
  %v2090 = vld [vmem:[#allocation4 + $0x28] sm:$0xff]
  %v2091 = vlaneseq
  %v2092 = vshrl.u32 %v2091, 7
  %v2093 = vsub.s32 1, %v2092
  %v2094 = vrot.slane %v37, %v2093
  %v2095 = vlaneseq
  %v2096 = vshrl.u32 %v2095, 7
  %v2097 = vsub.s32 1, %v2096
  %v2098 = vrot.slane %v38, %v2097
  %v2099 = vlaneseq
  %v2100 = vshrl.u32 %v2099, 7
  %v2101 = vsub.s32 1, %v2100
  %v2102 = vrot.slane %v39, %v2101
  %v2103 = vlaneseq
  %v2104 = vshrl.u32 %v2103, 7
  %v2105 = vsub.s32 1, %v2104
  %v2106 = vrot.slane %v40, %v2105
  %2111 = vrot.lane.b32.xlu0 %v2094, 16
  %v2112 = vpop.permute.xlu0 %2111
  %2113 = vrot.lane.b32.xlu0 %v2098, 16
  %v2114 = vpop.permute.xlu0 %2113
  %2115 = vrot.lane.b32.xlu0 %v2102, 16
  %v2116 = vpop.permute.xlu0 %2115
  %2117 = vrot.lane.b32.xlu0 %v2106, 16
  %v2118 = vpop.permute.xlu0 %2117
  %v2119 = vsel %vm154, %v2112, %v2114
  %v2120 = vsel %vm154, %v2114, %v2116
  %v2121 = vsel %vm154, %v2116, %v2118
  %v2127 = vmul.f32 %v2086, %v2112
  %v2128 = vmul.f32 %v2087, %v2119
  %v2129 = vmul.f32 %v2088, %v2120
  %v2130 = vmul.f32 %v2089, %v2121
  %v2131 = vmul.f32 %v2090, %v2118
  %2137 = vrot.lane.b32.xlu0 %v2127, 112
  %v2138 = vpop.permute.xlu0 %2137
  %2139 = vrot.lane.b32.xlu0 %v2128, 112
  %v2140 = vpop.permute.xlu0 %2139
  %2141 = vrot.lane.b32.xlu0 %v2129, 112
  %v2142 = vpop.permute.xlu0 %2141
  %2143 = vrot.lane.b32.xlu0 %v2130, 112
  %v2144 = vpop.permute.xlu0 %2143
  %2145 = vrot.lane.b32.xlu0 %v2131, 112
  %v2146 = vpop.permute.xlu0 %2145
  %v2147 = vsel %vm443, %v2138, %v2140
  %v2148 = vsel %vm443, %v2140, %v2142
  %v2149 = vsel %vm443, %v2142, %v2144
  %v2150 = vsel %vm443, %v2144, %v2146
  %2155 = vst [vmem:[#allocation5 + $0x220] sm:$0xff] %v2147
  %2156 = vst [vmem:[#allocation5 + $0x228] sm:$0xff] %v2148
  %2157 = vst [vmem:[#allocation5 + $0x230] sm:$0xff] %v2149
  %2158 = vst [vmem:[#allocation5 + $0x238] sm:$0xff] %v2150
  %v2159 = vld [vmem:[#allocation4 + $0x8] sm:$0xff]
  %v2160 = vld [vmem:[#allocation4 + $0x10] sm:$0xff]
  %v2161 = vld [vmem:[#allocation4 + $0x18] sm:$0xff]
  %v2162 = vld [vmem:[#allocation4 + $0x20] sm:$0xff]
  %v2163 = vld [vmem:[#allocation4 + $0x28] sm:$0xff]
  %v2164 = vlaneseq
  %v2165 = vshrl.u32 %v2164, 7
  %v2166 = vsub.s32 2, %v2165
  %v2167 = vrot.slane %v37, %v2166
  %v2168 = vlaneseq
  %v2169 = vshrl.u32 %v2168, 7
  %v2170 = vsub.s32 2, %v2169
  %v2171 = vrot.slane %v38, %v2170
  %v2172 = vlaneseq
  %v2173 = vshrl.u32 %v2172, 7
  %v2174 = vsub.s32 2, %v2173
  %v2175 = vrot.slane %v39, %v2174
  %v2176 = vlaneseq
  %v2177 = vshrl.u32 %v2176, 7
  %v2178 = vsub.s32 2, %v2177
  %v2179 = vrot.slane %v40, %v2178
  %2184 = vrot.lane.b32.xlu0 %v2167, 17
  %v2185 = vpop.permute.xlu0 %2184
  %2186 = vrot.lane.b32.xlu0 %v2171, 17
  %v2187 = vpop.permute.xlu0 %2186
  %2188 = vrot.lane.b32.xlu0 %v2175, 17
  %v2189 = vpop.permute.xlu0 %2188
  %2190 = vrot.lane.b32.xlu0 %v2179, 17
  %v2191 = vpop.permute.xlu0 %2190
  %v2192 = vsel %vm101, %v2185, %v2187
  %v2193 = vsel %vm101, %v2187, %v2189
  %v2194 = vsel %vm101, %v2189, %v2191
  %v2200 = vmul.f32 %v2159, %v2185
  %v2201 = vmul.f32 %v2160, %v2192
  %v2202 = vmul.f32 %v2161, %v2193
  %v2203 = vmul.f32 %v2162, %v2194
  %v2204 = vmul.f32 %v2163, %v2191
  %2210 = vrot.lane.b32.xlu0 %v2200, 111
  %v2211 = vpop.permute.xlu0 %2210
  %2212 = vrot.lane.b32.xlu0 %v2201, 111
  %v2213 = vpop.permute.xlu0 %2212
  %2214 = vrot.lane.b32.xlu0 %v2202, 111
  %v2215 = vpop.permute.xlu0 %2214
  %2216 = vrot.lane.b32.xlu0 %v2203, 111
  %v2217 = vpop.permute.xlu0 %2216
  %2218 = vrot.lane.b32.xlu0 %v2204, 111
  %v2219 = vpop.permute.xlu0 %2218
  %v2220 = vsel %vm496, %v2211, %v2213
  %v2221 = vsel %vm496, %v2213, %v2215
  %v2222 = vsel %vm496, %v2215, %v2217
  %v2223 = vsel %vm496, %v2217, %v2219
  %2228 = vst [vmem:[#allocation5 + $0x240] sm:$0xff] %v2220
  %2229 = vst [vmem:[#allocation5 + $0x248] sm:$0xff] %v2221
  %2230 = vst [vmem:[#allocation5 + $0x250] sm:$0xff] %v2222
  %2231 = vst [vmem:[#allocation5 + $0x258] sm:$0xff] %v2223
  %v2232 = vld [vmem:[#allocation4 + $0x8] sm:$0xff]
  %v2233 = vld [vmem:[#allocation4 + $0x10] sm:$0xff]
  %v2234 = vld [vmem:[#allocation4 + $0x18] sm:$0xff]
  %v2235 = vld [vmem:[#allocation4 + $0x20] sm:$0xff]
  %v2236 = vld [vmem:[#allocation4 + $0x28] sm:$0xff]
  %v2237 = vlaneseq
  %v2238 = vshrl.u32 %v2237, 7
  %v2239 = vsub.s32 3, %v2238
  %v2240 = vrot.slane %v37, %v2239
  %v2241 = vlaneseq
  %v2242 = vshrl.u32 %v2241, 7
  %v2243 = vsub.s32 3, %v2242
  %v2244 = vrot.slane %v38, %v2243
  %v2245 = vlaneseq
  %v2246 = vshrl.u32 %v2245, 7
  %v2247 = vsub.s32 3, %v2246
  %v2248 = vrot.slane %v39, %v2247
  %v2249 = vlaneseq
  %v2250 = vshrl.u32 %v2249, 7
  %v2251 = vsub.s32 3, %v2250
  %v2252 = vrot.slane %v40, %v2251
  %2257 = vrot.lane.b32.xlu0 %v2240, 18
  %v2258 = vpop.permute.xlu0 %2257
  %2259 = vrot.lane.b32.xlu0 %v2244, 18
  %v2260 = vpop.permute.xlu0 %2259
  %2261 = vrot.lane.b32.xlu0 %v2248, 18
  %v2262 = vpop.permute.xlu0 %2261
  %2263 = vrot.lane.b32.xlu0 %v2252, 18
  %v2264 = vpop.permute.xlu0 %2263
  %v2265 = vsel %vm1311, %v2258, %v2260
  %v2266 = vsel %vm1311, %v2260, %v2262
  %v2267 = vsel %vm1311, %v2262, %v2264
  %v2273 = vmul.f32 %v2232, %v2258
  %v2274 = vmul.f32 %v2233, %v2265
  %v2275 = vmul.f32 %v2234, %v2266
  %v2276 = vmul.f32 %v2235, %v2267
  %v2277 = vmul.f32 %v2236, %v2264
  %2283 = vrot.lane.b32.xlu0 %v2273, 110
  %v2284 = vpop.permute.xlu0 %2283
  %2285 = vrot.lane.b32.xlu0 %v2274, 110
  %v2286 = vpop.permute.xlu0 %2285
  %2287 = vrot.lane.b32.xlu0 %v2275, 110
  %v2288 = vpop.permute.xlu0 %2287
  %2289 = vrot.lane.b32.xlu0 %v2276, 110
  %v2290 = vpop.permute.xlu0 %2289
  %2291 = vrot.lane.b32.xlu0 %v2277, 110
  %v2292 = vpop.permute.xlu0 %2291
  %v2293 = vsel %vm1282, %v2284, %v2286
  %v2294 = vsel %vm1282, %v2286, %v2288
  %v2295 = vsel %vm1282, %v2288, %v2290
  %v2296 = vsel %vm1282, %v2290, %v2292
  %2301 = vst [vmem:[#allocation5 + $0x260] sm:$0xff] %v2293
  %2302 = vst [vmem:[#allocation5 + $0x268] sm:$0xff] %v2294
  %2303 = vst [vmem:[#allocation5 + $0x270] sm:$0xff] %v2295
  %2304 = vst [vmem:[#allocation5 + $0x278] sm:$0xff] %v2296
  %v2305 = vld [vmem:[#allocation4 + $0x8] sm:$0xff]
  %v2306 = vld [vmem:[#allocation4 + $0x10] sm:$0xff]
  %v2307 = vld [vmem:[#allocation4 + $0x18] sm:$0xff]
  %v2308 = vld [vmem:[#allocation4 + $0x20] sm:$0xff]
  %v2309 = vld [vmem:[#allocation4 + $0x28] sm:$0xff]
  %v2310 = vlaneseq
  %v2311 = vshrl.u32 %v2310, 7
  %v2312 = vsub.s32 4, %v2311
  %v2313 = vrot.slane %v37, %v2312
  %v2314 = vlaneseq
  %v2315 = vshrl.u32 %v2314, 7
  %v2316 = vsub.s32 4, %v2315
  %v2317 = vrot.slane %v38, %v2316
  %v2318 = vlaneseq
  %v2319 = vshrl.u32 %v2318, 7
  %v2320 = vsub.s32 4, %v2319
  %v2321 = vrot.slane %v39, %v2320
  %v2322 = vlaneseq
  %v2323 = vshrl.u32 %v2322, 7
  %v2324 = vsub.s32 4, %v2323
  %v2325 = vrot.slane %v40, %v2324
  %2330 = vrot.lane.b32.xlu0 %v2313, 30
  %v2331 = vpop.permute.xlu0 %2330
  %2332 = vrot.lane.b32.xlu0 %v2317, 30
  %v2333 = vpop.permute.xlu0 %2332
  %2334 = vrot.lane.b32.xlu0 %v2321, 30
  %v2335 = vpop.permute.xlu0 %2334
  %2336 = vrot.lane.b32.xlu0 %v2325, 30
  %v2337 = vpop.permute.xlu0 %2336
  %v2338 = vsel %vm1236, %v2331, %v2333
  %v2339 = vsel %vm1236, %v2333, %v2335
  %v2340 = vsel %vm1236, %v2335, %v2337
  %v2346 = vmul.f32 %v2305, %v2331
  %v2347 = vmul.f32 %v2306, %v2338
  %v2348 = vmul.f32 %v2307, %v2339
  %v2349 = vmul.f32 %v2308, %v2340
  %v2350 = vmul.f32 %v2309, %v2337
  %2356 = vrot.lane.b32.xlu0 %v2346, 98
  %v2357 = vpop.permute.xlu0 %2356
  %2358 = vrot.lane.b32.xlu0 %v2347, 98
  %v2359 = vpop.permute.xlu0 %2358
  %2360 = vrot.lane.b32.xlu0 %v2348, 98
  %v2361 = vpop.permute.xlu0 %2360
  %2362 = vrot.lane.b32.xlu0 %v2349, 98
  %v2363 = vpop.permute.xlu0 %2362
  %2364 = vrot.lane.b32.xlu0 %v2350, 98
  %v2365 = vpop.permute.xlu0 %2364
  %v2366 = vsel %vm1207, %v2357, %v2359
  %v2367 = vsel %vm1207, %v2359, %v2361
  %v2368 = vsel %vm1207, %v2361, %v2363
  %v2369 = vsel %vm1207, %v2363, %v2365
  %2374 = vst [vmem:[#allocation5 + $0x280] sm:$0xff] %v2366
  %2375 = vst [vmem:[#allocation5 + $0x288] sm:$0xff] %v2367
  %2376 = vst [vmem:[#allocation5 + $0x290] sm:$0xff] %v2368
  %2377 = vst [vmem:[#allocation5 + $0x298] sm:$0xff] %v2369
  %v2378 = vld [vmem:[#allocation4 + $0x8] sm:$0xff]
  %v2379 = vld [vmem:[#allocation4 + $0x10] sm:$0xff]
  %v2380 = vld [vmem:[#allocation4 + $0x18] sm:$0xff]
  %v2381 = vld [vmem:[#allocation4 + $0x20] sm:$0xff]
  %v2382 = vld [vmem:[#allocation4 + $0x28] sm:$0xff]
  %v2383 = vlaneseq
  %v2384 = vshrl.u32 %v2383, 7
  %v2385 = vsub.s32 5, %v2384
  %v2386 = vrot.slane %v37, %v2385
  %v2387 = vlaneseq
  %v2388 = vshrl.u32 %v2387, 7
  %v2389 = vsub.s32 5, %v2388
  %v2390 = vrot.slane %v38, %v2389
  %v2391 = vlaneseq
  %v2392 = vshrl.u32 %v2391, 7
  %v2393 = vsub.s32 5, %v2392
  %v2394 = vrot.slane %v39, %v2393
  %v2395 = vlaneseq
  %v2396 = vshrl.u32 %v2395, 7
  %v2397 = vsub.s32 5, %v2396
  %v2398 = vrot.slane %v40, %v2397
  %2403 = vrot.lane.b32.xlu0 %v2386, 31
  %v2404 = vpop.permute.xlu0 %2403
  %2405 = vrot.lane.b32.xlu0 %v2390, 31
  %v2406 = vpop.permute.xlu0 %2405
  %2407 = vrot.lane.b32.xlu0 %v2394, 31
  %v2408 = vpop.permute.xlu0 %2407
  %2409 = vrot.lane.b32.xlu0 %v2398, 31
  %v2410 = vpop.permute.xlu0 %2409
  %v2411 = vsel %vm1161, %v2404, %v2406
  %v2412 = vsel %vm1161, %v2406, %v2408
  %v2413 = vsel %vm1161, %v2408, %v2410
  %v2419 = vmul.f32 %v2378, %v2404
  %v2420 = vmul.f32 %v2379, %v2411
  %v2421 = vmul.f32 %v2380, %v2412
  %v2422 = vmul.f32 %v2381, %v2413
  %v2423 = vmul.f32 %v2382, %v2410
  %2429 = vrot.lane.b32.xlu0 %v2419, 97
  %v2430 = vpop.permute.xlu0 %2429
  %2431 = vrot.lane.b32.xlu0 %v2420, 97
  %v2432 = vpop.permute.xlu0 %2431
  %2433 = vrot.lane.b32.xlu0 %v2421, 97
  %v2434 = vpop.permute.xlu0 %2433
  %2435 = vrot.lane.b32.xlu0 %v2422, 97
  %v2436 = vpop.permute.xlu0 %2435
  %2437 = vrot.lane.b32.xlu0 %v2423, 97
  %v2438 = vpop.permute.xlu0 %2437
  %v2439 = vsel %vm1132, %v2430, %v2432
  %v2440 = vsel %vm1132, %v2432, %v2434
  %v2441 = vsel %vm1132, %v2434, %v2436
  %v2442 = vsel %vm1132, %v2436, %v2438
  %2447 = vst [vmem:[#allocation5 + $0x2a0] sm:$0xff] %v2439
  %2448 = vst [vmem:[#allocation5 + $0x2a8] sm:$0xff] %v2440
  %2449 = vst [vmem:[#allocation5 + $0x2b0] sm:$0xff] %v2441
  %2450 = vst [vmem:[#allocation5 + $0x2b8] sm:$0xff] %v2442
  %v2451 = vld [vmem:[#allocation4 + $0x8] sm:$0xff]
  %v2452 = vld [vmem:[#allocation4 + $0x10] sm:$0xff]
  %v2453 = vld [vmem:[#allocation4 + $0x18] sm:$0xff]
  %v2454 = vld [vmem:[#allocation4 + $0x20] sm:$0xff]
  %v2455 = vld [vmem:[#allocation4 + $0x28] sm:$0xff]
  %v2456 = vlaneseq
  %v2457 = vshrl.u32 %v2456, 7
  %v2458 = vsub.s32 6, %v2457
  %v2459 = vrot.slane %v37, %v2458
  %v2460 = vlaneseq
  %v2461 = vshrl.u32 %v2460, 7
  %v2462 = vsub.s32 6, %v2461
  %v2463 = vrot.slane %v38, %v2462
  %v2464 = vlaneseq
  %v2465 = vshrl.u32 %v2464, 7
  %v2466 = vsub.s32 6, %v2465
  %v2467 = vrot.slane %v39, %v2466
  %v2468 = vlaneseq
  %v2469 = vshrl.u32 %v2468, 7
  %v2470 = vsub.s32 6, %v2469
  %v2471 = vrot.slane %v40, %v2470
  %2476 = vrot.lane.b32.xlu0 %v2459, 32
  %v2477 = vpop.permute.xlu0 %2476
  %2478 = vrot.lane.b32.xlu0 %v2463, 32
  %v2479 = vpop.permute.xlu0 %2478
  %2480 = vrot.lane.b32.xlu0 %v2467, 32
  %v2481 = vpop.permute.xlu0 %2480
  %2482 = vrot.lane.b32.xlu0 %v2471, 32
  %v2483 = vpop.permute.xlu0 %2482
  %v2484 = vsel %vm1086, %v2477, %v2479
  %v2485 = vsel %vm1086, %v2479, %v2481
  %v2486 = vsel %vm1086, %v2481, %v2483
  %v2492 = vmul.f32 %v2451, %v2477
  %v2493 = vmul.f32 %v2452, %v2484
  %v2494 = vmul.f32 %v2453, %v2485
  %v2495 = vmul.f32 %v2454, %v2486
  %v2496 = vmul.f32 %v2455, %v2483
  %2502 = vrot.lane.b32.xlu0 %v2492, 96
  %v2503 = vpop.permute.xlu0 %2502
  %2504 = vrot.lane.b32.xlu0 %v2493, 96
  %v2505 = vpop.permute.xlu0 %2504
  %2506 = vrot.lane.b32.xlu0 %v2494, 96
  %v2507 = vpop.permute.xlu0 %2506
  %2508 = vrot.lane.b32.xlu0 %v2495, 96
  %v2509 = vpop.permute.xlu0 %2508
  %2510 = vrot.lane.b32.xlu0 %v2496, 96
  %v2511 = vpop.permute.xlu0 %2510
  %v2512 = vsel %vm1057, %v2503, %v2505
  %v2513 = vsel %vm1057, %v2505, %v2507
  %v2514 = vsel %vm1057, %v2507, %v2509
  %v2515 = vsel %vm1057, %v2509, %v2511
  %2520 = vst [vmem:[#allocation5 + $0x2c0] sm:$0xff] %v2512
  %2521 = vst [vmem:[#allocation5 + $0x2c8] sm:$0xff] %v2513
  %2522 = vst [vmem:[#allocation5 + $0x2d0] sm:$0xff] %v2514
  %2523 = vst [vmem:[#allocation5 + $0x2d8] sm:$0xff] %v2515
  %v2524 = vld [vmem:[#allocation4 + $0x8] sm:$0xff]
  %v2525 = vld [vmem:[#allocation4 + $0x10] sm:$0xff]
  %v2526 = vld [vmem:[#allocation4 + $0x18] sm:$0xff]
  %v2527 = vld [vmem:[#allocation4 + $0x20] sm:$0xff]
  %v2528 = vld [vmem:[#allocation4 + $0x28] sm:$0xff]
  %v2529 = vlaneseq
  %v2530 = vshrl.u32 %v2529, 7
  %v2531 = vsub.s32 7, %v2530
  %v2532 = vrot.slane %v37, %v2531
  %v2533 = vlaneseq
  %v2534 = vshrl.u32 %v2533, 7
  %v2535 = vsub.s32 7, %v2534
  %v2536 = vrot.slane %v38, %v2535
  %v2537 = vlaneseq
  %v2538 = vshrl.u32 %v2537, 7
  %v2539 = vsub.s32 7, %v2538
  %v2540 = vrot.slane %v39, %v2539
  %v2541 = vlaneseq
  %v2542 = vshrl.u32 %v2541, 7
  %v2543 = vsub.s32 7, %v2542
  %v2544 = vrot.slane %v40, %v2543
  %2549 = vrot.lane.b32.xlu0 %v2532, 33
  %v2550 = vpop.permute.xlu0 %2549
  %2551 = vrot.lane.b32.xlu0 %v2536, 33
  %v2552 = vpop.permute.xlu0 %2551
  %2553 = vrot.lane.b32.xlu0 %v2540, 33
  %v2554 = vpop.permute.xlu0 %2553
  %2555 = vrot.lane.b32.xlu0 %v2544, 33
  %v2556 = vpop.permute.xlu0 %2555
  %v2557 = vsel %vm1011, %v2550, %v2552
  %v2558 = vsel %vm1011, %v2552, %v2554
  %v2559 = vsel %vm1011, %v2554, %v2556
  %v2565 = vmul.f32 %v2524, %v2550
  %v2566 = vmul.f32 %v2525, %v2557
  %v2567 = vmul.f32 %v2526, %v2558
  %v2568 = vmul.f32 %v2527, %v2559
  %v2569 = vmul.f32 %v2528, %v2556
  %2575 = vrot.lane.b32.xlu0 %v2565, 95
  %v2576 = vpop.permute.xlu0 %2575
  %2577 = vrot.lane.b32.xlu0 %v2566, 95
  %v2578 = vpop.permute.xlu0 %2577
  %2579 = vrot.lane.b32.xlu0 %v2567, 95
  %v2580 = vpop.permute.xlu0 %2579
  %2581 = vrot.lane.b32.xlu0 %v2568, 95
  %v2582 = vpop.permute.xlu0 %2581
  %2583 = vrot.lane.b32.xlu0 %v2569, 95
  %v2584 = vpop.permute.xlu0 %2583
  %v2585 = vsel %vm982, %v2576, %v2578
  %v2586 = vsel %vm982, %v2578, %v2580
  %v2587 = vsel %vm982, %v2580, %v2582
  %v2588 = vsel %vm982, %v2582, %v2584
  %2593 = vst [vmem:[#allocation5 + $0x2e0] sm:$0xff] %v2585
  %2594 = vst [vmem:[#allocation5 + $0x2e8] sm:$0xff] %v2586
  %2595 = vst [vmem:[#allocation5 + $0x2f0] sm:$0xff] %v2587
  %2596 = vst [vmem:[#allocation5 + $0x2f8] sm:$0xff] %v2588
  %v2597 = vld [vmem:[#allocation4 + $0x8] sm:$0xff]
  %v2598 = vld [vmem:[#allocation4 + $0x10] sm:$0xff]
  %v2599 = vld [vmem:[#allocation4 + $0x18] sm:$0xff]
  %v2600 = vld [vmem:[#allocation4 + $0x20] sm:$0xff]
  %v2601 = vld [vmem:[#allocation4 + $0x28] sm:$0xff]
  %v2602 = vlaneseq
  %v2603 = vshrl.u32 %v2602, 7
  %v2604 = vsub.s32 0, %v2603
  %v2605 = vrot.slane %v41, %v2604
  %v2606 = vlaneseq
  %v2607 = vshrl.u32 %v2606, 7
  %v2608 = vsub.s32 0, %v2607
  %v2609 = vrot.slane %v42, %v2608
  %v2610 = vlaneseq
  %v2611 = vshrl.u32 %v2610, 7
  %v2612 = vsub.s32 0, %v2611
  %v2613 = vrot.slane %v43, %v2612
  %v2614 = vlaneseq
  %v2615 = vshrl.u32 %v2614, 7
  %v2616 = vsub.s32 0, %v2615
  %v2617 = vrot.slane %v44, %v2616
  %2622 = vrot.lane.b32.xlu0 %v2605, 34
  %v2623 = vpop.permute.xlu0 %2622
  %2624 = vrot.lane.b32.xlu0 %v2609, 34
  %v2625 = vpop.permute.xlu0 %2624
  %2626 = vrot.lane.b32.xlu0 %v2613, 34
  %v2627 = vpop.permute.xlu0 %2626
  %2628 = vrot.lane.b32.xlu0 %v2617, 34
  %v2629 = vpop.permute.xlu0 %2628
  %v2630 = vsel %vm936, %v2623, %v2625
  %v2631 = vsel %vm936, %v2625, %v2627
  %v2632 = vsel %vm936, %v2627, %v2629
  %v2638 = vmul.f32 %v2597, %v2623
  %v2639 = vmul.f32 %v2598, %v2630
  %v2640 = vmul.f32 %v2599, %v2631
  %v2641 = vmul.f32 %v2600, %v2632
  %v2642 = vmul.f32 %v2601, %v2629
  %2648 = vrot.lane.b32.xlu0 %v2638, 94
  %v2649 = vpop.permute.xlu0 %2648
  %2650 = vrot.lane.b32.xlu0 %v2639, 94
  %v2651 = vpop.permute.xlu0 %2650
  %2652 = vrot.lane.b32.xlu0 %v2640, 94
  %v2653 = vpop.permute.xlu0 %2652
  %2654 = vrot.lane.b32.xlu0 %v2641, 94
  %v2655 = vpop.permute.xlu0 %2654
  %2656 = vrot.lane.b32.xlu0 %v2642, 94
  %v2657 = vpop.permute.xlu0 %2656
  %v2658 = vsel %vm907, %v2649, %v2651
  %v2659 = vsel %vm907, %v2651, %v2653
  %v2660 = vsel %vm907, %v2653, %v2655
  %v2661 = vsel %vm907, %v2655, %v2657
  %2666 = vst [vmem:[#allocation5 + $0x300] sm:$0xff] %v2658
  %2667 = vst [vmem:[#allocation5 + $0x308] sm:$0xff] %v2659
  %2668 = vst [vmem:[#allocation5 + $0x310] sm:$0xff] %v2660
  %2669 = vst [vmem:[#allocation5 + $0x318] sm:$0xff] %v2661
  %v2670 = vld [vmem:[%s3] sm:$0xff]
  %v2671 = vld [vmem:[%s3 + $0x8] sm:$0xff]
  %v2672 = vld [vmem:[%s3 + $0x10] sm:$0xff]
  %v2673 = vld [vmem:[%s3 + $0x18] sm:$0xff]
  %v2674 = vld [vmem:[#allocation5] sm:$0xff]
  %v2675 = vld [vmem:[#allocation5 + $0x8] sm:$0xff]
  %v2676 = vld [vmem:[#allocation5 + $0x10] sm:$0xff]
  %v2677 = vld [vmem:[#allocation5 + $0x18] sm:$0xff]
  %v2678 = vld [vmem:[#allocation5 + $0x20] sm:$0xff]
  %v2679 = vld [vmem:[#allocation5 + $0x28] sm:$0xff]
  %v2680 = vld [vmem:[#allocation5 + $0x30] sm:$0xff]
  %v2681 = vld [vmem:[#allocation5 + $0x38] sm:$0xff]
  %v2682 = vld [vmem:[#allocation5 + $0x40] sm:$0xff]
  %v2683 = vld [vmem:[#allocation5 + $0x48] sm:$0xff]
  %v2684 = vld [vmem:[#allocation5 + $0x50] sm:$0xff]
  %v2685 = vld [vmem:[#allocation5 + $0x58] sm:$0xff]
  %v2686 = vld [vmem:[#allocation5 + $0x60] sm:$0xff]
  %v2687 = vld [vmem:[#allocation5 + $0x68] sm:$0xff]
  %v2688 = vld [vmem:[#allocation5 + $0x70] sm:$0xff]
  %v2689 = vld [vmem:[#allocation5 + $0x78] sm:$0xff]
  %v2690 = vld [vmem:[#allocation5 + $0x80] sm:$0xff]
  %v2691 = vld [vmem:[#allocation5 + $0x88] sm:$0xff]
  %v2692 = vld [vmem:[#allocation5 + $0x90] sm:$0xff]
  %v2693 = vld [vmem:[#allocation5 + $0x98] sm:$0xff]
  %v2694 = vld [vmem:[#allocation5 + $0xa0] sm:$0xff]
  %v2695 = vld [vmem:[#allocation5 + $0xa8] sm:$0xff]
  %v2696 = vld [vmem:[#allocation5 + $0xb0] sm:$0xff]
  %v2697 = vld [vmem:[#allocation5 + $0xb8] sm:$0xff]
  %v2698 = vld [vmem:[#allocation5 + $0xc0] sm:$0xff]
  %v2699 = vld [vmem:[#allocation5 + $0xc8] sm:$0xff]
  %v2700 = vld [vmem:[#allocation5 + $0xd0] sm:$0xff]
  %v2701 = vld [vmem:[#allocation5 + $0xd8] sm:$0xff]
  %v2702 = vld [vmem:[#allocation5 + $0xe0] sm:$0xff]
  %v2703 = vld [vmem:[#allocation5 + $0xe8] sm:$0xff]
  %v2704 = vld [vmem:[#allocation5 + $0xf0] sm:$0xff]
  %v2705 = vld [vmem:[#allocation5 + $0xf8] sm:$0xff]
  %v2706 = vld [vmem:[#allocation5 + $0x100] sm:$0xff]
  %v2707 = vld [vmem:[#allocation5 + $0x108] sm:$0xff]
  %v2708 = vld [vmem:[#allocation5 + $0x110] sm:$0xff]
  %v2709 = vld [vmem:[#allocation5 + $0x118] sm:$0xff]
  %v2710 = vld [vmem:[#allocation5 + $0x120] sm:$0xff]
  %v2711 = vld [vmem:[#allocation5 + $0x128] sm:$0xff]
  %v2712 = vld [vmem:[#allocation5 + $0x130] sm:$0xff]
  %v2713 = vld [vmem:[#allocation5 + $0x138] sm:$0xff]
  %v2714 = vld [vmem:[#allocation5 + $0x140] sm:$0xff]
  %v2715 = vld [vmem:[#allocation5 + $0x148] sm:$0xff]
  %v2716 = vld [vmem:[#allocation5 + $0x150] sm:$0xff]
  %v2717 = vld [vmem:[#allocation5 + $0x158] sm:$0xff]
  %v2718 = vld [vmem:[#allocation5 + $0x160] sm:$0xff]
  %v2719 = vld [vmem:[#allocation5 + $0x168] sm:$0xff]
  %v2720 = vld [vmem:[#allocation5 + $0x170] sm:$0xff]
  %v2721 = vld [vmem:[#allocation5 + $0x178] sm:$0xff]
  %v2722 = vld [vmem:[#allocation5 + $0x180] sm:$0xff]
  %v2723 = vld [vmem:[#allocation5 + $0x188] sm:$0xff]
  %v2724 = vld [vmem:[#allocation5 + $0x190] sm:$0xff]
  %v2725 = vld [vmem:[#allocation5 + $0x198] sm:$0xff]
  %v2726 = vld [vmem:[#allocation5 + $0x1a0] sm:$0xff]
  %v2727 = vld [vmem:[#allocation5 + $0x1a8] sm:$0xff]
  %v2728 = vld [vmem:[#allocation5 + $0x1b0] sm:$0xff]
  %v2729 = vld [vmem:[#allocation5 + $0x1b8] sm:$0xff]
  %v2730 = vld [vmem:[#allocation5 + $0x1c0] sm:$0xff]
  %v2731 = vld [vmem:[#allocation5 + $0x1c8] sm:$0xff]
  %v2732 = vld [vmem:[#allocation5 + $0x1d0] sm:$0xff]
  %v2733 = vld [vmem:[#allocation5 + $0x1d8] sm:$0xff]
  %v2734 = vld [vmem:[#allocation5 + $0x1e0] sm:$0xff]
  %v2735 = vld [vmem:[#allocation5 + $0x1e8] sm:$0xff]
  %v2736 = vld [vmem:[#allocation5 + $0x1f0] sm:$0xff]
  %v2737 = vld [vmem:[#allocation5 + $0x1f8] sm:$0xff]
  %v2738 = vld [vmem:[#allocation5 + $0x200] sm:$0xff]
  %v2739 = vld [vmem:[#allocation5 + $0x208] sm:$0xff]
  %v2740 = vld [vmem:[#allocation5 + $0x210] sm:$0xff]
  %v2741 = vld [vmem:[#allocation5 + $0x218] sm:$0xff]
  %v2742 = vld [vmem:[#allocation5 + $0x220] sm:$0xff]
  %v2743 = vld [vmem:[#allocation5 + $0x228] sm:$0xff]
  %v2744 = vld [vmem:[#allocation5 + $0x230] sm:$0xff]
  %v2745 = vld [vmem:[#allocation5 + $0x238] sm:$0xff]
  %v2746 = vld [vmem:[#allocation5 + $0x240] sm:$0xff]
  %v2747 = vld [vmem:[#allocation5 + $0x248] sm:$0xff]
  %v2748 = vld [vmem:[#allocation5 + $0x250] sm:$0xff]
  %v2749 = vld [vmem:[#allocation5 + $0x258] sm:$0xff]
  %v2750 = vld [vmem:[#allocation5 + $0x260] sm:$0xff]
  %v2751 = vld [vmem:[#allocation5 + $0x268] sm:$0xff]
  %v2752 = vld [vmem:[#allocation5 + $0x270] sm:$0xff]
  %v2753 = vld [vmem:[#allocation5 + $0x278] sm:$0xff]
  %v2754 = vld [vmem:[#allocation5 + $0x280] sm:$0xff]
  %v2755 = vld [vmem:[#allocation5 + $0x288] sm:$0xff]
  %v2756 = vld [vmem:[#allocation5 + $0x290] sm:$0xff]
  %v2757 = vld [vmem:[#allocation5 + $0x298] sm:$0xff]
  %v2758 = vld [vmem:[#allocation5 + $0x2a0] sm:$0xff]
  %v2759 = vld [vmem:[#allocation5 + $0x2a8] sm:$0xff]
  %v2760 = vld [vmem:[#allocation5 + $0x2b0] sm:$0xff]
  %v2761 = vld [vmem:[#allocation5 + $0x2b8] sm:$0xff]
  %v2762 = vld [vmem:[#allocation5 + $0x2c0] sm:$0xff]
  %v2763 = vld [vmem:[#allocation5 + $0x2c8] sm:$0xff]
  %v2764 = vld [vmem:[#allocation5 + $0x2d0] sm:$0xff]
  %v2765 = vld [vmem:[#allocation5 + $0x2d8] sm:$0xff]
  %v2766 = vld [vmem:[#allocation5 + $0x2e0] sm:$0xff]
  %v2767 = vld [vmem:[#allocation5 + $0x2e8] sm:$0xff]
  %v2768 = vld [vmem:[#allocation5 + $0x2f0] sm:$0xff]
  %v2769 = vld [vmem:[#allocation5 + $0x2f8] sm:$0xff]
  %v2770 = vld [vmem:[#allocation5 + $0x300] sm:$0xff]
  %v2771 = vld [vmem:[#allocation5 + $0x308] sm:$0xff]
  %v2772 = vld [vmem:[#allocation5 + $0x310] sm:$0xff]
  %v2773 = vld [vmem:[#allocation5 + $0x318] sm:$0xff]
  %vm2774 = vcmask 588800
  %v2776 = vsel %vm2774, %v2671, 0
  %v2779 = vsel %vm2774, %v2673, 0
  %2781 = vmatprep.subr.mxu0 %v2735
  %2782 = vmatpush1.msra.mxu0 %v2734
  %2783 = vmatprep.subr.mxu0 %v2731
  %2784 = vmatpush1.msra.mxu0 %v2730
  %2785 = vmatprep.subr.mxu0 %v2727
  %2786 = vmatpush1.msra.mxu0 %v2726
  %2787 = vmatprep.subr.mxu0 %v2723
  %2788 = vmatpush1.msra.mxu0 %v2722
  %2789 = vmatprep.subr.mxu0 %v2719
  %2790 = vmatpush1.msra.mxu0 %v2718
  %2791 = vmatprep.subr.mxu0 %v2715
  %2792 = vmatpush1.msra.mxu0 %v2714
  %2793 = vmatprep.subr.mxu0 %v2711
  %2794 = vmatpush1.msra.mxu0 %v2710
  %2795 = vmatprep.subr.mxu0 %v2707
  %2796 = vmatpush1.msra.mxu0 %v2706
  %2797 = vmatprep.subr.mxu0 %v2703
  %2798 = vmatpush1.msra.mxu0 %v2702
  %2799 = vmatprep.subr.mxu0 %v2699
  %2800 = vmatpush1.msra.mxu0 %v2698
  %2801 = vmatprep.subr.mxu0 %v2695
  %2802 = vmatpush1.msra.mxu0 %v2694
  %2803 = vmatprep.subr.mxu0 %v2691
  %2804 = vmatpush1.msra.mxu0 %v2690
  %2805 = vmatprep.subr.mxu0 %v2687
  %2806 = vmatpush1.msra.mxu0 %v2686
  %2807 = vmatprep.subr.mxu0 %v2683
  %2808 = vmatpush1.msra.mxu0 %v2682
  %2809 = vmatprep.subr.mxu0 %v2679
  %2810 = vmatpush1.msra.mxu0 %v2678
  %2811 = vmatprep.subr.mxu0 %v2675
  %2812 = vmatpush1.msra.mxu0 %v2674
  %2813 = vmatprep.subr.mxu0 0.0
  %2814 = vmatpush2.msra.mxu0 0.0
  %2815 = vmatprep.subr.mxu0 0.0
  %2816 = vmatpush2.msra.mxu0 0.0
  %2817 = vmatprep.subr.mxu0 0.0
  %2818 = vmatpush2.msra.mxu0 0.0
  %2819 = vmatprep.subr.mxu0 0.0
  %2820 = vmatpush2.msra.mxu0 0.0
  %2821 = vmatprep.subr.mxu0 0.0
  %2822 = vmatpush2.msra.mxu0 0.0
  %2823 = vmatprep.subr.mxu0 0.0
  %2824 = vmatpush2.msra.mxu0 0.0
  %2825 = vmatprep.subr.mxu0 0.0
  %2826 = vmatpush2.msra.mxu0 0.0
  %2827 = vmatprep.subr.mxu0 %v2771
  %2828 = vmatpush2.msra.mxu0 %v2770
  %2829 = vmatprep.subr.mxu0 %v2767
  %2830 = vmatpush2.msra.mxu0 %v2766
  %2831 = vmatprep.subr.mxu0 %v2763
  %2832 = vmatpush2.msra.mxu0 %v2762
  %2833 = vmatprep.subr.mxu0 %v2759
  %2834 = vmatpush2.msra.mxu0 %v2758
  %2835 = vmatprep.subr.mxu0 %v2755
  %2836 = vmatpush2.msra.mxu0 %v2754
  %2837 = vmatprep.subr.mxu0 %v2751
  %2838 = vmatpush2.msra.mxu0 %v2750
  %2839 = vmatprep.subr.mxu0 %v2747
  %2840 = vmatpush2.msra.mxu0 %v2746
  %2841 = vmatprep.subr.mxu0 %v2743
  %2842 = vmatpush2.msra.mxu0 %v2742
  %2843 = vmatprep.subr.mxu0 %v2739
  %2844 = vmatpush2.msra.mxu0 %v2738
  %2845 = vmatprep.mubr.f32.mxu0 %v2776
  %2846 = vmatmul.mubr.f32.gmra.mxu0 %v2670
  %v2847 = vpop.f32.mrf.mxu0
  %v2848 = vadd.f32 0.0, %v2847
  %v2849 = vpop.f32.mrf.mxu0
  %v2850 = vadd.f32 0.0, %v2849
  %2851 = vmatprep.mubr.f32.mxu0 %v2779
  %2852 = vmatmul.mubr.f32.gmra.mxu0 %v2672
  %v2853 = vpop.f32.mrf.mxu0
  %v2854 = vadd.f32 0.0, %v2853
  %v2855 = vpop.f32.mrf.mxu0
  %v2856 = vadd.f32 0.0, %v2855
  %2857 = vdwg.mxu0
  %2858 = vmatprep.subr.mxu0 %v2737
  %2859 = vmatpush1.msra.mxu0 %v2736
  %2860 = vmatprep.subr.mxu0 %v2733
  %2861 = vmatpush1.msra.mxu0 %v2732
  %2862 = vmatprep.subr.mxu0 %v2729
  %2863 = vmatpush1.msra.mxu0 %v2728
  %2864 = vmatprep.subr.mxu0 %v2725
  %2865 = vmatpush1.msra.mxu0 %v2724
  %2866 = vmatprep.subr.mxu0 %v2721
  %2867 = vmatpush1.msra.mxu0 %v2720
  %2868 = vmatprep.subr.mxu0 %v2717
  %2869 = vmatpush1.msra.mxu0 %v2716
  %2870 = vmatprep.subr.mxu0 %v2713
  %2871 = vmatpush1.msra.mxu0 %v2712
  %2872 = vmatprep.subr.mxu0 %v2709
  %2873 = vmatpush1.msra.mxu0 %v2708
  %2874 = vmatprep.subr.mxu0 %v2705
  %2875 = vmatpush1.msra.mxu0 %v2704
  %2876 = vmatprep.subr.mxu0 %v2701
  %2877 = vmatpush1.msra.mxu0 %v2700
  %2878 = vmatprep.subr.mxu0 %v2697
  %2879 = vmatpush1.msra.mxu0 %v2696
  %2880 = vmatprep.subr.mxu0 %v2693
  %2881 = vmatpush1.msra.mxu0 %v2692
  %2882 = vmatprep.subr.mxu0 %v2689
  %2883 = vmatpush1.msra.mxu0 %v2688
  %2884 = vmatprep.subr.mxu0 %v2685
  %2885 = vmatpush1.msra.mxu0 %v2684
  %2886 = vmatprep.subr.mxu0 %v2681
  %2887 = vmatpush1.msra.mxu0 %v2680
  %2888 = vmatprep.subr.mxu0 %v2677
  %2889 = vmatpush1.msra.mxu0 %v2676
  %2890 = vmatprep.subr.mxu0 0.0
  %2891 = vmatpush2.msra.mxu0 0.0
  %2892 = vmatprep.subr.mxu0 0.0
  %2893 = vmatpush2.msra.mxu0 0.0
  %2894 = vmatprep.subr.mxu0 0.0
  %2895 = vmatpush2.msra.mxu0 0.0
  %2896 = vmatprep.subr.mxu0 0.0
  %2897 = vmatpush2.msra.mxu0 0.0
  %2898 = vmatprep.subr.mxu0 0.0
  %2899 = vmatpush2.msra.mxu0 0.0
  %2900 = vmatprep.subr.mxu0 0.0
  %2901 = vmatpush2.msra.mxu0 0.0
  %2902 = vmatprep.subr.mxu0 0.0
  %2903 = vmatpush2.msra.mxu0 0.0
  %2904 = vmatprep.subr.mxu0 %v2773
  %2905 = vmatpush2.msra.mxu0 %v2772
  %2906 = vmatprep.subr.mxu0 %v2769
  %2907 = vmatpush2.msra.mxu0 %v2768
  %2908 = vmatprep.subr.mxu0 %v2765
  %2909 = vmatpush2.msra.mxu0 %v2764
  %2910 = vmatprep.subr.mxu0 %v2761
  %2911 = vmatpush2.msra.mxu0 %v2760
  %2912 = vmatprep.subr.mxu0 %v2757
  %2913 = vmatpush2.msra.mxu0 %v2756
  %2914 = vmatprep.subr.mxu0 %v2753
  %2915 = vmatpush2.msra.mxu0 %v2752
  %2916 = vmatprep.subr.mxu0 %v2749
  %2917 = vmatpush2.msra.mxu0 %v2748
  %2918 = vmatprep.subr.mxu0 %v2745
  %2919 = vmatpush2.msra.mxu0 %v2744
  %2920 = vmatprep.subr.mxu0 %v2741
  %2921 = vmatpush2.msra.mxu0 %v2740
  %2922 = vmatprep.mubr.f32.mxu0 %v2776
  %2923 = vmatmul.mubr.f32.gmra.mxu0 %v2670
  %v2924 = vpop.f32.mrf.mxu0
  %v2925 = vadd.f32 0.0, %v2924
  %v2926 = vpop.f32.mrf.mxu0
  %v2927 = vadd.f32 0.0, %v2926
  %2928 = vmatprep.mubr.f32.mxu0 %v2779
  %2929 = vmatmul.mubr.f32.gmra.mxu0 %v2672
  %v2930 = vpop.f32.mrf.mxu0
  %v2931 = vadd.f32 0.0, %v2930
  %v2932 = vpop.f32.mrf.mxu0
  %v2933 = vadd.f32 0.0, %v2932
  %2934 = vdwg.mxu0
  %v2935 = vld [vmem:[%s6] sm:$0xff]
  %v2936 = vld [vmem:[%s6 + $0x8] sm:$0xff]
  %v2937 = vld [vmem:[%s7] sm:$0xff]
  %v2938 = vld [vmem:[%s7 + $0x8] sm:$0xff]
  %v2939 = vadd.f32 %v2848, %v2850
  %v2940 = vadd.f32 %v2939, %v2925
  %v2941 = vadd.f32 %v2940, %v2927
  %2942 = vadd.xlane.f32.xlu0 %v2941
  %v2943 = vpop.xlane.xlu0 %2942
  %v2944 = vadd.f32 %v2854, %v2856
  %v2945 = vadd.f32 %v2944, %v2931
  %v2946 = vadd.f32 %v2945, %v2933
  %2947 = vadd.xlane.f32.xlu0 %v2946
  %v2948 = vpop.xlane.xlu0 %2947
  %v2949 = vmul.f32 %v2943, %v743
  %v2950 = vmul.f32 %v2948, %v743
  %v2951 = vsub.f32 %v2848, %v2949
  %v2952 = vsub.f32 %v2850, %v2949
  %v2953 = vsub.f32 %v2925, %v2949
  %v2954 = vsub.f32 %v2927, %v2949
  %v2955 = vsub.f32 %v2854, %v2950
  %v2956 = vsub.f32 %v2856, %v2950
  %v2957 = vsub.f32 %v2931, %v2950
  %v2958 = vsub.f32 %v2933, %v2950
  %v2959 = vmul.f32 %v2951, %v2951
  %v2960 = vmul.f32 %v2952, %v2952
  %v2961 = vmul.f32 %v2953, %v2953
  %v2962 = vmul.f32 %v2954, %v2954
  %v2963 = vmul.f32 %v2955, %v2955
  %v2964 = vmul.f32 %v2956, %v2956
  %v2965 = vmul.f32 %v2957, %v2957
  %v2966 = vmul.f32 %v2958, %v2958
  %v2967 = vadd.f32 %v2959, %v2960
  %v2968 = vadd.f32 %v2967, %v2961
  %v2969 = vadd.f32 %v2968, %v2962
  %2970 = vadd.xlane.f32.xlu0 %v2969
  %v2971 = vpop.xlane.xlu0 %2970
  %v2972 = vadd.f32 %v2963, %v2964
  %v2973 = vadd.f32 %v2972, %v2965
  %v2974 = vadd.f32 %v2973, %v2966
  %2975 = vadd.xlane.f32.xlu0 %v2974
  %v2976 = vpop.xlane.xlu0 %2975
  %v2977 = vmul.f32 %v2971, %v743
  %v2978 = vmul.f32 %v2976, %v743
  %v2979 = vadd.f32 %v2977, 1e-05
  %v2980 = vadd.f32 %v2978, 1e-05
  %v2981 = vrsqrt.pop %v2979
  %v2982 = vrsqrt.pop %v2980
  %v2983 = vmul.f32 %v2935, %v2981
  %v2984 = vmul.f32 %v2936, %v2982
  %2986 = vset.pattern.permute.xlu0 0
  %2987 = vperm.xlu0 %2986, %v2983
  %v2988 = vpop.permute.xlu0 %2987
  %2991 = vset.pattern.permute.xlu0 0
  %2992 = vperm.xlu0 %2991, %v2984
  %v2993 = vpop.permute.xlu0 %2992
  %v2995 = vmul.f32 %v2951, %v2988
  %v2996 = vmul.f32 %v2952, %v2988
  %v2997 = vmul.f32 %v2953, %v2988
  %v2998 = vmul.f32 %v2954, %v2988
  %v2999 = vmul.f32 %v2955, %v2993
  %v3000 = vmul.f32 %v2956, %v2993
  %v3001 = vmul.f32 %v2957, %v2993
  %v3002 = vmul.f32 %v2958, %v2993
  %3004 = vset.pattern.permute.xlu0 0
  %3005 = vperm.xlu0 %3004, %v2937
  %v3006 = vpop.permute.xlu0 %3005
  %3009 = vset.pattern.permute.xlu0 0
  %3010 = vperm.xlu0 %3009, %v2938
  %v3011 = vpop.permute.xlu0 %3010
  %v3013 = vadd.f32 %v2995, %v3006
  %v3014 = vadd.f32 %v2996, %v3006
  %v3015 = vadd.f32 %v2997, %v3006
  %v3016 = vadd.f32 %v2998, %v3006
  %v3017 = vadd.f32 %v2999, %v3011
  %v3018 = vadd.f32 %v3000, %v3011
  %v3019 = vadd.f32 %v3001, %v3011
  %v3020 = vadd.f32 %v3002, %v3011
  %v3021 = vmax.f32 %v3013, 0.0
  %v3022 = vmax.f32 %v3014, 0.0
  %v3023 = vmax.f32 %v3015, 0.0
  %v3024 = vmax.f32 %v3016, 0.0
  %v3025 = vmax.f32 %v3017, 0.0
  %v3026 = vmax.f32 %v3018, 0.0
  %v3027 = vmax.f32 %v3019, 0.0
  %v3028 = vmax.f32 %v3020, 0.0
  %3029 = vst [vmem:[%s8] sm:$0xff] %v852
  %3030 = vst [vmem:[%s8 + $0x8] sm:$0xff] %v853
  %3031 = vst [vmem:[%s8 + $0x10] sm:$0xff] %v3021
  %3032 = vst [vmem:[%s8 + $0x18] sm:$0xff] %v3022
  %3033 = vst [vmem:[%s8 + $0x20] sm:$0xff] %v3025
  %3034 = vst [vmem:[%s8 + $0x28] sm:$0xff] %v3026
  %3035 = vst [vmem:[%s8 + $0x30] sm:$0xff] %v860
  %3036 = vst [vmem:[%s8 + $0x38] sm:$0xff] %v861
  %s3037 = scalar_lea.vmem %s8, 64
  %3038 = vst [vmem:[%s3037] sm:$0xff] %v854
  %3039 = vst [vmem:[%s3037 + $0x8] sm:$0xff] %v855
  %3040 = vst [vmem:[%s3037 + $0x10] sm:$0xff] %v3023
  %3041 = vst [vmem:[%s3037 + $0x18] sm:$0xff] %v3024
  %3042 = vst [vmem:[%s3037 + $0x20] sm:$0xff] %v3027
  %3043 = vst [vmem:[%s3037 + $0x28] sm:$0xff] %v3028
  %3044 = vst [vmem:[%s3037 + $0x30] sm:$0xff] %v862
  %3045 = vst [vmem:[%s3037 + $0x38] sm:$0xff] %v863
  // Predicated region
  $region34: #{inception_forward.1} parent=0 // pred_check
    _
  $region35: #{inception_forward.1} parent=0 // pred_check_branch
    %3047 = sbr.rel (0) target = $region37
  $region36: #{inception_forward.1} parent=0 // pred_region
    _
  $region37: #{inception_forward.1} parent=0 // pred_fallthru
    _
  // Predicated region
  $region38: #{inception_forward.1} parent=0 // pred_check
    _
  $region39: #{inception_forward.1} parent=0 // pred_check_branch
    %3049 = sbr.rel (0) target = $region41
  $region40: #{inception_forward.1} parent=0 // pred_region
    _
  $region41: #{inception_forward.1} parent=0 // pred_fallthru
    _

</llo_original>
